<compile_context>
chip_gen: v5e
topology: v5e:2x2
jax: 0.10.0
libtpu: 0.0.40
codegen_flags: <defaults>
</compile_context>

<pallas_src>
import jax
import jax.numpy as jnp
import numpy as np
from jax import lax
from jax.experimental import pallas as pl
from jax.experimental.pallas import tpu as pltpu


# ----------------------------------------------------------------------------
# In-kernel helpers
# ----------------------------------------------------------------------------
def _write_padded(pad_ref, x_bhwc):
    """Write interior of a (B, H+2, W+2, C) bf16 scratch and zero only the halo."""
    B, Hp2, Wp2, C = pad_ref.shape
    H, W = Hp2 - 2, Wp2 - 2
    dt = pad_ref.dtype
    pad_ref[:, 1:H + 1, 1:W + 1, :] = x_bhwc
    pad_ref[:, 0:1, :, :] = jnp.zeros((B, 1, Wp2, C), dt)
    pad_ref[:, H + 1:H + 2, :, :] = jnp.zeros((B, 1, Wp2, C), dt)
    pad_ref[:, :, 0:1, :] = jnp.zeros((B, Hp2, 1, C), dt)
    pad_ref[:, :, W + 1:W + 2, :] = jnp.zeros((B, Hp2, 1, C), dt)


def _conv3x3_taps(pad_ref, w_ref, scale_ref, bias_ref):
    """3x3 'same' conv as 9 accumulating shifted-view dots (no im2col concat).

    pad_ref   : (B, H+2, W+2, Cin) bf16 VMEM scratch (halo already zeroed)
    w_ref     : (9, Cin, Cout) bf16, tap t = dy*3 + dx
    scale_ref : (1, Cout) f32, bias_ref : (1, Cout) f32  (folded BatchNorm)
    returns   : (B*H*W, Cout) f32 after ReLU
    """
    B, Hp2, Wp2, cin = pad_ref.shape
    H, W = Hp2 - 2, Wp2 - 2
    M = B * H * W
    acc = None
    for t in range(9):                                   # static unroll; MXU has slack
        dy, dx = divmod(t, 3)
        tap = pad_ref[:, dy:dy + H, dx:dx + W, :].reshape(M, cin)   # bf16 shifted view
        d = jnp.dot(tap, w_ref[t], preferred_element_type=jnp.float32)
        acc = d if acc is None else acc + d              # v7x: accumulates in MRB
    y = acc * scale_ref[...] + bias_ref[...]             # folded BN (f32)
    return jnp.maximum(y, 0.0)


# ----------------------------------------------------------------------------
# Fused Pallas kernel
# ----------------------------------------------------------------------------
def fused_v5dual_kernel(s2d_ref, bbw_ref, bbb_ref,
                        w1_ref, s1_ref, b1_ref,
                        w2_ref, s2_ref, b2_ref,
                        w3_ref, b3_ref, wfc_ref, bfc_ref,
                        feat_ref, seg_ref, out_ref,
                        pad1_ref, pad2_ref):
    B, Hp2, Wp2, C = pad1_ref.shape
    H, W = Hp2 - 2, Wp2 - 2
    HW = H * W

    # ---- backbone stand-in: 1x1 projection, batch folded into matmul M dim ----
    # (B*H*W, Cin_s2d) bf16 @ (Cin_s2d, C) bf16 -> (B*H*W, C) f32
    feat = jnp.dot(s2d_ref[...], bbw_ref[...],
                   preferred_element_type=jnp.float32) + bbb_ref[...]

    # C5 feature output, lane-dense (C, M): unmasked full-width stores.
    feat_ref[...] = feat.T

    # ---- mask[0..2]: Conv2d(C,128,3,pad=1) + BN + ReLU -------------------------
    _write_padded(pad1_ref, feat.astype(jnp.bfloat16).reshape(B, H, W, C))
    h1 = _conv3x3_taps(pad1_ref, w1_ref, s1_ref, b1_ref)             # (B*H*W, 128) f32

    # ---- mask[3..5]: Conv2d(128,128,3,pad=1) + BN + ReLU -----------------------
    _write_padded(pad2_ref, h1.astype(jnp.bfloat16).reshape(B, H, W, 128))
    h2 = _conv3x3_taps(pad2_ref, w2_ref, s2_ref, b2_ref)             # (B*H*W, 128) f32

    # ---- mask[6]: Conv2d(128, 1, kernel_size=1), lane-dense (1, M) output ------
    # bf16 NT dot_general contracting the channel dims: no f32 transpose, no f32 MXU.
    seg_ref[...] = lax.dot_general(
        w3_ref[...], h2.astype(jnp.bfloat16),
        dimension_numbers=(((1,), (1,)), ((), ())),
        preferred_element_type=jnp.float32) + b3_ref[...]

    # ---- AdaptiveAvgPool2d(1) + Linear(C, 1)  (Dropout is identity at eval) ----
    pooled = feat.reshape(B, HW, C).sum(axis=1) * (1.0 / float(HW))  # (B, C) f32
    out_ref[...] = (jnp.sum(pooled * wfc_ref[...], axis=-1, keepdims=True)
                    + bfc_ref[...])                                  # (B, 1)


# ----------------------------------------------------------------------------
# Wrapper: single pallas_call, whole arrays resident in VMEM (no grid needed)
# ----------------------------------------------------------------------------
def v5dual_forward(x_nchw, kp):
    """kp: kernel-ready params from pack_params()."""
    B, C, Himg, Wimg = x_nchw.shape
    r = 4
    H, W = Himg // r, Wimg // r
    Cf = kp["bbw"].shape[-1]
    M = B * H * W
    Kin = C * r * r

    # space-to-depth (layout only, done in XLA) -> flat (B*H*W, C*r*r), bf16 MXU operand
    x_nhwc = jnp.transpose(x_nchw, (0, 2, 3, 1))
    s2d = (x_nhwc.reshape(B, H, r, W, r, C)
           .transpose(0, 1, 3, 2, 4, 5)
           .reshape(M, Kin)).astype(jnp.bfloat16)

    flops = (2 * M * Kin * Cf                 # backbone 1x1 projection
             + 2 * M * 9 * Cf * 128           # conv1 (3x3)
             + 2 * M * 9 * 128 * 128          # conv2 (3x3)
             + 2 * M * 128                    # seg head (1x1)
             + 2 * B * Cf)                    # fc
    bytes_in = (M * Kin * 2 + Kin * Cf * 2 + Cf * 4
                + 9 * Cf * 128 * 2 + 2 * 128 * 4
                + 9 * 128 * 128 * 2 + 2 * 128 * 4
                + 128 * 2 + 4 + Cf * 4 + 4)
    bytes_out = Cf * M * 4 + M * 4 + B * 4
    cost = pl.CostEstimate(flops=flops, transcendentals=0,
                           bytes_accessed=bytes_in + bytes_out)

    vmem_spec = pl.BlockSpec(memory_space=pltpu.MemorySpace.VMEM)

    feat_t, seg_row, output = pl.pallas_call(
        fused_v5dual_kernel,
        out_shape=(
            jax.ShapeDtypeStruct((Cf, M), jnp.float32),      # C5 feature map (lane-dense)
            jax.ShapeDtypeStruct((1, M), jnp.float32),       # seg logits (lane-dense)
            jax.ShapeDtypeStruct((B, 1), jnp.float32),       # fc output
        ),
        in_specs=[vmem_spec] * 13,
        out_specs=(vmem_spec, vmem_spec, vmem_spec),
        scratch_shapes=[
            pltpu.VMEM((B, H + 2, W + 2, Cf), jnp.bfloat16),   # padded feat (bf16)
            pltpu.VMEM((B, H + 2, W + 2, 128), jnp.bfloat16),  # padded h1 (bf16)
        ],
        cost_estimate=cost,
    )(s2d, kp["bbw"], kp["bbb"],
      kp["w1"], kp["s1"], kp["b1"],
      kp["w2"], kp["s2"], kp["b2"],
      kp["w3"], kp["b3"], kp["wfc"], kp["bfc"])

    # (Cf, B*H*W) -> (B, Cf, H, W) NCHW stand-in for backbone `x` / out6[-1]
    x_det = jnp.transpose(feat_t.reshape(Cf, B, H, W), (1, 0, 2, 3))
    seg_logit = seg_row.reshape(B, 1, H, W)
    return x_det, seg_logit, output


# ----------------------------------------------------------------------------
# Parameters (deterministic synthetic init; BN folded for eval mode)
# ----------------------------------------------------------------------------
def _fold_bn(conv_bias, gamma, beta, mean, var, eps=1e-5):
    scale = gamma / jnp.sqrt(var + eps)
    bias = (conv_bias - mean) * scale + beta
    return scale.reshape(1, -1), bias.reshape(1, -1)


def init_params(key, img_channels=3, out_channel=32):
    ks = list(jax.random.split(key, 20))
    n = lambda k, shape, s=0.05: s * jax.random.normal(k, shape, jnp.float32)
    p = {}
    # stand-in backbone: space-to-depth(4) -> 1x1 projection to out_channel
    p["bb_w"] = n(ks[0], (img_channels * 16, out_channel))
    p["bb_b"] = n(ks[1], (1, out_channel))
    # mask[0..2]: Conv2d(out_channel,128,3,pad=1) + BN(128) + ReLU
    p["w1"] = n(ks[2], (3, 3, out_channel, 128))
    p["s1"], p["b1"] = _fold_bn(
        n(ks[3], (128,)), 1.0 + n(ks[4], (128,), 0.1), n(ks[5], (128,), 0.1),
        n(ks[6], (128,), 0.1), jnp.abs(1.0 + n(ks[7], (128,), 0.1)))
    # mask[3..5]: Conv2d(128,128,3,pad=1) + BN(128) + ReLU
    p["w2"] = n(ks[8], (3, 3, 128, 128))
    p["s2"], p["b2"] = _fold_bn(
        n(ks[9], (128,)), 1.0 + n(ks[10], (128,), 0.1), n(ks[11], (128,), 0.1),
        n(ks[12], (128,), 0.1), jnp.abs(1.0 + n(ks[13], (128,), 0.1)))
    # mask[6]: Conv2d(128, 1, kernel_size=1)
    p["w3"] = n(ks[14], (128, 1))
    p["b3"] = n(ks[15], (1, 1))
    # fc: Linear(out_channel, 1)
    p["wfc"] = n(ks[16], (1, out_channel))
    p["bfc"] = n(ks[17], (1, 1))
    return p


def pack_params(p):
    """One-time packing: per-tap conv weights (9, Cin, Cout), MXU operands bf16.
    Folded-BN affines / biases / fc stay f32 (VPU math)."""
    cin1 = p["w1"].shape[2]
    return {
        "bbw": p["bb_w"].astype(jnp.bfloat16),
        "bbb": p["bb_b"].astype(jnp.float32),
        "w1": p["w1"].reshape(9, cin1, 128).astype(jnp.bfloat16),
        "s1": p["s1"].astype(jnp.float32),
        "b1": p["b1"].astype(jnp.float32),
        "w2": p["w2"].reshape(9, 128, 128).astype(jnp.bfloat16),
        "s2": p["s2"].astype(jnp.float32),
        "b2": p["b2"].astype(jnp.float32),
        "w3": p["w3"].reshape(1, 128).astype(jnp.bfloat16),
        "b3": p["b3"].astype(jnp.float32),
        "wfc": p["wfc"].astype(jnp.float32),
        "bfc": p["bfc"].astype(jnp.float32),
    }


# ----------------------------------------------------------------------------
# Pure-JAX f32 reference (for correctness check)
# ----------------------------------------------------------------------------
def reference_forward(x_nchw, p):
    B, C, Himg, Wimg = x_nchw.shape
    r = 4
    H, W = Himg // r, Wimg // r
    x_nhwc = jnp.transpose(x_nchw, (0, 2, 3, 1))
    s2d = (x_nhwc.reshape(B, H, r, W, r, C)
           .transpose(0, 1, 3, 2, 4, 5)
           .reshape(B, H, W, C * r * r))
    feat = jnp.einsum("bhwc,co->bhwo", s2d, p["bb_w"]) + p["bb_b"].reshape(1, 1, 1, -1)
    x_det = jnp.transpose(feat, (0, 3, 1, 2))

    def c3(x, w, s, b):
        y = jax.lax.conv_general_dilated(
            x, w, (1, 1), "SAME", dimension_numbers=("NHWC", "HWIO", "NHWC"))
        return jnp.maximum(y * s.reshape(1, 1, 1, -1) + b.reshape(1, 1, 1, -1), 0.0)

    h1 = c3(feat, p["w1"], p["s1"], p["b1"])
    h2 = c3(h1, p["w2"], p["s2"], p["b2"])
    seg = jnp.einsum("bhwc,co->bhwo", h2, p["w3"]) + p["b3"].reshape(1, 1, 1, -1)
    seg_logit = jnp.transpose(seg, (0, 3, 1, 2))
    pooled = jnp.mean(feat, axis=(1, 2))                       # (B, C)
    output = pooled @ p["wfc"].T + p["bfc"].reshape(1, 1)      # (B, 1)
    return x_det, seg_logit, output


# ----------------------------------------------------------------------------
if __name__ == "__main__":
    # TODO(synk): FlexibleModel(cfg) backbone is external / not defined in the
    # given source; replaced by a deterministic space-to-depth + 1x1 projection
    # stand-in producing the C5 feature map (out6[-1]).
    key = jax.random.PRNGKey(0)
    kx, kparam = jax.random.split(key)
    x = jax.random.normal(kx, (2, 3, 32, 32), jnp.float32)     # PyTorch-style NCHW input
    params = init_params(kparam, img_channels=3, out_channel=32)
    packed = pack_params(params)

    fwd = jax.jit(v5dual_forward)
    x_det, seg_logit, output = fwd(x, packed)
    jax.block_until_ready((x_det, seg_logit, output))

    # bf16 MXU operands (f32 accumulation) vs. pure-f32 reference -> 2e-2 tol.
    x_r, seg_r, out_r = reference_forward(x, params)
    np.testing.assert_allclose(np.asarray(x_det), np.asarray(x_r), rtol=2e-2, atol=2e-2)
    np.testing.assert_allclose(np.asarray(seg_logit), np.asarray(seg_r), rtol=2e-2, atol=2e-2)
    np.testing.assert_allclose(np.asarray(output), np.asarray(out_r), rtol=2e-2, atol=2e-2)

    assert x_det.shape == (2, 32, 8, 8)
    assert seg_logit.shape == (2, 1, 8, 8)
    assert output.shape == (2, 1)
    print("KERNEL_OK")
</pallas_src>

<mosaic_0001>
module attributes {stable_mosaic.version = 11 : i64} {
  func.func @fused_v5dual_kernel(%arg0: memref<128x48xbf16, #tpu.memory_space<vmem>>, %arg1: memref<48x32xbf16, #tpu.memory_space<vmem>>, %arg2: memref<1x32xf32, #tpu.memory_space<vmem>>, %arg3: memref<9x32x128xbf16, #tpu.memory_space<vmem>>, %arg4: memref<1x128xf32, #tpu.memory_space<vmem>>, %arg5: memref<1x128xf32, #tpu.memory_space<vmem>>, %arg6: memref<9x128x128xbf16, #tpu.memory_space<vmem>>, %arg7: memref<1x128xf32, #tpu.memory_space<vmem>>, %arg8: memref<1x128xf32, #tpu.memory_space<vmem>>, %arg9: memref<1x128xbf16, #tpu.memory_space<vmem>>, %arg10: memref<1x1xf32, #tpu.memory_space<vmem>>, %arg11: memref<1x32xf32, #tpu.memory_space<vmem>>, %arg12: memref<1x1xf32, #tpu.memory_space<vmem>>, %arg13: memref<32x128xf32, #tpu.memory_space<vmem>>, %arg14: memref<1x128xf32, #tpu.memory_space<vmem>>, %arg15: memref<2x1xf32, #tpu.memory_space<vmem>>, %arg16: memref<2x10x10x32xbf16, #tpu.memory_space<vmem>>, %arg17: memref<2x10x10x128xbf16, #tpu.memory_space<vmem>>) attributes {dimension_semantics = [], scalar_prefetch = 0 : i64, scratch_operands = 2 : i64, tpu.core_type = #tpu.core_type<tc>} {
    %c0 = arith.constant 0 : index
    %c0_0 = arith.constant 0 : index
    %0 = vector.load %arg0[%c0, %c0_0] : memref<128x48xbf16, #tpu.memory_space<vmem>>, vector<128x48xbf16>
    %c0_1 = arith.constant 0 : index
    %c0_2 = arith.constant 0 : index
    %1 = vector.load %arg1[%c0_1, %c0_2] : memref<48x32xbf16, #tpu.memory_space<vmem>>, vector<48x32xbf16>
    %cst = arith.constant dense<0.000000e+00> : vector<128x32xf32>
    %2 = tpu.matmul %0, %1, %cst {dimension_numbers = #tpu.dot_dimension_numbers<[1], [0], [0], [1], [0, 0, 1, 1], [], []>} : vector<128x48xbf16>, vector<48x32xbf16>, vector<128x32xf32> -> vector<128x32xf32>
    %c0_3 = arith.constant 0 : index
    %c0_4 = arith.constant 0 : index
    %3 = vector.load %arg2[%c0_3, %c0_4] : memref<1x32xf32, #tpu.memory_space<vmem>>, vector<1x32xf32>
    %4 = vector.broadcast %3 : vector<1x32xf32> to vector<128x32xf32>
    %5 = arith.addf %2, %4 : vector<128x32xf32>
    %6 = tpu.transpose %5, [1, 0] : vector<128x32xf32> -> vector<32x128xf32>
    %c0_5 = arith.constant 0 : index
    %c0_6 = arith.constant 0 : index
    %7 = vector.load %arg13[%c0_5, %c0_6] : memref<32x128xf32, #tpu.memory_space<vmem>>, vector<32x128xf32>
    tpu.vector_store %arg13[%c0_5, %c0_6], %6 {strides = array<i32>} : memref<32x128xf32, #tpu.memory_space<vmem>>, vector<32x128xf32>,
    %8 = arith.truncf %5 : vector<128x32xf32> to vector<128x32xbf16>
    %9 = vector.shape_cast %8 : vector<128x32xbf16> to vector<2x8x8x32xbf16>
    %c0_7 = arith.constant 0 : index
    %c1 = arith.constant 1 : index
    %c1_8 = arith.constant 1 : index
    %c0_9 = arith.constant 0 : index
    %10 = vector.load %arg16[%c0_7, %c1, %c1_8, %c0_9] : memref<2x10x10x32xbf16, #tpu.memory_space<vmem>>, vector<2x8x8x32xbf16>
    tpu.vector_store %arg16[%c0_7, %c1, %c1_8, %c0_9], %9 {strides = array<i32>} : memref<2x10x10x32xbf16, #tpu.memory_space<vmem>>, vector<2x8x8x32xbf16>,
    %cst_10 = arith.constant 0.000000e+00 : bf16
    %11 = vector.broadcast %cst_10 : bf16 to vector<2x1x10x32xbf16>
    %c0_11 = arith.constant 0 : index
    %c0_12 = arith.constant 0 : index
    %c0_13 = arith.constant 0 : index
    %c0_14 = arith.constant 0 : index
    %12 = vector.load %arg16[%c0_11, %c0_12, %c0_13, %c0_14] : memref<2x10x10x32xbf16, #tpu.memory_space<vmem>>, vector<2x1x10x32xbf16>
    tpu.vector_store %arg16[%c0_11, %c0_12, %c0_13, %c0_14], %11 {strides = array<i32>} : memref<2x10x10x32xbf16, #tpu.memory_space<vmem>>, vector<2x1x10x32xbf16>,
    %cst_15 = arith.constant 0.000000e+00 : bf16
    %13 = vector.broadcast %cst_15 : bf16 to vector<2x1x10x32xbf16>
    %c0_16 = arith.constant 0 : index
    %c9 = arith.constant 9 : index
    %c0_17 = arith.constant 0 : index
    %c0_18 = arith.constant 0 : index
    %14 = vector.load %arg16[%c0_16, %c9, %c0_17, %c0_18] : memref<2x10x10x32xbf16, #tpu.memory_space<vmem>>, vector<2x1x10x32xbf16>
    tpu.vector_store %arg16[%c0_16, %c9, %c0_17, %c0_18], %13 {strides = array<i32>} : memref<2x10x10x32xbf16, #tpu.memory_space<vmem>>, vector<2x1x10x32xbf16>,
    %cst_19 = arith.constant 0.000000e+00 : bf16
    %15 = vector.broadcast %cst_19 : bf16 to vector<2x10x1x32xbf16>
    %c0_20 = arith.constant 0 : index
    %c0_21 = arith.constant 0 : index
    %c0_22 = arith.constant 0 : index
    %c0_23 = arith.constant 0 : index
    %16 = vector.load %arg16[%c0_20, %c0_21, %c0_22, %c0_23] : memref<2x10x10x32xbf16, #tpu.memory_space<vmem>>, vector<2x10x1x32xbf16>
    tpu.vector_store %arg16[%c0_20, %c0_21, %c0_22, %c0_23], %15 {strides = array<i32>} : memref<2x10x10x32xbf16, #tpu.memory_space<vmem>>, vector<2x10x1x32xbf16>,
    %cst_24 = arith.constant 0.000000e+00 : bf16
    %17 = vector.broadcast %cst_24 : bf16 to vector<2x10x1x32xbf16>
    %c0_25 = arith.constant 0 : index
    %c0_26 = arith.constant 0 : index
    %c9_27 = arith.constant 9 : index
    %c0_28 = arith.constant 0 : index
    %18 = vector.load %arg16[%c0_25, %c0_26, %c9_27, %c0_28] : memref<2x10x10x32xbf16, #tpu.memory_space<vmem>>, vector<2x10x1x32xbf16>
    tpu.vector_store %arg16[%c0_25, %c0_26, %c9_27, %c0_28], %17 {strides = array<i32>} : memref<2x10x10x32xbf16, #tpu.memory_space<vmem>>, vector<2x10x1x32xbf16>,
    %c0_29 = arith.constant 0 : index
    %c0_30 = arith.constant 0 : index
    %c0_31 = arith.constant 0 : index
    %c0_32 = arith.constant 0 : index
    %19 = vector.load %arg16[%c0_29, %c0_30, %c0_31, %c0_32] : memref<2x10x10x32xbf16, #tpu.memory_space<vmem>>, vector<2x8x8x32xbf16>
    %20 = vector.shape_cast %19 : vector<2x8x8x32xbf16> to vector<128x32xbf16>
    %c0_33 = arith.constant 0 : index
    %c0_34 = arith.constant 0 : index
    %c0_35 = arith.constant 0 : index
    %21 = vector.load %arg3[%c0_33, %c0_34, %c0_35] : memref<9x32x128xbf16, #tpu.memory_space<vmem>>, vector<1x32x128xbf16>
    %22 = vector.shape_cast %21 : vector<1x32x128xbf16> to vector<32x128xbf16>
    %cst_36 = arith.constant dense<0.000000e+00> : vector<128x128xf32>
    %23 = tpu.matmul %20, %22, %cst_36 {dimension_numbers = #tpu.dot_dimension_numbers<[1], [0], [0], [1], [0, 0, 1, 1], [], []>} : vector<128x32xbf16>, vector<32x128xbf16>, vector<128x128xf32> -> vector<128x128xf32>
    %c0_37 = arith.constant 0 : index
    %c0_38 = arith.constant 0 : index
    %c1_39 = arith.constant 1 : index
    %c0_40 = arith.constant 0 : index
    %24 = vector.load %arg16[%c0_37, %c0_38, %c1_39, %c0_40] : memref<2x10x10x32xbf16, #tpu.memory_space<vmem>>, vector<2x8x8x32xbf16>
    %25 = vector.shape_cast %24 : vector<2x8x8x32xbf16> to vector<128x32xbf16>
    %c1_41 = arith.constant 1 : index
    %c0_42 = arith.constant 0 : index
    %c0_43 = arith.constant 0 : index
    %26 = vector.load %arg3[%c1_41, %c0_42, %c0_43] : memref<9x32x128xbf16, #tpu.memory_space<vmem>>, vector<1x32x128xbf16>
    %27 = vector.shape_cast %26 : vector<1x32x128xbf16> to vector<32x128xbf16>
    %cst_44 = arith.constant dense<0.000000e+00> : vector<128x128xf32>
    %28 = tpu.matmul %25, %27, %cst_44 {dimension_numbers = #tpu.dot_dimension_numbers<[1], [0], [0], [1], [0, 0, 1, 1], [], []>} : vector<128x32xbf16>, vector<32x128xbf16>, vector<128x128xf32> -> vector<128x128xf32>
    %29 = arith.addf %23, %28 : vector<128x128xf32>
    %c0_45 = arith.constant 0 : index
    %c0_46 = arith.constant 0 : index
    %c2 = arith.constant 2 : index
    %c0_47 = arith.constant 0 : index
    %30 = vector.load %arg16[%c0_45, %c0_46, %c2, %c0_47] : memref<2x10x10x32xbf16, #tpu.memory_space<vmem>>, vector<2x8x8x32xbf16>
    %31 = vector.shape_cast %30 : vector<2x8x8x32xbf16> to vector<128x32xbf16>
    %c2_48 = arith.constant 2 : index
    %c0_49 = arith.constant 0 : index
    %c0_50 = arith.constant 0 : index
    %32 = vector.load %arg3[%c2_48, %c0_49, %c0_50] : memref<9x32x128xbf16, #tpu.memory_space<vmem>>, vector<1x32x128xbf16>
    %33 = vector.shape_cast %32 : vector<1x32x128xbf16> to vector<32x128xbf16>
    %cst_51 = arith.constant dense<0.000000e+00> : vector<128x128xf32>
    %34 = tpu.matmul %31, %33, %cst_51 {dimension_numbers = #tpu.dot_dimension_numbers<[1], [0], [0], [1], [0, 0, 1, 1], [], []>} : vector<128x32xbf16>, vector<32x128xbf16>, vector<128x128xf32> -> vector<128x128xf32>
    %35 = arith.addf %29, %34 : vector<128x128xf32>
    %c0_52 = arith.constant 0 : index
    %c1_53 = arith.constant 1 : index
    %c0_54 = arith.constant 0 : index
    %c0_55 = arith.constant 0 : index
    %36 = vector.load %arg16[%c0_52, %c1_53, %c0_54, %c0_55] : memref<2x10x10x32xbf16, #tpu.memory_space<vmem>>, vector<2x8x8x32xbf16>
    %37 = vector.shape_cast %36 : vector<2x8x8x32xbf16> to vector<128x32xbf16>
    %c3 = arith.constant 3 : index
    %c0_56 = arith.constant 0 : index
    %c0_57 = arith.constant 0 : index
    %38 = vector.load %arg3[%c3, %c0_56, %c0_57] : memref<9x32x128xbf16, #tpu.memory_space<vmem>>, vector<1x32x128xbf16>
    %39 = vector.shape_cast %38 : vector<1x32x128xbf16> to vector<32x128xbf16>
    %cst_58 = arith.constant dense<0.000000e+00> : vector<128x128xf32>
    %40 = tpu.matmul %37, %39, %cst_58 {dimension_numbers = #tpu.dot_dimension_numbers<[1], [0], [0], [1], [0, 0, 1, 1], [], []>} : vector<128x32xbf16>, vector<32x128xbf16>, vector<128x128xf32> -> vector<128x128xf32>
    %41 = arith.addf %35, %40 : vector<128x128xf32>
    %c0_59 = arith.constant 0 : index
    %c1_60 = arith.constant 1 : index
    %c1_61 = arith.constant 1 : index
    %c0_62 = arith.constant 0 : index
    %42 = vector.load %arg16[%c0_59, %c1_60, %c1_61, %c0_62] : memref<2x10x10x32xbf16, #tpu.memory_space<vmem>>, vector<2x8x8x32xbf16>
    %43 = vector.shape_cast %42 : vector<2x8x8x32xbf16> to vector<128x32xbf16>
    %c4 = arith.constant 4 : index
    %c0_63 = arith.constant 0 : index
    %c0_64 = arith.constant 0 : index
    %44 = vector.load %arg3[%c4, %c0_63, %c0_64] : memref<9x32x128xbf16, #tpu.memory_space<vmem>>, vector<1x32x128xbf16>
    %45 = vector.shape_cast %44 : vector<1x32x128xbf16> to vector<32x128xbf16>
    %cst_65 = arith.constant dense<0.000000e+00> : vector<128x128xf32>
    %46 = tpu.matmul %43, %45, %cst_65 {dimension_numbers = #tpu.dot_dimension_numbers<[1], [0], [0], [1], [0, 0, 1, 1], [], []>} : vector<128x32xbf16>, vector<32x128xbf16>, vector<128x128xf32> -> vector<128x128xf32>
    %47 = arith.addf %41, %46 : vector<128x128xf32>
    %c0_66 = arith.constant 0 : index
    %c1_67 = arith.constant 1 : index
    %c2_68 = arith.constant 2 : index
    %c0_69 = arith.constant 0 : index
    %48 = vector.load %arg16[%c0_66, %c1_67, %c2_68, %c0_69] : memref<2x10x10x32xbf16, #tpu.memory_space<vmem>>, vector<2x8x8x32xbf16>
    %49 = vector.shape_cast %48 : vector<2x8x8x32xbf16> to vector<128x32xbf16>
    %c5 = arith.constant 5 : index
    %c0_70 = arith.constant 0 : index
    %c0_71 = arith.constant 0 : index
    %50 = vector.load %arg3[%c5, %c0_70, %c0_71] : memref<9x32x128xbf16, #tpu.memory_space<vmem>>, vector<1x32x128xbf16>
    %51 = vector.shape_cast %50 : vector<1x32x128xbf16> to vector<32x128xbf16>
    %cst_72 = arith.constant dense<0.000000e+00> : vector<128x128xf32>
    %52 = tpu.matmul %49, %51, %cst_72 {dimension_numbers = #tpu.dot_dimension_numbers<[1], [0], [0], [1], [0, 0, 1, 1], [], []>} : vector<128x32xbf16>, vector<32x128xbf16>, vector<128x128xf32> -> vector<128x128xf32>
    %53 = arith.addf %47, %52 : vector<128x128xf32>
    %c0_73 = arith.constant 0 : index
    %c2_74 = arith.constant 2 : index
    %c0_75 = arith.constant 0 : index
    %c0_76 = arith.constant 0 : index
    %54 = vector.load %arg16[%c0_73, %c2_74, %c0_75, %c0_76] : memref<2x10x10x32xbf16, #tpu.memory_space<vmem>>, vector<2x8x8x32xbf16>
    %55 = vector.shape_cast %54 : vector<2x8x8x32xbf16> to vector<128x32xbf16>
    %c6 = arith.constant 6 : index
    %c0_77 = arith.constant 0 : index
    %c0_78 = arith.constant 0 : index
    %56 = vector.load %arg3[%c6, %c0_77, %c0_78] : memref<9x32x128xbf16, #tpu.memory_space<vmem>>, vector<1x32x128xbf16>
    %57 = vector.shape_cast %56 : vector<1x32x128xbf16> to vector<32x128xbf16>
    %cst_79 = arith.constant dense<0.000000e+00> : vector<128x128xf32>
    %58 = tpu.matmul %55, %57, %cst_79 {dimension_numbers = #tpu.dot_dimension_numbers<[1], [0], [0], [1], [0, 0, 1, 1], [], []>} : vector<128x32xbf16>, vector<32x128xbf16>, vector<128x128xf32> -> vector<128x128xf32>
    %59 = arith.addf %53, %58 : vector<128x128xf32>
    %c0_80 = arith.constant 0 : index
    %c2_81 = arith.constant 2 : index
    %c1_82 = arith.constant 1 : index
    %c0_83 = arith.constant 0 : index
    %60 = vector.load %arg16[%c0_80, %c2_81, %c1_82, %c0_83] : memref<2x10x10x32xbf16, #tpu.memory_space<vmem>>, vector<2x8x8x32xbf16>
    %61 = vector.shape_cast %60 : vector<2x8x8x32xbf16> to vector<128x32xbf16>
    %c7 = arith.constant 7 : index
    %c0_84 = arith.constant 0 : index
    %c0_85 = arith.constant 0 : index
    %62 = vector.load %arg3[%c7, %c0_84, %c0_85] : memref<9x32x128xbf16, #tpu.memory_space<vmem>>, vector<1x32x128xbf16>
    %63 = vector.shape_cast %62 : vector<1x32x128xbf16> to vector<32x128xbf16>
    %cst_86 = arith.constant dense<0.000000e+00> : vector<128x128xf32>
    %64 = tpu.matmul %61, %63, %cst_86 {dimension_numbers = #tpu.dot_dimension_numbers<[1], [0], [0], [1], [0, 0, 1, 1], [], []>} : vector<128x32xbf16>, vector<32x128xbf16>, vector<128x128xf32> -> vector<128x128xf32>
    %65 = arith.addf %59, %64 : vector<128x128xf32>
    %c0_87 = arith.constant 0 : index
    %c2_88 = arith.constant 2 : index
    %c2_89 = arith.constant 2 : index
    %c0_90 = arith.constant 0 : index
    %66 = vector.load %arg16[%c0_87, %c2_88, %c2_89, %c0_90] : memref<2x10x10x32xbf16, #tpu.memory_space<vmem>>, vector<2x8x8x32xbf16>
    %67 = vector.shape_cast %66 : vector<2x8x8x32xbf16> to vector<128x32xbf16>
    %c8 = arith.constant 8 : index
    %c0_91 = arith.constant 0 : index
    %c0_92 = arith.constant 0 : index
    %68 = vector.load %arg3[%c8, %c0_91, %c0_92] : memref<9x32x128xbf16, #tpu.memory_space<vmem>>, vector<1x32x128xbf16>
    %69 = vector.shape_cast %68 : vector<1x32x128xbf16> to vector<32x128xbf16>
    %cst_93 = arith.constant dense<0.000000e+00> : vector<128x128xf32>
    %70 = tpu.matmul %67, %69, %cst_93 {dimension_numbers = #tpu.dot_dimension_numbers<[1], [0], [0], [1], [0, 0, 1, 1], [], []>} : vector<128x32xbf16>, vector<32x128xbf16>, vector<128x128xf32> -> vector<128x128xf32>
    %71 = arith.addf %65, %70 : vector<128x128xf32>
    %c0_94 = arith.constant 0 : index
    %c0_95 = arith.constant 0 : index
    %72 = vector.load %arg4[%c0_94, %c0_95] : memref<1x128xf32, #tpu.memory_space<vmem>>, vector<1x128xf32>
    %73 = vector.broadcast %72 : vector<1x128xf32> to vector<128x128xf32>
    %74 = arith.mulf %71, %73 : vector<128x128xf32>
    %c0_96 = arith.constant 0 : index
    %c0_97 = arith.constant 0 : index
    %75 = vector.load %arg5[%c0_96, %c0_97] : memref<1x128xf32, #tpu.memory_space<vmem>>, vector<1x128xf32>
    %76 = vector.broadcast %75 : vector<1x128xf32> to vector<128x128xf32>
    %77 = arith.addf %74, %76 : vector<128x128xf32>
    %cst_98 = arith.constant 0.000000e+00 : f32
    %78 = vector.broadcast %cst_98 : f32 to vector<128x128xf32>
    %79 = arith.maximumf %77, %78 : vector<128x128xf32>
    %80 = arith.truncf %79 : vector<128x128xf32> to vector<128x128xbf16>
    %81 = vector.shape_cast %80 : vector<128x128xbf16> to vector<2x8x8x128xbf16>
    %c0_99 = arith.constant 0 : index
    %c1_100 = arith.constant 1 : index
    %c1_101 = arith.constant 1 : index
    %c0_102 = arith.constant 0 : index
    %82 = vector.load %arg17[%c0_99, %c1_100, %c1_101, %c0_102] : memref<2x10x10x128xbf16, #tpu.memory_space<vmem>>, vector<2x8x8x128xbf16>
    tpu.vector_store %arg17[%c0_99, %c1_100, %c1_101, %c0_102], %81 {strides = array<i32>} : memref<2x10x10x128xbf16, #tpu.memory_space<vmem>>, vector<2x8x8x128xbf16>,
    %cst_103 = arith.constant 0.000000e+00 : bf16
    %83 = vector.broadcast %cst_103 : bf16 to vector<2x1x10x128xbf16>
    %c0_104 = arith.constant 0 : index
    %c0_105 = arith.constant 0 : index
    %c0_106 = arith.constant 0 : index
    %c0_107 = arith.constant 0 : index
    %84 = vector.load %arg17[%c0_104, %c0_105, %c0_106, %c0_107] : memref<2x10x10x128xbf16, #tpu.memory_space<vmem>>, vector<2x1x10x128xbf16>
    tpu.vector_store %arg17[%c0_104, %c0_105, %c0_106, %c0_107], %83 {strides = array<i32>} : memref<2x10x10x128xbf16, #tpu.memory_space<vmem>>, vector<2x1x10x128xbf16>,
    %cst_108 = arith.constant 0.000000e+00 : bf16
    %85 = vector.broadcast %cst_108 : bf16 to vector<2x1x10x128xbf16>
    %c0_109 = arith.constant 0 : index
    %c9_110 = arith.constant 9 : index
    %c0_111 = arith.constant 0 : index
    %c0_112 = arith.constant 0 : index
    %86 = vector.load %arg17[%c0_109, %c9_110, %c0_111, %c0_112] : memref<2x10x10x128xbf16, #tpu.memory_space<vmem>>, vector<2x1x10x128xbf16>
    tpu.vector_store %arg17[%c0_109, %c9_110, %c0_111, %c0_112], %85 {strides = array<i32>} : memref<2x10x10x128xbf16, #tpu.memory_space<vmem>>, vector<2x1x10x128xbf16>,
    %cst_113 = arith.constant 0.000000e+00 : bf16
    %87 = vector.broadcast %cst_113 : bf16 to vector<2x10x1x128xbf16>
    %c0_114 = arith.constant 0 : index
    %c0_115 = arith.constant 0 : index
    %c0_116 = arith.constant 0 : index
    %c0_117 = arith.constant 0 : index
    %88 = vector.load %arg17[%c0_114, %c0_115, %c0_116, %c0_117] : memref<2x10x10x128xbf16, #tpu.memory_space<vmem>>, vector<2x10x1x128xbf16>
    tpu.vector_store %arg17[%c0_114, %c0_115, %c0_116, %c0_117], %87 {strides = array<i32>} : memref<2x10x10x128xbf16, #tpu.memory_space<vmem>>, vector<2x10x1x128xbf16>,
    %cst_118 = arith.constant 0.000000e+00 : bf16
    %89 = vector.broadcast %cst_118 : bf16 to vector<2x10x1x128xbf16>
    %c0_119 = arith.constant 0 : index
    %c0_120 = arith.constant 0 : index
    %c9_121 = arith.constant 9 : index
    %c0_122 = arith.constant 0 : index
    %90 = vector.load %arg17[%c0_119, %c0_120, %c9_121, %c0_122] : memref<2x10x10x128xbf16, #tpu.memory_space<vmem>>, vector<2x10x1x128xbf16>
    tpu.vector_store %arg17[%c0_119, %c0_120, %c9_121, %c0_122], %89 {strides = array<i32>} : memref<2x10x10x128xbf16, #tpu.memory_space<vmem>>, vector<2x10x1x128xbf16>,
    %c0_123 = arith.constant 0 : index
    %c0_124 = arith.constant 0 : index
    %c0_125 = arith.constant 0 : index
    %c0_126 = arith.constant 0 : index
    %91 = vector.load %arg17[%c0_123, %c0_124, %c0_125, %c0_126] : memref<2x10x10x128xbf16, #tpu.memory_space<vmem>>, vector<2x8x8x128xbf16>
    %92 = vector.shape_cast %91 : vector<2x8x8x128xbf16> to vector<128x128xbf16>
    %c0_127 = arith.constant 0 : index
    %c0_128 = arith.constant 0 : index
    %c0_129 = arith.constant 0 : index
    %93 = vector.load %arg6[%c0_127, %c0_128, %c0_129] : memref<9x128x128xbf16, #tpu.memory_space<vmem>>, vector<1x128x128xbf16>
    %94 = vector.shape_cast %93 : vector<1x128x128xbf16> to vector<128x128xbf16>
    %cst_130 = arith.constant dense<0.000000e+00> : vector<128x128xf32>
    %95 = tpu.matmul %92, %94, %cst_130 {dimension_numbers = #tpu.dot_dimension_numbers<[1], [0], [0], [1], [0, 0, 1, 1], [], []>} : vector<128x128xbf16>, vector<128x128xbf16>, vector<128x128xf32> -> vector<128x128xf32>
    %c0_131 = arith.constant 0 : index
    %c0_132 = arith.constant 0 : index
    %c1_133 = arith.constant 1 : index
    %c0_134 = arith.constant 0 : index
    %96 = vector.load %arg17[%c0_131, %c0_132, %c1_133, %c0_134] : memref<2x10x10x128xbf16, #tpu.memory_space<vmem>>, vector<2x8x8x128xbf16>
    %97 = vector.shape_cast %96 : vector<2x8x8x128xbf16> to vector<128x128xbf16>
    %c1_135 = arith.constant 1 : index
    %c0_136 = arith.constant 0 : index
    %c0_137 = arith.constant 0 : index
    %98 = vector.load %arg6[%c1_135, %c0_136, %c0_137] : memref<9x128x128xbf16, #tpu.memory_space<vmem>>, vector<1x128x128xbf16>
    %99 = vector.shape_cast %98 : vector<1x128x128xbf16> to vector<128x128xbf16>
    %cst_138 = arith.constant dense<0.000000e+00> : vector<128x128xf32>
    %100 = tpu.matmul %97, %99, %cst_138 {dimension_numbers = #tpu.dot_dimension_numbers<[1], [0], [0], [1], [0, 0, 1, 1], [], []>} : vector<128x128xbf16>, vector<128x128xbf16>, vector<128x128xf32> -> vector<128x128xf32>
    %101 = arith.addf %95, %100 : vector<128x128xf32>
    %c0_139 = arith.constant 0 : index
    %c0_140 = arith.constant 0 : index
    %c2_141 = arith.constant 2 : index
    %c0_142 = arith.constant 0 : index
    %102 = vector.load %arg17[%c0_139, %c0_140, %c2_141, %c0_142] : memref<2x10x10x128xbf16, #tpu.memory_space<vmem>>, vector<2x8x8x128xbf16>
    %103 = vector.shape_cast %102 : vector<2x8x8x128xbf16> to vector<128x128xbf16>
    %c2_143 = arith.constant 2 : index
    %c0_144 = arith.constant 0 : index
    %c0_145 = arith.constant 0 : index
    %104 = vector.load %arg6[%c2_143, %c0_144, %c0_145] : memref<9x128x128xbf16, #tpu.memory_space<vmem>>, vector<1x128x128xbf16>
    %105 = vector.shape_cast %104 : vector<1x128x128xbf16> to vector<128x128xbf16>
    %cst_146 = arith.constant dense<0.000000e+00> : vector<128x128xf32>
    %106 = tpu.matmul %103, %105, %cst_146 {dimension_numbers = #tpu.dot_dimension_numbers<[1], [0], [0], [1], [0, 0, 1, 1], [], []>} : vector<128x128xbf16>, vector<128x128xbf16>, vector<128x128xf32> -> vector<128x128xf32>
    %107 = arith.addf %101, %106 : vector<128x128xf32>
    %c0_147 = arith.constant 0 : index
    %c1_148 = arith.constant 1 : index
    %c0_149 = arith.constant 0 : index
    %c0_150 = arith.constant 0 : index
    %108 = vector.load %arg17[%c0_147, %c1_148, %c0_149, %c0_150] : memref<2x10x10x128xbf16, #tpu.memory_space<vmem>>, vector<2x8x8x128xbf16>
    %109 = vector.shape_cast %108 : vector<2x8x8x128xbf16> to vector<128x128xbf16>
    %c3_151 = arith.constant 3 : index
    %c0_152 = arith.constant 0 : index
    %c0_153 = arith.constant 0 : index
    %110 = vector.load %arg6[%c3_151, %c0_152, %c0_153] : memref<9x128x128xbf16, #tpu.memory_space<vmem>>, vector<1x128x128xbf16>
    %111 = vector.shape_cast %110 : vector<1x128x128xbf16> to vector<128x128xbf16>
    %cst_154 = arith.constant dense<0.000000e+00> : vector<128x128xf32>
    %112 = tpu.matmul %109, %111, %cst_154 {dimension_numbers = #tpu.dot_dimension_numbers<[1], [0], [0], [1], [0, 0, 1, 1], [], []>} : vector<128x128xbf16>, vector<128x128xbf16>, vector<128x128xf32> -> vector<128x128xf32>
    %113 = arith.addf %107, %112 : vector<128x128xf32>
    %c0_155 = arith.constant 0 : index
    %c1_156 = arith.constant 1 : index
    %c1_157 = arith.constant 1 : index
    %c0_158 = arith.constant 0 : index
    %114 = vector.load %arg17[%c0_155, %c1_156, %c1_157, %c0_158] : memref<2x10x10x128xbf16, #tpu.memory_space<vmem>>, vector<2x8x8x128xbf16>
    %115 = vector.shape_cast %114 : vector<2x8x8x128xbf16> to vector<128x128xbf16>
    %c4_159 = arith.constant 4 : index
    %c0_160 = arith.constant 0 : index
    %c0_161 = arith.constant 0 : index
    %116 = vector.load %arg6[%c4_159, %c0_160, %c0_161] : memref<9x128x128xbf16, #tpu.memory_space<vmem>>, vector<1x128x128xbf16>
    %117 = vector.shape_cast %116 : vector<1x128x128xbf16> to vector<128x128xbf16>
    %cst_162 = arith.constant dense<0.000000e+00> : vector<128x128xf32>
    %118 = tpu.matmul %115, %117, %cst_162 {dimension_numbers = #tpu.dot_dimension_numbers<[1], [0], [0], [1], [0, 0, 1, 1], [], []>} : vector<128x128xbf16>, vector<128x128xbf16>, vector<128x128xf32> -> vector<128x128xf32>
    %119 = arith.addf %113, %118 : vector<128x128xf32>
    %c0_163 = arith.constant 0 : index
    %c1_164 = arith.constant 1 : index
    %c2_165 = arith.constant 2 : index
    %c0_166 = arith.constant 0 : index
    %120 = vector.load %arg17[%c0_163, %c1_164, %c2_165, %c0_166] : memref<2x10x10x128xbf16, #tpu.memory_space<vmem>>, vector<2x8x8x128xbf16>
    %121 = vector.shape_cast %120 : vector<2x8x8x128xbf16> to vector<128x128xbf16>
    %c5_167 = arith.constant 5 : index
    %c0_168 = arith.constant 0 : index
    %c0_169 = arith.constant 0 : index
    %122 = vector.load %arg6[%c5_167, %c0_168, %c0_169] : memref<9x128x128xbf16, #tpu.memory_space<vmem>>, vector<1x128x128xbf16>
    %123 = vector.shape_cast %122 : vector<1x128x128xbf16> to vector<128x128xbf16>
    %cst_170 = arith.constant dense<0.000000e+00> : vector<128x128xf32>
    %124 = tpu.matmul %121, %123, %cst_170 {dimension_numbers = #tpu.dot_dimension_numbers<[1], [0], [0], [1], [0, 0, 1, 1], [], []>} : vector<128x128xbf16>, vector<128x128xbf16>, vector<128x128xf32> -> vector<128x128xf32>
    %125 = arith.addf %119, %124 : vector<128x128xf32>
    %c0_171 = arith.constant 0 : index
    %c2_172 = arith.constant 2 : index
    %c0_173 = arith.constant 0 : index
    %c0_174 = arith.constant 0 : index
    %126 = vector.load %arg17[%c0_171, %c2_172, %c0_173, %c0_174] : memref<2x10x10x128xbf16, #tpu.memory_space<vmem>>, vector<2x8x8x128xbf16>
    %127 = vector.shape_cast %126 : vector<2x8x8x128xbf16> to vector<128x128xbf16>
    %c6_175 = arith.constant 6 : index
    %c0_176 = arith.constant 0 : index
    %c0_177 = arith.constant 0 : index
    %128 = vector.load %arg6[%c6_175, %c0_176, %c0_177] : memref<9x128x128xbf16, #tpu.memory_space<vmem>>, vector<1x128x128xbf16>
    %129 = vector.shape_cast %128 : vector<1x128x128xbf16> to vector<128x128xbf16>
    %cst_178 = arith.constant dense<0.000000e+00> : vector<128x128xf32>
    %130 = tpu.matmul %127, %129, %cst_178 {dimension_numbers = #tpu.dot_dimension_numbers<[1], [0], [0], [1], [0, 0, 1, 1], [], []>} : vector<128x128xbf16>, vector<128x128xbf16>, vector<128x128xf32> -> vector<128x128xf32>
    %131 = arith.addf %125, %130 : vector<128x128xf32>
    %c0_179 = arith.constant 0 : index
    %c2_180 = arith.constant 2 : index
    %c1_181 = arith.constant 1 : index
    %c0_182 = arith.constant 0 : index
    %132 = vector.load %arg17[%c0_179, %c2_180, %c1_181, %c0_182] : memref<2x10x10x128xbf16, #tpu.memory_space<vmem>>, vector<2x8x8x128xbf16>
    %133 = vector.shape_cast %132 : vector<2x8x8x128xbf16> to vector<128x128xbf16>
    %c7_183 = arith.constant 7 : index
    %c0_184 = arith.constant 0 : index
    %c0_185 = arith.constant 0 : index
    %134 = vector.load %arg6[%c7_183, %c0_184, %c0_185] : memref<9x128x128xbf16, #tpu.memory_space<vmem>>, vector<1x128x128xbf16>
    %135 = vector.shape_cast %134 : vector<1x128x128xbf16> to vector<128x128xbf16>
    %cst_186 = arith.constant dense<0.000000e+00> : vector<128x128xf32>
    %136 = tpu.matmul %133, %135, %cst_186 {dimension_numbers = #tpu.dot_dimension_numbers<[1], [0], [0], [1], [0, 0, 1, 1], [], []>} : vector<128x128xbf16>, vector<128x128xbf16>, vector<128x128xf32> -> vector<128x128xf32>
    %137 = arith.addf %131, %136 : vector<128x128xf32>
    %c0_187 = arith.constant 0 : index
    %c2_188 = arith.constant 2 : index
    %c2_189 = arith.constant 2 : index
    %c0_190 = arith.constant 0 : index
    %138 = vector.load %arg17[%c0_187, %c2_188, %c2_189, %c0_190] : memref<2x10x10x128xbf16, #tpu.memory_space<vmem>>, vector<2x8x8x128xbf16>
    %139 = vector.shape_cast %138 : vector<2x8x8x128xbf16> to vector<128x128xbf16>
    %c8_191 = arith.constant 8 : index
    %c0_192 = arith.constant 0 : index
    %c0_193 = arith.constant 0 : index
    %140 = vector.load %arg6[%c8_191, %c0_192, %c0_193] : memref<9x128x128xbf16, #tpu.memory_space<vmem>>, vector<1x128x128xbf16>
    %141 = vector.shape_cast %140 : vector<1x128x128xbf16> to vector<128x128xbf16>
    %cst_194 = arith.constant dense<0.000000e+00> : vector<128x128xf32>
    %142 = tpu.matmul %139, %141, %cst_194 {dimension_numbers = #tpu.dot_dimension_numbers<[1], [0], [0], [1], [0, 0, 1, 1], [], []>} : vector<128x128xbf16>, vector<128x128xbf16>, vector<128x128xf32> -> vector<128x128xf32>
    %143 = arith.addf %137, %142 : vector<128x128xf32>
    %c0_195 = arith.constant 0 : index
    %c0_196 = arith.constant 0 : index
    %144 = vector.load %arg7[%c0_195, %c0_196] : memref<1x128xf32, #tpu.memory_space<vmem>>, vector<1x128xf32>
    %145 = vector.broadcast %144 : vector<1x128xf32> to vector<128x128xf32>
    %146 = arith.mulf %143, %145 : vector<128x128xf32>
    %c0_197 = arith.constant 0 : index
    %c0_198 = arith.constant 0 : index
    %147 = vector.load %arg8[%c0_197, %c0_198] : memref<1x128xf32, #tpu.memory_space<vmem>>, vector<1x128xf32>
    %148 = vector.broadcast %147 : vector<1x128xf32> to vector<128x128xf32>
    %149 = arith.addf %146, %148 : vector<128x128xf32>
    %cst_199 = arith.constant 0.000000e+00 : f32
    %150 = vector.broadcast %cst_199 : f32 to vector<128x128xf32>
    %151 = arith.maximumf %149, %150 : vector<128x128xf32>
    %c0_200 = arith.constant 0 : index
    %c0_201 = arith.constant 0 : index
    %152 = vector.load %arg9[%c0_200, %c0_201] : memref<1x128xbf16, #tpu.memory_space<vmem>>, vector<1x128xbf16>
    %153 = arith.truncf %151 : vector<128x128xf32> to vector<128x128xbf16>
    %cst_202 = arith.constant dense<0.000000e+00> : vector<1x128xf32>
    %154 = tpu.matmul %152, %153, %cst_202 {dimension_numbers = #tpu.dot_dimension_numbers<[1], [1], [0], [0], [0, 0, 1, 0], [], []>} : vector<1x128xbf16>, vector<128x128xbf16>, vector<1x128xf32> -> vector<1x128xf32>
    %c0_203 = arith.constant 0 : index
    %c0_204 = arith.constant 0 : index
    %155 = vector.load %arg10[%c0_203, %c0_204] : memref<1x1xf32, #tpu.memory_space<vmem>>, vector<1x1xf32>
    %156 = vector.broadcast %155 : vector<1x1xf32> to vector<1x128xf32>
    %157 = arith.addf %154, %156 : vector<1x128xf32>
    %c0_205 = arith.constant 0 : index
    %c0_206 = arith.constant 0 : index
    %158 = vector.load %arg14[%c0_205, %c0_206] : memref<1x128xf32, #tpu.memory_space<vmem>>, vector<1x128xf32>
    tpu.vector_store %arg14[%c0_205, %c0_206], %157 {strides = array<i32>} : memref<1x128xf32, #tpu.memory_space<vmem>>, vector<1x128xf32>,
    %159 = vector.shape_cast %5 : vector<128x32xf32> to vector<2x64x32xf32>
    %cst_207 = arith.constant dense<0.000000e+00> : vector<2x32xf32>
    %160 = vector.multi_reduction <add>, %159, %cst_207 [1] : vector<2x64x32xf32> to vector<2x32xf32>
    %cst_208 = arith.constant 1.562500e-02 : f32
    %161 = vector.broadcast %cst_208 : f32 to vector<2x32xf32>
    %162 = arith.mulf %160, %161 : vector<2x32xf32>
    %c0_209 = arith.constant 0 : index
    %c0_210 = arith.constant 0 : index
    %163 = vector.load %arg11[%c0_209, %c0_210] : memref<1x32xf32, #tpu.memory_space<vmem>>, vector<1x32xf32>
    %164 = vector.broadcast %163 : vector<1x32xf32> to vector<2x32xf32>
    %165 = arith.mulf %162, %164 : vector<2x32xf32>
    %cst_211 = arith.constant dense<0.000000e+00> : vector<2xf32>
    %166 = vector.multi_reduction <add>, %165, %cst_211 [1] : vector<2x32xf32> to vector<2xf32>
    %167 = vector.shape_cast %166 : vector<2xf32> to vector<2x1xf32>
    %c0_212 = arith.constant 0 : index
    %c0_213 = arith.constant 0 : index
    %168 = vector.load %arg12[%c0_212, %c0_213] : memref<1x1xf32, #tpu.memory_space<vmem>>, vector<1x1xf32>
    %169 = vector.broadcast %168 : vector<1x1xf32> to vector<2x1xf32>
    %170 = arith.addf %167, %169 : vector<2x1xf32>
    %c0_214 = arith.constant 0 : index
    %c0_215 = arith.constant 0 : index
    %171 = vector.load %arg15[%c0_214, %c0_215] : memref<2x1xf32, #tpu.memory_space<vmem>>, vector<2x1xf32>
    tpu.vector_store %arg15[%c0_214, %c0_215], %170 {strides = array<i32>} : memref<2x1xf32, #tpu.memory_space<vmem>>, vector<2x1xf32>,
    return
  }
}

</mosaic_0001>

<llo_original>
// kernel: v5dual_forward.1
$region0: #{v5dual_forward.1}
  #allocation0 [shape = 'u32[]', space=smem, size = 0x4, offset = 0x4, fixed_abs, tag = 'smem constant byte address 0x4 - core index']
  #allocation1 [shape = 'u32[72,128]{1,0:T(1,128)}', space=vmem, size = 0x9000, scoped, tag = 'internal scratch']
  #allocation2 [shape = 'bf16[2,10,10,32]{3,2,1,0:T(8,128)(2,1)}', space=vmem, size = 0x14000, scoped, tag = 'scratch operand']
  #allocation3 [shape = 'bf16[2,10,10,128]{3,2,1,0:T(8,128)(2,1)}', space=vmem, size = 0x14000, scoped, tag = 'scratch operand']
  #allocation4 [shape = 'f32[1,1]{1,0:T(1,128)S(1)}', space=vmem, size = 0x200, scoped, tag = 'scoped memory for v5dual_forward.1']
  #allocation5 [shape = 'f32[1,1]{1,0:T(1,128)S(1)}', space=vmem, size = 0x200, scoped, tag = 'scoped memory for v5dual_forward.1']
  %s0 = inlined_call_operand.vmem [shape: bf16[128,48], index: 0, kind: input, shape index: {}]
  %s1 = inlined_call_operand.vmem [shape: bf16[48,32], index: 1, kind: input, shape index: {}]
  %s2 = inlined_call_operand.vmem [shape: f32[1,32], index: 2, kind: input, shape index: {}]
  %s3 = inlined_call_operand.vmem [shape: bf16[9,32,128], index: 3, kind: input, shape index: {}]
  %s4 = inlined_call_operand.vmem [shape: f32[1,128], index: 4, kind: input, shape index: {}]
  %s5 = inlined_call_operand.vmem [shape: f32[1,128], index: 5, kind: input, shape index: {}]
  %s6 = inlined_call_operand.vmem [shape: bf16[9,128,128], index: 6, kind: input, shape index: {}]
  %s7 = inlined_call_operand.vmem [shape: f32[1,128], index: 7, kind: input, shape index: {}]
  %s8 = inlined_call_operand.vmem [shape: f32[1,128], index: 8, kind: input, shape index: {}]
  %s9 = inlined_call_operand.vmem [shape: bf16[1,128], index: 9, kind: input, shape index: {}]
  %s10 = inlined_call_operand.<no memory space> [shape: f32[1,1], index: 10, kind: input, shape index: {}]
  %s11 = inlined_call_operand.vmem [shape: f32[1,32], index: 11, kind: input, shape index: {}]
  %s12 = inlined_call_operand.<no memory space> [shape: f32[1,1], index: 12, kind: input, shape index: {}]
  %s13 = inlined_call_operand.vmem [shape: f32[32,128], index: 13, kind: output, shape index: {0}]
  %s14 = inlined_call_operand.vmem [shape: f32[1,128], index: 14, kind: output, shape index: {1}]
  %s15 = inlined_call_operand.vmem [shape: f32[2,1], index: 15, kind: output, shape index: {2}]
  %16 = xla_tuple %s13, %s14, %s15
  %s17 = sld [smem:[#allocation0]]
  $region78: #{v5dual_forward.1} parent=0
    _
  %s19 = ssub.s32 1, %s17
  %s20 = scalar_select 0, %s19, %s17
  %v21 = vstv %s10
  %22 = vst [vmem:[#allocation4] sm:$0x1] %v21
  %v23 = vstv %s12
  %24 = vst [vmem:[#allocation5] sm:$0x1] %v23
  // Predicated region
  $region2: #{v5dual_forward.1} parent=0 // pred_check
    _
  $region3: #{v5dual_forward.1} parent=0 // pred_check_branch
    %26 = sbr.rel (0) target = $region5
  $region4: #{v5dual_forward.1} parent=0 // pred_region
    _
  $region5: #{v5dual_forward.1} parent=0 // pred_fallthru
    _
  // Predicated region
  $region6: #{v5dual_forward.1} parent=0 // pred_check
    _
  $region7: #{v5dual_forward.1} parent=0 // pred_check_branch
    %28 = sbr.rel (0) target = $region9
  $region8: #{v5dual_forward.1} parent=0 // pred_region
    _
  $region9: #{v5dual_forward.1} parent=0 // pred_fallthru
    _
  // Predicated region
  $region10: #{v5dual_forward.1} parent=0 // pred_check
    _
  $region11: #{v5dual_forward.1} parent=0 // pred_check_branch
    %30 = sbr.rel (0) target = $region13
  $region12: #{v5dual_forward.1} parent=0 // pred_region
    _
  $region13: #{v5dual_forward.1} parent=0 // pred_fallthru
    _
  // Predicated region
  $region14: #{v5dual_forward.1} parent=0 // pred_check
    _
  $region15: #{v5dual_forward.1} parent=0 // pred_check_branch
    %32 = sbr.rel (0) target = $region17
  $region16: #{v5dual_forward.1} parent=0 // pred_region
    _
  $region17: #{v5dual_forward.1} parent=0 // pred_fallthru
    _
  // Predicated region
  $region18: #{v5dual_forward.1} parent=0 // pred_check
    _
  $region19: #{v5dual_forward.1} parent=0 // pred_check_branch
    %34 = sbr.rel (0) target = $region21
  $region20: #{v5dual_forward.1} parent=0 // pred_region
    _
  $region21: #{v5dual_forward.1} parent=0 // pred_fallthru
    _
  // Predicated region
  $region22: #{v5dual_forward.1} parent=0 // pred_check
    _
  $region23: #{v5dual_forward.1} parent=0 // pred_check_branch
    %36 = sbr.rel (0) target = $region25
  $region24: #{v5dual_forward.1} parent=0 // pred_region
    _
  $region25: #{v5dual_forward.1} parent=0 // pred_fallthru
    _
  // Predicated region
  $region26: #{v5dual_forward.1} parent=0 // pred_check
    _
  $region27: #{v5dual_forward.1} parent=0 // pred_check_branch
    %38 = sbr.rel (0) target = $region29
  $region28: #{v5dual_forward.1} parent=0 // pred_region
    _
  $region29: #{v5dual_forward.1} parent=0 // pred_fallthru
    _
  // Predicated region
  $region30: #{v5dual_forward.1} parent=0 // pred_check
    _
  $region31: #{v5dual_forward.1} parent=0 // pred_check_branch
    %40 = sbr.rel (0) target = $region33
  $region32: #{v5dual_forward.1} parent=0 // pred_region
    _
  $region33: #{v5dual_forward.1} parent=0 // pred_fallthru
    _
  // Predicated region
  $region34: #{v5dual_forward.1} parent=0 // pred_check
    _
  $region35: #{v5dual_forward.1} parent=0 // pred_check_branch
    %42 = sbr.rel (0) target = $region37
  $region36: #{v5dual_forward.1} parent=0 // pred_region
    _
  $region37: #{v5dual_forward.1} parent=0 // pred_fallthru
    _
  // Predicated region
  $region38: #{v5dual_forward.1} parent=0 // pred_check
    _
  $region39: #{v5dual_forward.1} parent=0 // pred_check_branch
    %44 = sbr.rel (0) target = $region41
  $region40: #{v5dual_forward.1} parent=0 // pred_region
    _
  $region41: #{v5dual_forward.1} parent=0 // pred_fallthru
    _
  // Predicated region
  $region42: #{v5dual_forward.1} parent=0 // pred_check
    _
  $region43: #{v5dual_forward.1} parent=0 // pred_check_branch
    %46 = sbr.rel (0) target = $region45
  $region44: #{v5dual_forward.1} parent=0 // pred_region
    _
  $region45: #{v5dual_forward.1} parent=0 // pred_fallthru
    _
  // Predicated region
  $region46: #{v5dual_forward.1} parent=0 // pred_check
    _
  $region47: #{v5dual_forward.1} parent=0 // pred_check_branch
    %48 = sbr.rel (0) target = $region49
  $region48: #{v5dual_forward.1} parent=0 // pred_region
    _
  $region49: #{v5dual_forward.1} parent=0 // pred_fallthru
    _
  // Predicated region
  $region50: #{v5dual_forward.1} parent=0 // pred_check
    _
  $region51: #{v5dual_forward.1} parent=0 // pred_check_branch
    %50 = sbr.rel (0) target = $region53
  $region52: #{v5dual_forward.1} parent=0 // pred_region
    _
  $region53: #{v5dual_forward.1} parent=0 // pred_fallthru
    _
  %v52 = vld [vmem:[%s0] sm:$0xf]
  %v53 = vld [vmem:[%s0 + $0x4] sm:$0xf]
  %v54 = vld [vmem:[%s0 + $0x8] sm:$0xf]
  %v55 = vld [vmem:[%s0 + $0xc] sm:$0xf]
  %v56 = vld [vmem:[%s0 + $0x10] sm:$0xf]
  %v57 = vld [vmem:[%s0 + $0x14] sm:$0xf]
  %v58 = vld [vmem:[%s0 + $0x18] sm:$0xf]
  %v59 = vld [vmem:[%s0 + $0x1c] sm:$0xf]
  %v60 = vld [vmem:[%s0 + $0x20] sm:$0xf]
  %v61 = vld [vmem:[%s0 + $0x24] sm:$0xf]
  %v62 = vld [vmem:[%s0 + $0x28] sm:$0xf]
  %v63 = vld [vmem:[%s0 + $0x2c] sm:$0xf]
  %v64 = vld [vmem:[%s0 + $0x30] sm:$0xf]
  %v65 = vld [vmem:[%s0 + $0x34] sm:$0xf]
  %v66 = vld [vmem:[%s0 + $0x38] sm:$0xf]
  %v67 = vld [vmem:[%s0 + $0x3c] sm:$0xf]
  %v68 = vld [vmem:[%s1] sm:$0xf]
  %v69 = vld [vmem:[%s1 + $0x4] sm:$0xf]
  %v70 = vld [vmem:[%s1 + $0x8] sm:$0xf]
  %v71 = vld [vmem:[%s1 + $0xc] sm:$0xf]
  %v72 = vld [vmem:[%s1 + $0x10] sm:$0xf]
  %v73 = vld [vmem:[%s1 + $0x14] sm:$0xf]
  %v74 = vld [vmem:[%s2] sm:$0x1]
  %v76 = vperm.slane %v74, 0
  %v94 = vunpack.c.l.b16 %v52
  %v95 = vunpack.c.l.b16 %v53
  %v96 = vunpack.c.l.b16 %v54
  %v97 = vunpack.c.l.b16 %v55
  %v98 = vunpack.c.l.b16 %v56
  %v99 = vunpack.c.l.b16 %v57
  %v100 = vunpack.c.l.b16 %v58
  %v101 = vunpack.c.l.b16 %v59
  %v102 = vunpack.c.l.b16 %v60
  %v103 = vunpack.c.l.b16 %v61
  %v104 = vunpack.c.l.b16 %v62
  %v105 = vunpack.c.l.b16 %v63
  %v106 = vunpack.c.l.b16 %v64
  %v107 = vunpack.c.l.b16 %v65
  %v108 = vunpack.c.l.b16 %v66
  %v109 = vunpack.c.l.b16 %v67
  %v110 = vpack.c.b16 %v95, %v94
  %v111 = vpack.c.b16 %v97, %v96
  %v112 = vpack.c.b16 %v99, %v98
  %v113 = vpack.c.b16 %v101, %v100
  %v114 = vpack.c.b16 %v103, %v102
  %v115 = vpack.c.b16 %v105, %v104
  %v116 = vpack.c.b16 %v107, %v106
  %v117 = vpack.c.b16 %v109, %v108
  %v124 = vunpack.c.l.b16 %v68
  %v125 = vunpack.c.l.b16 %v69
  %v126 = vunpack.c.l.b16 %v70
  %v127 = vunpack.c.l.b16 %v71
  %v128 = vunpack.c.l.b16 %v72
  %v129 = vunpack.c.l.b16 %v73
  %v130 = vpack.c.b16 %v125, %v124
  %v131 = vpack.c.b16 %v127, %v126
  %v132 = vpack.c.b16 %v129, %v128
  %vm136 = vcmask 392192
  %v138 = vsel %vm136, %v110, 0
  %v141 = vsel %vm136, %v111, 0
  %v144 = vsel %vm136, %v112, 0
  %v147 = vsel %vm136, %v113, 0
  %v150 = vsel %vm136, %v114, 0
  %v153 = vsel %vm136, %v115, 0
  %v156 = vsel %vm136, %v116, 0
  %v159 = vsel %vm136, %v117, 0
  %161 = vmatpush.bf16.msra.mxu0 0
  %162 = vmatpush.bf16.msra.mxu0 0
  %163 = vmatpush.bf16.msra.mxu0 0
  %164 = vmatpush.bf16.msra.mxu0 0
  %165 = vmatpush.bf16.msra.mxu0 0
  %166 = vmatpush.bf16.msra.mxu0 %v132
  %167 = vmatpush.bf16.msra.mxu0 %v131
  %168 = vmatpush.bf16.msra.mxu0 %v130
  %169 = vmatmul.bf16.gmra.mxu0 %v138
  %v170 = vpop.f32.mrf.mxu0
  %v171 = vadd.f32 %v76, %v170
  %v172 = vpop.f32.mrf.mxu0
  %v173 = vadd.f32 %v76, %v172
  %174 = vmatmul.bf16.gmra.mxu0 %v141
  %v175 = vpop.f32.mrf.mxu0
  %v176 = vadd.f32 %v76, %v175
  %v177 = vpop.f32.mrf.mxu0
  %v178 = vadd.f32 %v76, %v177
  %179 = vmatmul.bf16.gmra.mxu0 %v144
  %v180 = vpop.f32.mrf.mxu0
  %v181 = vadd.f32 %v76, %v180
  %v182 = vpop.f32.mrf.mxu0
  %v183 = vadd.f32 %v76, %v182
  %184 = vmatmul.bf16.gmra.mxu0 %v147
  %v185 = vpop.f32.mrf.mxu0
  %v186 = vadd.f32 %v76, %v185
  %v187 = vpop.f32.mrf.mxu0
  %v188 = vadd.f32 %v76, %v187
  %189 = vmatmul.bf16.gmra.mxu0 %v150
  %v190 = vpop.f32.mrf.mxu0
  %v191 = vadd.f32 %v76, %v190
  %v192 = vpop.f32.mrf.mxu0
  %v193 = vadd.f32 %v76, %v192
  %194 = vmatmul.bf16.gmra.mxu0 %v153
  %v195 = vpop.f32.mrf.mxu0
  %v196 = vadd.f32 %v76, %v195
  %v197 = vpop.f32.mrf.mxu0
  %v198 = vadd.f32 %v76, %v197
  %199 = vmatmul.bf16.gmra.mxu0 %v156
  %v200 = vpop.f32.mrf.mxu0
  %v201 = vadd.f32 %v76, %v200
  %v202 = vpop.f32.mrf.mxu0
  %v203 = vadd.f32 %v76, %v202
  %204 = vmatmul.bf16.gmra.mxu0 %v159
  %v205 = vpop.f32.mrf.mxu0
  %v206 = vadd.f32 %v76, %v205
  %v207 = vpop.f32.mrf.mxu0
  %v208 = vadd.f32 %v76, %v207
  %209 = vdwg.mxu0
  %210 = vxpose.xlu0.b32.start [1/16] %v171, 128
  %211 = vxpose.xlu0.b32.cont [2/16] %v173, 128
  %212 = vxpose.xlu0.b32.cont [3/16] %v176, 128
  %213 = vxpose.xlu0.b32.cont [4/16] %v178, 128
  %214 = vxpose.xlu0.b32.cont [5/16] %v181, 128
  %215 = vxpose.xlu0.b32.cont [6/16] %v183, 128
  %216 = vxpose.xlu0.b32.cont [7/16] %v186, 128
  %217 = vxpose.xlu0.b32.cont [8/16] %v188, 128
  %218 = vxpose.xlu0.b32.cont [9/16] %v191, 128
  %219 = vxpose.xlu0.b32.cont [10/16] %v193, 128
  %220 = vxpose.xlu0.b32.cont [11/16] %v196, 128
  %221 = vxpose.xlu0.b32.cont [12/16] %v198, 128
  %222 = vxpose.xlu0.b32.cont [13/16] %v201, 128
  %223 = vxpose.xlu0.b32.cont [14/16] %v203, 128
  %224 = vxpose.xlu0.b32.cont [15/16] %v206, 128
  %225 = vxpose.xlu0.b32.end [16/16] %v208, 128
  %v226 = vpop.trf.xlu0
  %v227 = vpop.trf.xlu0
  %v228 = vpop.trf.xlu0
  %v229 = vpop.trf.xlu0
  %v230 = vpop.trf.xlu0
  %v231 = vpop.trf.xlu0
  %v232 = vpop.trf.xlu0
  %v233 = vpop.trf.xlu0
  %v234 = vpop.trf.xlu0
  %v235 = vpop.trf.xlu0
  %v236 = vpop.trf.xlu0
  %v237 = vpop.trf.xlu0
  %v238 = vpop.trf.xlu0
  %v239 = vpop.trf.xlu0
  %v240 = vpop.trf.xlu0
  %v241 = vpop.trf.xlu0
  %242 = vst [vmem:[%s13] sm:$0xff] %v226
  %243 = vst [vmem:[%s13 + $0x8] sm:$0xff] %v227
  %244 = vst [vmem:[%s13 + $0x10] sm:$0xff] %v228
  %245 = vst [vmem:[%s13 + $0x18] sm:$0xff] %v229
  %v246 = vpack.c.bf16 %v171, %v171
  %v247 = vpack.c.bf16 %v173, %v173
  %v248 = vpack.c.bf16 %v176, %v176
  %v249 = vpack.c.bf16 %v178, %v178
  %v250 = vpack.c.bf16 %v181, %v181
  %v251 = vpack.c.bf16 %v183, %v183
  %v252 = vpack.c.bf16 %v186, %v186
  %v253 = vpack.c.bf16 %v188, %v188
  %v254 = vpack.c.bf16 %v191, %v191
  %v255 = vpack.c.bf16 %v193, %v193
  %v256 = vpack.c.bf16 %v196, %v196
  %v257 = vpack.c.bf16 %v198, %v198
  %v258 = vpack.c.bf16 %v201, %v201
  %v259 = vpack.c.bf16 %v203, %v203
  %v260 = vpack.c.bf16 %v206, %v206
  %v261 = vpack.c.bf16 %v208, %v208
  %v263 = vshrl.u32 %v246, 16
  %v265 = vrot.slane %v263, 7
  %v266 = vshll.u32 %v246, 16
  %v268 = vor.u32 %v265, %v266
  %v269 = vrot.slane %v265, 4
  %v271 = vshrl.u32 %v247, 16
  %v273 = vrot.slane %v271, 7
  %v274 = vshll.u32 %v247, 16
  %v276 = vor.u32 %v273, %v274
  %v277 = vrot.slane %v273, 4
  %v279 = vshrl.u32 %v248, 16
  %v281 = vrot.slane %v279, 7
  %v282 = vshll.u32 %v248, 16
  %v284 = vor.u32 %v281, %v282
  %v285 = vrot.slane %v281, 4
  %v287 = vshrl.u32 %v249, 16
  %v289 = vrot.slane %v287, 7
  %v290 = vshll.u32 %v249, 16
  %v292 = vor.u32 %v289, %v290
  %v293 = vrot.slane %v289, 4
  %v295 = vshrl.u32 %v250, 16
  %v297 = vrot.slane %v295, 7
  %v298 = vshll.u32 %v250, 16
  %v300 = vor.u32 %v297, %v298
  %v301 = vrot.slane %v297, 4
  %v303 = vshrl.u32 %v251, 16
  %v305 = vrot.slane %v303, 7
  %v306 = vshll.u32 %v251, 16
  %v308 = vor.u32 %v305, %v306
  %v309 = vrot.slane %v305, 4
  %v311 = vshrl.u32 %v252, 16
  %v313 = vrot.slane %v311, 7
  %v314 = vshll.u32 %v252, 16
  %v316 = vor.u32 %v313, %v314
  %v317 = vrot.slane %v313, 4
  %v319 = vshrl.u32 %v253, 16
  %v321 = vrot.slane %v319, 7
  %v322 = vshll.u32 %v253, 16
  %v324 = vor.u32 %v321, %v322
  %v325 = vrot.slane %v321, 4
  %v327 = vshrl.u32 %v254, 16
  %v329 = vrot.slane %v327, 7
  %v330 = vshll.u32 %v254, 16
  %v332 = vor.u32 %v329, %v330
  %v333 = vrot.slane %v329, 4
  %v335 = vshrl.u32 %v255, 16
  %v337 = vrot.slane %v335, 7
  %v338 = vshll.u32 %v255, 16
  %v340 = vor.u32 %v337, %v338
  %v341 = vrot.slane %v337, 4
  %v343 = vshrl.u32 %v256, 16
  %v345 = vrot.slane %v343, 7
  %v346 = vshll.u32 %v256, 16
  %v348 = vor.u32 %v345, %v346
  %v349 = vrot.slane %v345, 4
  %v351 = vshrl.u32 %v257, 16
  %v353 = vrot.slane %v351, 7
  %v354 = vshll.u32 %v257, 16
  %v356 = vor.u32 %v353, %v354
  %v357 = vrot.slane %v353, 4
  %v359 = vshrl.u32 %v258, 16
  %v361 = vrot.slane %v359, 7
  %v362 = vshll.u32 %v258, 16
  %v364 = vor.u32 %v361, %v362
  %v365 = vrot.slane %v361, 4
  %v367 = vshrl.u32 %v259, 16
  %v369 = vrot.slane %v367, 7
  %v370 = vshll.u32 %v259, 16
  %v372 = vor.u32 %v369, %v370
  %v373 = vrot.slane %v369, 4
  %v375 = vshrl.u32 %v260, 16
  %v377 = vrot.slane %v375, 7
  %v378 = vshll.u32 %v260, 16
  %v380 = vor.u32 %v377, %v378
  %v381 = vrot.slane %v377, 4
  %v383 = vshrl.u32 %v261, 16
  %v385 = vrot.slane %v383, 7
  %v386 = vshll.u32 %v261, 16
  %v388 = vor.u32 %v385, %v386
  %v389 = vrot.slane %v385, 4
  %s422 = scalar_lea.vmem [#allocation2], 8
  %vm423 = vcmask 257024
  %vm424 = vsmask.f32 7938
  %vm425 = vmand %vm423, %vm424
  %v426 = vld [vmem:[%s422] sm:$0xf]
  %v427 = vsel %vm425, %v268, %v426
  %428 = vst [vmem:[%s422] sm:$0xf] %v427
  %vm429 = vcmask 253952
  %vm430 = vsmask.f32 256
  %vm431 = vmand %vm429, %vm430
  %v432 = vld [vmem:[%s422 + $0x4] sm:$0x1]
  %v433 = vsel %vm431, %v269, %v432
  %434 = vst [vmem:[%s422 + $0x4] sm:$0x1] %v433
  %v435 = vld [vmem:[%s422 + $0x8] sm:$0xf]
  %v436 = vsel %vm425, %v276, %v435
  %437 = vst [vmem:[%s422 + $0x8] sm:$0xf] %v436
  %v438 = vld [vmem:[%s422 + $0xc] sm:$0x1]
  %v439 = vsel %vm431, %v277, %v438
  %440 = vst [vmem:[%s422 + $0xc] sm:$0x1] %v439
  %v441 = vld [vmem:[%s422 + $0x10] sm:$0xf]
  %v442 = vsel %vm425, %v284, %v441
  %443 = vst [vmem:[%s422 + $0x10] sm:$0xf] %v442
  %v444 = vld [vmem:[%s422 + $0x14] sm:$0x1]
  %v445 = vsel %vm431, %v285, %v444
  %446 = vst [vmem:[%s422 + $0x14] sm:$0x1] %v445
  %v447 = vld [vmem:[%s422 + $0x18] sm:$0xf]
  %v448 = vsel %vm425, %v292, %v447
  %449 = vst [vmem:[%s422 + $0x18] sm:$0xf] %v448
  %v450 = vld [vmem:[%s422 + $0x1c] sm:$0x1]
  %v451 = vsel %vm431, %v293, %v450
  %452 = vst [vmem:[%s422 + $0x1c] sm:$0x1] %v451
  %v453 = vld [vmem:[%s422 + $0x20] sm:$0xf]
  %v454 = vsel %vm425, %v300, %v453
  %455 = vst [vmem:[%s422 + $0x20] sm:$0xf] %v454
  %v456 = vld [vmem:[%s422 + $0x24] sm:$0x1]
  %v457 = vsel %vm431, %v301, %v456
  %458 = vst [vmem:[%s422 + $0x24] sm:$0x1] %v457
  %v459 = vld [vmem:[%s422 + $0x28] sm:$0xf]
  %v460 = vsel %vm425, %v308, %v459
  %461 = vst [vmem:[%s422 + $0x28] sm:$0xf] %v460
  %v462 = vld [vmem:[%s422 + $0x2c] sm:$0x1]
  %v463 = vsel %vm431, %v309, %v462
  %464 = vst [vmem:[%s422 + $0x2c] sm:$0x1] %v463
  %v465 = vld [vmem:[%s422 + $0x30] sm:$0xf]
  %v466 = vsel %vm425, %v316, %v465
  %467 = vst [vmem:[%s422 + $0x30] sm:$0xf] %v466
  %v468 = vld [vmem:[%s422 + $0x34] sm:$0x1]
  %v469 = vsel %vm431, %v317, %v468
  %470 = vst [vmem:[%s422 + $0x34] sm:$0x1] %v469
  %v471 = vld [vmem:[%s422 + $0x38] sm:$0xf]
  %v472 = vsel %vm425, %v324, %v471
  %473 = vst [vmem:[%s422 + $0x38] sm:$0xf] %v472
  %v474 = vld [vmem:[%s422 + $0x3c] sm:$0x1]
  %v475 = vsel %vm431, %v325, %v474
  %476 = vst [vmem:[%s422 + $0x3c] sm:$0x1] %v475
  %v477 = vld [vmem:[%s422 + $0x50] sm:$0xf]
  %v478 = vsel %vm425, %v332, %v477
  %479 = vst [vmem:[%s422 + $0x50] sm:$0xf] %v478
  %v480 = vld [vmem:[%s422 + $0x54] sm:$0x1]
  %v481 = vsel %vm431, %v333, %v480
  %482 = vst [vmem:[%s422 + $0x54] sm:$0x1] %v481
  %v483 = vld [vmem:[%s422 + $0x58] sm:$0xf]
  %v484 = vsel %vm425, %v340, %v483
  %485 = vst [vmem:[%s422 + $0x58] sm:$0xf] %v484
  %v486 = vld [vmem:[%s422 + $0x5c] sm:$0x1]
  %v487 = vsel %vm431, %v341, %v486
  %488 = vst [vmem:[%s422 + $0x5c] sm:$0x1] %v487
  %v489 = vld [vmem:[%s422 + $0x60] sm:$0xf]
  %v490 = vsel %vm425, %v348, %v489
  %491 = vst [vmem:[%s422 + $0x60] sm:$0xf] %v490
  %v492 = vld [vmem:[%s422 + $0x64] sm:$0x1]
  %v493 = vsel %vm431, %v349, %v492
  %494 = vst [vmem:[%s422 + $0x64] sm:$0x1] %v493
  %v495 = vld [vmem:[%s422 + $0x68] sm:$0xf]
  %v496 = vsel %vm425, %v356, %v495
  %497 = vst [vmem:[%s422 + $0x68] sm:$0xf] %v496
  %v498 = vld [vmem:[%s422 + $0x6c] sm:$0x1]
  %v499 = vsel %vm431, %v357, %v498
  %500 = vst [vmem:[%s422 + $0x6c] sm:$0x1] %v499
  %v501 = vld [vmem:[%s422 + $0x70] sm:$0xf]
  %v502 = vsel %vm425, %v364, %v501
  %503 = vst [vmem:[%s422 + $0x70] sm:$0xf] %v502
  %v504 = vld [vmem:[%s422 + $0x74] sm:$0x1]
  %v505 = vsel %vm431, %v365, %v504
  %506 = vst [vmem:[%s422 + $0x74] sm:$0x1] %v505
  %v507 = vld [vmem:[%s422 + $0x78] sm:$0xf]
  %v508 = vsel %vm425, %v372, %v507
  %509 = vst [vmem:[%s422 + $0x78] sm:$0xf] %v508
  %v510 = vld [vmem:[%s422 + $0x7c] sm:$0x1]
  %v511 = vsel %vm431, %v373, %v510
  %512 = vst [vmem:[%s422 + $0x7c] sm:$0x1] %v511
  %v513 = vld [vmem:[%s422 + $0x80] sm:$0xf]
  %v514 = vsel %vm425, %v380, %v513
  %515 = vst [vmem:[%s422 + $0x80] sm:$0xf] %v514
  %v516 = vld [vmem:[%s422 + $0x84] sm:$0x1]
  %v517 = vsel %vm431, %v381, %v516
  %518 = vst [vmem:[%s422 + $0x84] sm:$0x1] %v517
  %v519 = vld [vmem:[%s422 + $0x88] sm:$0xf]
  %v520 = vsel %vm425, %v388, %v519
  %521 = vst [vmem:[%s422 + $0x88] sm:$0xf] %v520
  %v522 = vld [vmem:[%s422 + $0x8c] sm:$0x1]
  %v523 = vsel %vm431, %v389, %v522
  %524 = vst [vmem:[%s422 + $0x8c] sm:$0x1] %v523
  %vm525 = vcmask 257024
  %526 = vst.msk [vmem:[#allocation2] sm:$0xf] %vm525, 0
  %vm527 = vcmask 253952
  %528 = vst.msk [vmem:[#allocation2 + $0x4] sm:$0x1] %vm527, 0
  %529 = vst.msk [vmem:[#allocation2 + $0x50] sm:$0xf] %vm525, 0
  %530 = vst.msk [vmem:[#allocation2 + $0x54] sm:$0x1] %vm527, 0
  %s531 = scalar_lea.vmem [#allocation2], 72
  %532 = vst.msk [vmem:[%s531] sm:$0xf] %vm525, 0
  %533 = vst.msk [vmem:[%s531 + $0x4] sm:$0x1] %vm527, 0
  %534 = vst.msk [vmem:[%s531 + $0x50] sm:$0xf] %vm525, 0
  %535 = vst.msk [vmem:[%s531 + $0x54] sm:$0x1] %vm527, 0
  %v536 = vld [vmem:[#allocation2] sm:$0x1]
  %v537 = vsel %vm431, 0, %v536
  %538 = vst [vmem:[#allocation2] sm:$0x1] %v537
  %v539 = vld [vmem:[#allocation2 + $0x8] sm:$0x1]
  %v540 = vsel %vm431, 0, %v539
  %541 = vst [vmem:[#allocation2 + $0x8] sm:$0x1] %v540
  %v542 = vld [vmem:[#allocation2 + $0x10] sm:$0x1]
  %v543 = vsel %vm431, 0, %v542
  %544 = vst [vmem:[#allocation2 + $0x10] sm:$0x1] %v543
  %v545 = vld [vmem:[#allocation2 + $0x18] sm:$0x1]
  %v546 = vsel %vm431, 0, %v545
  %547 = vst [vmem:[#allocation2 + $0x18] sm:$0x1] %v546
  %v548 = vld [vmem:[#allocation2 + $0x20] sm:$0x1]
  %v549 = vsel %vm431, 0, %v548
  %550 = vst [vmem:[#allocation2 + $0x20] sm:$0x1] %v549
  %v551 = vld [vmem:[#allocation2 + $0x28] sm:$0x1]
  %v552 = vsel %vm431, 0, %v551
  %553 = vst [vmem:[#allocation2 + $0x28] sm:$0x1] %v552
  %v554 = vld [vmem:[#allocation2 + $0x30] sm:$0x1]
  %v555 = vsel %vm431, 0, %v554
  %556 = vst [vmem:[#allocation2 + $0x30] sm:$0x1] %v555
  %v557 = vld [vmem:[#allocation2 + $0x38] sm:$0x1]
  %v558 = vsel %vm431, 0, %v557
  %559 = vst [vmem:[#allocation2 + $0x38] sm:$0x1] %v558
  %v560 = vld [vmem:[#allocation2 + $0x40] sm:$0x1]
  %v561 = vsel %vm431, 0, %v560
  %562 = vst [vmem:[#allocation2 + $0x40] sm:$0x1] %v561
  %v563 = vld [vmem:[#allocation2 + $0x48] sm:$0x1]
  %v564 = vsel %vm431, 0, %v563
  %565 = vst [vmem:[#allocation2 + $0x48] sm:$0x1] %v564
  %v566 = vld [vmem:[#allocation2 + $0x50] sm:$0x1]
  %v567 = vsel %vm431, 0, %v566
  %568 = vst [vmem:[#allocation2 + $0x50] sm:$0x1] %v567
  %v569 = vld [vmem:[#allocation2 + $0x58] sm:$0x1]
  %v570 = vsel %vm431, 0, %v569
  %571 = vst [vmem:[#allocation2 + $0x58] sm:$0x1] %v570
  %v572 = vld [vmem:[#allocation2 + $0x60] sm:$0x1]
  %v573 = vsel %vm431, 0, %v572
  %574 = vst [vmem:[#allocation2 + $0x60] sm:$0x1] %v573
  %v575 = vld [vmem:[#allocation2 + $0x68] sm:$0x1]
  %v576 = vsel %vm431, 0, %v575
  %577 = vst [vmem:[#allocation2 + $0x68] sm:$0x1] %v576
  %v578 = vld [vmem:[#allocation2 + $0x70] sm:$0x1]
  %v579 = vsel %vm431, 0, %v578
  %580 = vst [vmem:[#allocation2 + $0x70] sm:$0x1] %v579
  %v581 = vld [vmem:[#allocation2 + $0x78] sm:$0x1]
  %v582 = vsel %vm431, 0, %v581
  %583 = vst [vmem:[#allocation2 + $0x78] sm:$0x1] %v582
  %v584 = vld [vmem:[#allocation2 + $0x80] sm:$0x1]
  %v585 = vsel %vm431, 0, %v584
  %586 = vst [vmem:[#allocation2 + $0x80] sm:$0x1] %v585
  %v587 = vld [vmem:[#allocation2 + $0x88] sm:$0x1]
  %v588 = vsel %vm431, 0, %v587
  %589 = vst [vmem:[#allocation2 + $0x88] sm:$0x1] %v588
  %v590 = vld [vmem:[#allocation2 + $0x90] sm:$0x1]
  %v591 = vsel %vm431, 0, %v590
  %592 = vst [vmem:[#allocation2 + $0x90] sm:$0x1] %v591
  %v593 = vld [vmem:[#allocation2 + $0x98] sm:$0x1]
  %v594 = vsel %vm431, 0, %v593
  %595 = vst [vmem:[#allocation2 + $0x98] sm:$0x1] %v594
  %vm596 = vmand %vm429, %vm424
  %v597 = vld [vmem:[#allocation2 + $0x4] sm:$0x1]
  %v598 = vsel %vm596, 0, %v597
  %599 = vst [vmem:[#allocation2 + $0x4] sm:$0x1] %v598
  %v600 = vld [vmem:[#allocation2 + $0xc] sm:$0x1]
  %v601 = vsel %vm596, 0, %v600
  %602 = vst [vmem:[#allocation2 + $0xc] sm:$0x1] %v601
  %v603 = vld [vmem:[#allocation2 + $0x14] sm:$0x1]
  %v604 = vsel %vm596, 0, %v603
  %605 = vst [vmem:[#allocation2 + $0x14] sm:$0x1] %v604
  %v606 = vld [vmem:[#allocation2 + $0x1c] sm:$0x1]
  %v607 = vsel %vm596, 0, %v606
  %608 = vst [vmem:[#allocation2 + $0x1c] sm:$0x1] %v607
  %v609 = vld [vmem:[#allocation2 + $0x24] sm:$0x1]
  %v610 = vsel %vm596, 0, %v609
  %611 = vst [vmem:[#allocation2 + $0x24] sm:$0x1] %v610
  %v612 = vld [vmem:[#allocation2 + $0x2c] sm:$0x1]
  %v613 = vsel %vm596, 0, %v612
  %614 = vst [vmem:[#allocation2 + $0x2c] sm:$0x1] %v613
  %v615 = vld [vmem:[#allocation2 + $0x34] sm:$0x1]
  %v616 = vsel %vm596, 0, %v615
  %617 = vst [vmem:[#allocation2 + $0x34] sm:$0x1] %v616
  %v618 = vld [vmem:[#allocation2 + $0x3c] sm:$0x1]
  %v619 = vsel %vm596, 0, %v618
  %620 = vst [vmem:[#allocation2 + $0x3c] sm:$0x1] %v619
  %v621 = vld [vmem:[#allocation2 + $0x44] sm:$0x1]
  %v622 = vsel %vm596, 0, %v621
  %623 = vst [vmem:[#allocation2 + $0x44] sm:$0x1] %v622
  %v624 = vld [vmem:[#allocation2 + $0x4c] sm:$0x1]
  %v625 = vsel %vm596, 0, %v624
  %626 = vst [vmem:[#allocation2 + $0x4c] sm:$0x1] %v625
  %v627 = vld [vmem:[#allocation2 + $0x54] sm:$0x1]
  %v628 = vsel %vm596, 0, %v627
  %629 = vst [vmem:[#allocation2 + $0x54] sm:$0x1] %v628
  %v630 = vld [vmem:[#allocation2 + $0x5c] sm:$0x1]
  %v631 = vsel %vm596, 0, %v630
  %632 = vst [vmem:[#allocation2 + $0x5c] sm:$0x1] %v631
  %v633 = vld [vmem:[#allocation2 + $0x64] sm:$0x1]
  %v634 = vsel %vm596, 0, %v633
  %635 = vst [vmem:[#allocation2 + $0x64] sm:$0x1] %v634
  %v636 = vld [vmem:[#allocation2 + $0x6c] sm:$0x1]
  %v637 = vsel %vm596, 0, %v636
  %638 = vst [vmem:[#allocation2 + $0x6c] sm:$0x1] %v637
  %v639 = vld [vmem:[#allocation2 + $0x74] sm:$0x1]
  %v640 = vsel %vm596, 0, %v639
  %641 = vst [vmem:[#allocation2 + $0x74] sm:$0x1] %v640
  %v642 = vld [vmem:[#allocation2 + $0x7c] sm:$0x1]
  %v643 = vsel %vm596, 0, %v642
  %644 = vst [vmem:[#allocation2 + $0x7c] sm:$0x1] %v643
  %v645 = vld [vmem:[#allocation2 + $0x84] sm:$0x1]
  %v646 = vsel %vm596, 0, %v645
  %647 = vst [vmem:[#allocation2 + $0x84] sm:$0x1] %v646
  %v648 = vld [vmem:[#allocation2 + $0x8c] sm:$0x1]
  %v649 = vsel %vm596, 0, %v648
  %650 = vst [vmem:[#allocation2 + $0x8c] sm:$0x1] %v649
  %v651 = vld [vmem:[#allocation2 + $0x94] sm:$0x1]
  %v652 = vsel %vm596, 0, %v651
  %653 = vst [vmem:[#allocation2 + $0x94] sm:$0x1] %v652
  %v654 = vld [vmem:[#allocation2 + $0x9c] sm:$0x1]
  %v655 = vsel %vm596, 0, %v654
  %656 = vst [vmem:[#allocation2 + $0x9c] sm:$0x1] %v655
  %v657 = vld [vmem:[#allocation2] sm:$0xf]
  %v658 = vld [vmem:[#allocation2 + $0x8] sm:$0xf]
  %v659 = vld [vmem:[#allocation2 + $0x10] sm:$0xf]
  %v660 = vld [vmem:[#allocation2 + $0x18] sm:$0xf]
  %v661 = vld [vmem:[#allocation2 + $0x20] sm:$0xf]
  %v662 = vld [vmem:[#allocation2 + $0x28] sm:$0xf]
  %v663 = vld [vmem:[#allocation2 + $0x30] sm:$0xf]
  %v664 = vld [vmem:[#allocation2 + $0x38] sm:$0xf]
  %v665 = vld [vmem:[#allocation2 + $0x50] sm:$0xf]
  %v666 = vld [vmem:[#allocation2 + $0x58] sm:$0xf]
  %v667 = vld [vmem:[#allocation2 + $0x60] sm:$0xf]
  %v668 = vld [vmem:[#allocation2 + $0x68] sm:$0xf]
  %v669 = vld [vmem:[#allocation2 + $0x70] sm:$0xf]
  %v670 = vld [vmem:[#allocation2 + $0x78] sm:$0xf]
  %v671 = vld [vmem:[#allocation2 + $0x80] sm:$0xf]
  %v672 = vld [vmem:[#allocation2 + $0x88] sm:$0xf]
  %v673 = vld [vmem:[%s3] sm:$0xf]
  %v674 = vld [vmem:[%s3 + $0x4] sm:$0xf]
  %v675 = vld [vmem:[%s3 + $0x8] sm:$0xf]
  %v676 = vld [vmem:[%s3 + $0xc] sm:$0xf]
  %v677 = vld [vmem:[#allocation2 + $0x4] sm:$0x1]
  %v678 = vld [vmem:[#allocation2 + $0xc] sm:$0x1]
  %v679 = vld [vmem:[#allocation2 + $0x14] sm:$0x1]
  %v680 = vld [vmem:[#allocation2 + $0x1c] sm:$0x1]
  %v681 = vld [vmem:[#allocation2 + $0x24] sm:$0x1]
  %v682 = vld [vmem:[#allocation2 + $0x2c] sm:$0x1]
  %v683 = vld [vmem:[#allocation2 + $0x34] sm:$0x1]
  %v684 = vld [vmem:[#allocation2 + $0x3c] sm:$0x1]
  %v685 = vld [vmem:[#allocation2 + $0x54] sm:$0x1]
  %v686 = vld [vmem:[#allocation2 + $0x5c] sm:$0x1]
  %v687 = vld [vmem:[#allocation2 + $0x64] sm:$0x1]
  %v688 = vld [vmem:[#allocation2 + $0x6c] sm:$0x1]
  %v689 = vld [vmem:[#allocation2 + $0x74] sm:$0x1]
  %v690 = vld [vmem:[#allocation2 + $0x7c] sm:$0x1]
  %v691 = vld [vmem:[#allocation2 + $0x84] sm:$0x1]
  %v692 = vld [vmem:[#allocation2 + $0x8c] sm:$0x1]
  %vm693 = vsmask.f32 3328
  %vm694 = vsmask.f32 7440
  %vm695 = vmor %vm693, %vm694
  %v697 = vshrl.u32 %v657, 16
  %v699 = vrot.slane %v697, 4
  %v700 = vshll.u32 %v657, 16
  %v702 = vrot.slane %v700, 5
  %v703 = vor.u32 %v699, %v702
  %v704 = vrot.slane %v703, 4
  %v706 = vshll.u32 %v677, 16
  %v708 = vrot.slane %v706, 5
  %v709 = vsel %vm695, %v704, %v708
  %v711 = vshrl.u32 %v658, 16
  %v713 = vrot.slane %v711, 4
  %v714 = vshll.u32 %v658, 16
  %v716 = vrot.slane %v714, 5
  %v717 = vor.u32 %v713, %v716
  %v718 = vrot.slane %v717, 4
  %v720 = vshll.u32 %v678, 16
  %v722 = vrot.slane %v720, 5
  %v723 = vsel %vm695, %v718, %v722
  %v725 = vshrl.u32 %v659, 16
  %v727 = vrot.slane %v725, 4
  %v728 = vshll.u32 %v659, 16
  %v730 = vrot.slane %v728, 5
  %v731 = vor.u32 %v727, %v730
  %v732 = vrot.slane %v731, 4
  %v734 = vshll.u32 %v679, 16
  %v736 = vrot.slane %v734, 5
  %v737 = vsel %vm695, %v732, %v736
  %v739 = vshrl.u32 %v660, 16
  %v741 = vrot.slane %v739, 4
  %v742 = vshll.u32 %v660, 16
  %v744 = vrot.slane %v742, 5
  %v745 = vor.u32 %v741, %v744
  %v746 = vrot.slane %v745, 4
  %v748 = vshll.u32 %v680, 16
  %v750 = vrot.slane %v748, 5
  %v751 = vsel %vm695, %v746, %v750
  %v753 = vshrl.u32 %v661, 16
  %v755 = vrot.slane %v753, 4
  %v756 = vshll.u32 %v661, 16
  %v758 = vrot.slane %v756, 5
  %v759 = vor.u32 %v755, %v758
  %v760 = vrot.slane %v759, 4
  %v762 = vshll.u32 %v681, 16
  %v764 = vrot.slane %v762, 5
  %v765 = vsel %vm695, %v760, %v764
  %v767 = vshrl.u32 %v662, 16
  %v769 = vrot.slane %v767, 4
  %v770 = vshll.u32 %v662, 16
  %v772 = vrot.slane %v770, 5
  %v773 = vor.u32 %v769, %v772
  %v774 = vrot.slane %v773, 4
  %v776 = vshll.u32 %v682, 16
  %v778 = vrot.slane %v776, 5
  %v779 = vsel %vm695, %v774, %v778
  %v781 = vshrl.u32 %v663, 16
  %v783 = vrot.slane %v781, 4
  %v784 = vshll.u32 %v663, 16
  %v786 = vrot.slane %v784, 5
  %v787 = vor.u32 %v783, %v786
  %v788 = vrot.slane %v787, 4
  %v790 = vshll.u32 %v683, 16
  %v792 = vrot.slane %v790, 5
  %v793 = vsel %vm695, %v788, %v792
  %v795 = vshrl.u32 %v664, 16
  %v797 = vrot.slane %v795, 4
  %v798 = vshll.u32 %v664, 16
  %v800 = vrot.slane %v798, 5
  %v801 = vor.u32 %v797, %v800
  %v802 = vrot.slane %v801, 4
  %v804 = vshll.u32 %v684, 16
  %v806 = vrot.slane %v804, 5
  %v807 = vsel %vm695, %v802, %v806
  %v809 = vshrl.u32 %v665, 16
  %v811 = vrot.slane %v809, 4
  %v812 = vshll.u32 %v665, 16
  %v814 = vrot.slane %v812, 5
  %v815 = vor.u32 %v811, %v814
  %v816 = vrot.slane %v815, 4
  %v818 = vshll.u32 %v685, 16
  %v820 = vrot.slane %v818, 5
  %v821 = vsel %vm695, %v816, %v820
  %v823 = vshrl.u32 %v666, 16
  %v825 = vrot.slane %v823, 4
  %v826 = vshll.u32 %v666, 16
  %v828 = vrot.slane %v826, 5
  %v829 = vor.u32 %v825, %v828
  %v830 = vrot.slane %v829, 4
  %v832 = vshll.u32 %v686, 16
  %v834 = vrot.slane %v832, 5
  %v835 = vsel %vm695, %v830, %v834
  %v837 = vshrl.u32 %v667, 16
  %v839 = vrot.slane %v837, 4
  %v840 = vshll.u32 %v667, 16
  %v842 = vrot.slane %v840, 5
  %v843 = vor.u32 %v839, %v842
  %v844 = vrot.slane %v843, 4
  %v846 = vshll.u32 %v687, 16
  %v848 = vrot.slane %v846, 5
  %v849 = vsel %vm695, %v844, %v848
  %v851 = vshrl.u32 %v668, 16
  %v853 = vrot.slane %v851, 4
  %v854 = vshll.u32 %v668, 16
  %v856 = vrot.slane %v854, 5
  %v857 = vor.u32 %v853, %v856
  %v858 = vrot.slane %v857, 4
  %v860 = vshll.u32 %v688, 16
  %v862 = vrot.slane %v860, 5
  %v863 = vsel %vm695, %v858, %v862
  %v865 = vshrl.u32 %v669, 16
  %v867 = vrot.slane %v865, 4
  %v868 = vshll.u32 %v669, 16
  %v870 = vrot.slane %v868, 5
  %v871 = vor.u32 %v867, %v870
  %v872 = vrot.slane %v871, 4
  %v874 = vshll.u32 %v689, 16
  %v876 = vrot.slane %v874, 5
  %v877 = vsel %vm695, %v872, %v876
  %v879 = vshrl.u32 %v670, 16
  %v881 = vrot.slane %v879, 4
  %v882 = vshll.u32 %v670, 16
  %v884 = vrot.slane %v882, 5
  %v885 = vor.u32 %v881, %v884
  %v886 = vrot.slane %v885, 4
  %v888 = vshll.u32 %v690, 16
  %v890 = vrot.slane %v888, 5
  %v891 = vsel %vm695, %v886, %v890
  %v893 = vshrl.u32 %v671, 16
  %v895 = vrot.slane %v893, 4
  %v896 = vshll.u32 %v671, 16
  %v898 = vrot.slane %v896, 5
  %v899 = vor.u32 %v895, %v898
  %v900 = vrot.slane %v899, 4
  %v902 = vshll.u32 %v691, 16
  %v904 = vrot.slane %v902, 5
  %v905 = vsel %vm695, %v900, %v904
  %v907 = vshrl.u32 %v672, 16
  %v909 = vrot.slane %v907, 4
  %v910 = vshll.u32 %v672, 16
  %v912 = vrot.slane %v910, 5
  %v913 = vor.u32 %v909, %v912
  %v914 = vrot.slane %v913, 4
  %v916 = vshll.u32 %v692, 16
  %v918 = vrot.slane %v916, 5
  %v919 = vsel %vm695, %v914, %v918
  %s920 = scalar_lea.vmem %s3, 16
  %v921 = vld [vmem:[%s920] sm:$0xf]
  %v922 = vld [vmem:[%s920 + $0x4] sm:$0xf]
  %v923 = vld [vmem:[%s920 + $0x8] sm:$0xf]
  %v924 = vld [vmem:[%s920 + $0xc] sm:$0xf]
  %v925 = vunpack.c.l.b16 %v709
  %v926 = vunpack.c.l.b16 %v723
  %v927 = vunpack.c.l.b16 %v737
  %v928 = vunpack.c.l.b16 %v751
  %v929 = vunpack.c.l.b16 %v765
  %v930 = vunpack.c.l.b16 %v779
  %v931 = vunpack.c.l.b16 %v793
  %v932 = vunpack.c.l.b16 %v807
  %v933 = vunpack.c.l.b16 %v821
  %v934 = vunpack.c.l.b16 %v835
  %v935 = vunpack.c.l.b16 %v849
  %v936 = vunpack.c.l.b16 %v863
  %v937 = vunpack.c.l.b16 %v877
  %v938 = vunpack.c.l.b16 %v891
  %v939 = vunpack.c.l.b16 %v905
  %v940 = vunpack.c.l.b16 %v919
  %v941 = vpack.c.b16 %v926, %v925
  %v942 = vpack.c.b16 %v928, %v927
  %v943 = vpack.c.b16 %v930, %v929
  %v944 = vpack.c.b16 %v932, %v931
  %v945 = vpack.c.b16 %v934, %v933
  %v946 = vpack.c.b16 %v936, %v935
  %v947 = vpack.c.b16 %v938, %v937
  %v948 = vpack.c.b16 %v940, %v939
  %v953 = vunpack.c.l.b16 %v921
  %v954 = vunpack.c.l.b16 %v922
  %v955 = vunpack.c.l.b16 %v923
  %v956 = vunpack.c.l.b16 %v924
  %v957 = vpack.c.b16 %v954, %v953
  %v958 = vpack.c.b16 %v956, %v955
  %vm961 = vcmask 261120
  %v963 = vsel %vm961, %v941, 0
  %v966 = vsel %vm961, %v942, 0
  %v969 = vsel %vm961, %v943, 0
  %v972 = vsel %vm961, %v944, 0
  %v975 = vsel %vm961, %v945, 0
  %v978 = vsel %vm961, %v946, 0
  %v981 = vsel %vm961, %v947, 0
  %v984 = vsel %vm961, %v948, 0
  %986 = vmatpush.bf16.msra.mxu0 0
  %987 = vmatpush.bf16.msra.mxu0 0
  %988 = vmatpush.bf16.msra.mxu0 0
  %989 = vmatpush.bf16.msra.mxu0 0
  %990 = vmatpush.bf16.msra.mxu0 0
  %991 = vmatpush.bf16.msra.mxu0 0
  %992 = vmatpush.bf16.msra.mxu0 %v958
  %993 = vmatpush.bf16.msra.mxu0 %v957
  %994 = vmatmul.bf16.gmra.mxu0 %v963
  %v995 = vpop.f32.mrf.mxu0
  %v996 = vadd.f32 0.0, %v995
  %v997 = vpop.f32.mrf.mxu0
  %v998 = vadd.f32 0.0, %v997
  %999 = vmatmul.bf16.gmra.mxu0 %v966
  %v1000 = vpop.f32.mrf.mxu0
  %v1001 = vadd.f32 0.0, %v1000
  %v1002 = vpop.f32.mrf.mxu0
  %v1003 = vadd.f32 0.0, %v1002
  %1004 = vmatmul.bf16.gmra.mxu0 %v969
  %v1005 = vpop.f32.mrf.mxu0
  %v1006 = vadd.f32 0.0, %v1005
  %v1007 = vpop.f32.mrf.mxu0
  %v1008 = vadd.f32 0.0, %v1007
  %1009 = vmatmul.bf16.gmra.mxu0 %v972
  %v1010 = vpop.f32.mrf.mxu0
  %v1011 = vadd.f32 0.0, %v1010
  %v1012 = vpop.f32.mrf.mxu0
  %v1013 = vadd.f32 0.0, %v1012
  %1014 = vmatmul.bf16.gmra.mxu0 %v975
  %v1015 = vpop.f32.mrf.mxu0
  %v1016 = vadd.f32 0.0, %v1015
  %v1017 = vpop.f32.mrf.mxu0
  %v1018 = vadd.f32 0.0, %v1017
  %1019 = vmatmul.bf16.gmra.mxu0 %v978
  %v1020 = vpop.f32.mrf.mxu0
  %v1021 = vadd.f32 0.0, %v1020
  %v1022 = vpop.f32.mrf.mxu0
  %v1023 = vadd.f32 0.0, %v1022
  %1024 = vmatmul.bf16.gmra.mxu0 %v981
  %v1025 = vpop.f32.mrf.mxu0
  %v1026 = vadd.f32 0.0, %v1025
  %v1027 = vpop.f32.mrf.mxu0
  %v1028 = vadd.f32 0.0, %v1027
  %1029 = vmatmul.bf16.gmra.mxu0 %v984
  %v1030 = vpop.f32.mrf.mxu0
  %v1031 = vadd.f32 0.0, %v1030
  %v1032 = vpop.f32.mrf.mxu0
  %v1033 = vadd.f32 0.0, %v1032
  %1034 = vdwg.mxu0
  %v1051 = vunpack.c.l.b16 %v657
  %v1052 = vunpack.c.l.b16 %v658
  %v1053 = vunpack.c.l.b16 %v659
  %v1054 = vunpack.c.l.b16 %v660
  %v1055 = vunpack.c.l.b16 %v661
  %v1056 = vunpack.c.l.b16 %v662
  %v1057 = vunpack.c.l.b16 %v663
  %v1058 = vunpack.c.l.b16 %v664
  %v1059 = vunpack.c.l.b16 %v665
  %v1060 = vunpack.c.l.b16 %v666
  %v1061 = vunpack.c.l.b16 %v667
  %v1062 = vunpack.c.l.b16 %v668
  %v1063 = vunpack.c.l.b16 %v669
  %v1064 = vunpack.c.l.b16 %v670
  %v1065 = vunpack.c.l.b16 %v671
  %v1066 = vunpack.c.l.b16 %v672
  %v1067 = vpack.c.b16 %v1052, %v1051
  %v1068 = vpack.c.b16 %v1054, %v1053
  %v1069 = vpack.c.b16 %v1056, %v1055
  %v1070 = vpack.c.b16 %v1058, %v1057
  %v1071 = vpack.c.b16 %v1060, %v1059
  %v1072 = vpack.c.b16 %v1062, %v1061
  %v1073 = vpack.c.b16 %v1064, %v1063
  %v1074 = vpack.c.b16 %v1066, %v1065
  %v1079 = vunpack.c.l.b16 %v673
  %v1080 = vunpack.c.l.b16 %v674
  %v1081 = vunpack.c.l.b16 %v675
  %v1082 = vunpack.c.l.b16 %v676
  %v1083 = vpack.c.b16 %v1080, %v1079
  %v1084 = vpack.c.b16 %v1082, %v1081
  %v1088 = vsel %vm961, %v1067, 0
  %v1091 = vsel %vm961, %v1068, 0
  %v1094 = vsel %vm961, %v1069, 0
  %v1097 = vsel %vm961, %v1070, 0
  %v1100 = vsel %vm961, %v1071, 0
  %v1103 = vsel %vm961, %v1072, 0
  %v1106 = vsel %vm961, %v1073, 0
  %v1109 = vsel %vm961, %v1074, 0
  %1111 = vmatpush.bf16.msra.mxu0 0
  %1112 = vmatpush.bf16.msra.mxu0 0
  %1113 = vmatpush.bf16.msra.mxu0 0
  %1114 = vmatpush.bf16.msra.mxu0 0
  %1115 = vmatpush.bf16.msra.mxu0 0
  %1116 = vmatpush.bf16.msra.mxu0 0
  %1117 = vmatpush.bf16.msra.mxu0 %v1084
  %1118 = vmatpush.bf16.msra.mxu0 %v1083
  %1119 = vmatmul.bf16.gmra.mxu0 %v1088
  %v1120 = vpop.f32.mrf.mxu0
  %v1121 = vadd.f32 %v996, %v1120
  %v1122 = vpop.f32.mrf.mxu0
  %v1123 = vadd.f32 %v998, %v1122
  %1124 = vmatmul.bf16.gmra.mxu0 %v1091
  %v1125 = vpop.f32.mrf.mxu0
  %v1126 = vadd.f32 %v1001, %v1125
  %v1127 = vpop.f32.mrf.mxu0
  %v1128 = vadd.f32 %v1003, %v1127
  %1129 = vmatmul.bf16.gmra.mxu0 %v1094
  %v1130 = vpop.f32.mrf.mxu0
  %v1131 = vadd.f32 %v1006, %v1130
  %v1132 = vpop.f32.mrf.mxu0
  %v1133 = vadd.f32 %v1008, %v1132
  %1134 = vmatmul.bf16.gmra.mxu0 %v1097
  %v1135 = vpop.f32.mrf.mxu0
  %v1136 = vadd.f32 %v1011, %v1135
  %v1137 = vpop.f32.mrf.mxu0
  %v1138 = vadd.f32 %v1013, %v1137
  %1139 = vmatmul.bf16.gmra.mxu0 %v1100
  %v1140 = vpop.f32.mrf.mxu0
  %v1141 = vadd.f32 %v1016, %v1140
  %v1142 = vpop.f32.mrf.mxu0
  %v1143 = vadd.f32 %v1018, %v1142
  %1144 = vmatmul.bf16.gmra.mxu0 %v1103
  %v1145 = vpop.f32.mrf.mxu0
  %v1146 = vadd.f32 %v1021, %v1145
  %v1147 = vpop.f32.mrf.mxu0
  %v1148 = vadd.f32 %v1023, %v1147
  %1149 = vmatmul.bf16.gmra.mxu0 %v1106
  %v1150 = vpop.f32.mrf.mxu0
  %v1151 = vadd.f32 %v1026, %v1150
  %v1152 = vpop.f32.mrf.mxu0
  %v1153 = vadd.f32 %v1028, %v1152
  %1154 = vmatmul.bf16.gmra.mxu0 %v1109
  %v1155 = vpop.f32.mrf.mxu0
  %v1156 = vadd.f32 %v1031, %v1155
  %v1157 = vpop.f32.mrf.mxu0
  %v1158 = vadd.f32 %v1033, %v1157
  %1159 = vdwg.mxu0
  %v1160 = vld [vmem:[#allocation2] sm:$0xe]
  %v1161 = vld [vmem:[#allocation2 + $0x8] sm:$0xe]
  %v1162 = vld [vmem:[#allocation2 + $0x10] sm:$0xe]
  %v1163 = vld [vmem:[#allocation2 + $0x18] sm:$0xe]
  %v1164 = vld [vmem:[#allocation2 + $0x20] sm:$0xe]
  %v1165 = vld [vmem:[#allocation2 + $0x28] sm:$0xe]
  %v1166 = vld [vmem:[#allocation2 + $0x30] sm:$0xe]
  %v1167 = vld [vmem:[#allocation2 + $0x38] sm:$0xe]
  %v1168 = vld [vmem:[#allocation2 + $0x50] sm:$0xe]
  %v1169 = vld [vmem:[#allocation2 + $0x58] sm:$0xe]
  %v1170 = vld [vmem:[#allocation2 + $0x60] sm:$0xe]
  %v1171 = vld [vmem:[#allocation2 + $0x68] sm:$0xe]
  %v1172 = vld [vmem:[#allocation2 + $0x70] sm:$0xe]
  %v1173 = vld [vmem:[#allocation2 + $0x78] sm:$0xe]
  %v1174 = vld [vmem:[#allocation2 + $0x80] sm:$0xe]
  %v1175 = vld [vmem:[#allocation2 + $0x88] sm:$0xe]
  %vm1208 = vcmask 1042432
  %vm1209 = vcmask 1046532
  %vm1210 = vmor %vm1208, %vm1209
  %v1211 = vrot.slane %v1160, 5
  %v1212 = vrot.slane %v1211, 4
  %v1213 = vrot.slane %v677, 5
  %v1214 = vsel %vm1210, %v1212, %v1213
  %v1215 = vrot.slane %v1161, 5
  %v1216 = vrot.slane %v1215, 4
  %v1217 = vrot.slane %v678, 5
  %v1218 = vsel %vm1210, %v1216, %v1217
  %v1219 = vrot.slane %v1162, 5
  %v1220 = vrot.slane %v1219, 4
  %v1221 = vrot.slane %v679, 5
  %v1222 = vsel %vm1210, %v1220, %v1221
  %v1223 = vrot.slane %v1163, 5
  %v1224 = vrot.slane %v1223, 4
  %v1225 = vrot.slane %v680, 5
  %v1226 = vsel %vm1210, %v1224, %v1225
  %v1227 = vrot.slane %v1164, 5
  %v1228 = vrot.slane %v1227, 4
  %v1229 = vrot.slane %v681, 5
  %v1230 = vsel %vm1210, %v1228, %v1229
  %v1231 = vrot.slane %v1165, 5
  %v1232 = vrot.slane %v1231, 4
  %v1233 = vrot.slane %v682, 5
  %v1234 = vsel %vm1210, %v1232, %v1233
  %v1235 = vrot.slane %v1166, 5
  %v1236 = vrot.slane %v1235, 4
  %v1237 = vrot.slane %v683, 5
  %v1238 = vsel %vm1210, %v1236, %v1237
  %v1239 = vrot.slane %v1167, 5
  %v1240 = vrot.slane %v1239, 4
  %v1241 = vrot.slane %v684, 5
  %v1242 = vsel %vm1210, %v1240, %v1241
  %v1243 = vrot.slane %v1168, 5
  %v1244 = vrot.slane %v1243, 4
  %v1245 = vrot.slane %v685, 5
  %v1246 = vsel %vm1210, %v1244, %v1245
  %v1247 = vrot.slane %v1169, 5
  %v1248 = vrot.slane %v1247, 4
  %v1249 = vrot.slane %v686, 5
  %v1250 = vsel %vm1210, %v1248, %v1249
  %v1251 = vrot.slane %v1170, 5
  %v1252 = vrot.slane %v1251, 4
  %v1253 = vrot.slane %v687, 5
  %v1254 = vsel %vm1210, %v1252, %v1253
  %v1255 = vrot.slane %v1171, 5
  %v1256 = vrot.slane %v1255, 4
  %v1257 = vrot.slane %v688, 5
  %v1258 = vsel %vm1210, %v1256, %v1257
  %v1259 = vrot.slane %v1172, 5
  %v1260 = vrot.slane %v1259, 4
  %v1261 = vrot.slane %v689, 5
  %v1262 = vsel %vm1210, %v1260, %v1261
  %v1263 = vrot.slane %v1173, 5
  %v1264 = vrot.slane %v1263, 4
  %v1265 = vrot.slane %v690, 5
  %v1266 = vsel %vm1210, %v1264, %v1265
  %v1267 = vrot.slane %v1174, 5
  %v1268 = vrot.slane %v1267, 4
  %v1269 = vrot.slane %v691, 5
  %v1270 = vsel %vm1210, %v1268, %v1269
  %v1271 = vrot.slane %v1175, 5
  %v1272 = vrot.slane %v1271, 4
  %v1273 = vrot.slane %v692, 5
  %v1274 = vsel %vm1210, %v1272, %v1273
  %s1275 = scalar_lea.vmem %s3, 32
  %v1276 = vld [vmem:[%s1275] sm:$0xf]
  %v1277 = vld [vmem:[%s1275 + $0x4] sm:$0xf]
  %v1278 = vld [vmem:[%s1275 + $0x8] sm:$0xf]
  %v1279 = vld [vmem:[%s1275 + $0xc] sm:$0xf]
  %v1280 = vunpack.c.l.b16 %v1214
  %v1281 = vunpack.c.l.b16 %v1218
  %v1282 = vunpack.c.l.b16 %v1222
  %v1283 = vunpack.c.l.b16 %v1226
  %v1284 = vunpack.c.l.b16 %v1230
  %v1285 = vunpack.c.l.b16 %v1234
  %v1286 = vunpack.c.l.b16 %v1238
  %v1287 = vunpack.c.l.b16 %v1242
  %v1288 = vunpack.c.l.b16 %v1246
  %v1289 = vunpack.c.l.b16 %v1250
  %v1290 = vunpack.c.l.b16 %v1254
  %v1291 = vunpack.c.l.b16 %v1258
  %v1292 = vunpack.c.l.b16 %v1262
  %v1293 = vunpack.c.l.b16 %v1266
  %v1294 = vunpack.c.l.b16 %v1270
  %v1295 = vunpack.c.l.b16 %v1274
  %v1296 = vpack.c.b16 %v1281, %v1280
  %v1297 = vpack.c.b16 %v1283, %v1282
  %v1298 = vpack.c.b16 %v1285, %v1284
  %v1299 = vpack.c.b16 %v1287, %v1286
  %v1300 = vpack.c.b16 %v1289, %v1288
  %v1301 = vpack.c.b16 %v1291, %v1290
  %v1302 = vpack.c.b16 %v1293, %v1292
  %v1303 = vpack.c.b16 %v1295, %v1294
  %v1308 = vunpack.c.l.b16 %v1276
  %v1309 = vunpack.c.l.b16 %v1277
  %v1310 = vunpack.c.l.b16 %v1278
  %v1311 = vunpack.c.l.b16 %v1279
  %v1312 = vpack.c.b16 %v1309, %v1308
  %v1313 = vpack.c.b16 %v1311, %v1310
  %v1317 = vsel %vm961, %v1296, 0
  %v1320 = vsel %vm961, %v1297, 0
  %v1323 = vsel %vm961, %v1298, 0
  %v1326 = vsel %vm961, %v1299, 0
  %v1329 = vsel %vm961, %v1300, 0
  %v1332 = vsel %vm961, %v1301, 0
  %v1335 = vsel %vm961, %v1302, 0
  %v1338 = vsel %vm961, %v1303, 0
  %1340 = vmatpush.bf16.msra.mxu0 0
  %1341 = vmatpush.bf16.msra.mxu0 0
  %1342 = vmatpush.bf16.msra.mxu0 0
  %1343 = vmatpush.bf16.msra.mxu0 0
  %1344 = vmatpush.bf16.msra.mxu0 0
  %1345 = vmatpush.bf16.msra.mxu0 0
  %1346 = vmatpush.bf16.msra.mxu0 %v1313
  %1347 = vmatpush.bf16.msra.mxu0 %v1312
  %1348 = vmatmul.bf16.gmra.mxu0 %v1317
  %v1349 = vpop.f32.mrf.mxu0
  %v1350 = vadd.f32 0.0, %v1349
  %v1351 = vpop.f32.mrf.mxu0
  %v1352 = vadd.f32 0.0, %v1351
  %1353 = vmatmul.bf16.gmra.mxu0 %v1320
  %v1354 = vpop.f32.mrf.mxu0
  %v1355 = vadd.f32 0.0, %v1354
  %v1356 = vpop.f32.mrf.mxu0
  %v1357 = vadd.f32 0.0, %v1356
  %1358 = vmatmul.bf16.gmra.mxu0 %v1323
  %v1359 = vpop.f32.mrf.mxu0
  %v1360 = vadd.f32 0.0, %v1359
  %v1361 = vpop.f32.mrf.mxu0
  %v1362 = vadd.f32 0.0, %v1361
  %1363 = vmatmul.bf16.gmra.mxu0 %v1326
  %v1364 = vpop.f32.mrf.mxu0
  %v1365 = vadd.f32 0.0, %v1364
  %v1366 = vpop.f32.mrf.mxu0
  %v1367 = vadd.f32 0.0, %v1366
  %1368 = vmatmul.bf16.gmra.mxu0 %v1329
  %v1369 = vpop.f32.mrf.mxu0
  %v1370 = vadd.f32 0.0, %v1369
  %v1371 = vpop.f32.mrf.mxu0
  %v1372 = vadd.f32 0.0, %v1371
  %1373 = vmatmul.bf16.gmra.mxu0 %v1332
  %v1374 = vpop.f32.mrf.mxu0
  %v1375 = vadd.f32 0.0, %v1374
  %v1376 = vpop.f32.mrf.mxu0
  %v1377 = vadd.f32 0.0, %v1376
  %1378 = vmatmul.bf16.gmra.mxu0 %v1335
  %v1379 = vpop.f32.mrf.mxu0
  %v1380 = vadd.f32 0.0, %v1379
  %v1381 = vpop.f32.mrf.mxu0
  %v1382 = vadd.f32 0.0, %v1381
  %1383 = vmatmul.bf16.gmra.mxu0 %v1338
  %v1384 = vpop.f32.mrf.mxu0
  %v1385 = vadd.f32 0.0, %v1384
  %v1386 = vpop.f32.mrf.mxu0
  %v1387 = vadd.f32 0.0, %v1386
  %1388 = vdwg.mxu0
  %v1389 = vadd.f32 %v1121, %v1350
  %v1390 = vadd.f32 %v1123, %v1352
  %v1391 = vadd.f32 %v1126, %v1355
  %v1392 = vadd.f32 %v1128, %v1357
  %v1393 = vadd.f32 %v1131, %v1360
  %v1394 = vadd.f32 %v1133, %v1362
  %v1395 = vadd.f32 %v1136, %v1365
  %v1396 = vadd.f32 %v1138, %v1367
  %v1397 = vadd.f32 %v1141, %v1370
  %v1398 = vadd.f32 %v1143, %v1372
  %v1399 = vadd.f32 %v1146, %v1375
  %v1400 = vadd.f32 %v1148, %v1377
  %v1401 = vadd.f32 %v1151, %v1380
  %v1402 = vadd.f32 %v1153, %v1382
  %v1403 = vadd.f32 %v1156, %v1385
  %v1404 = vadd.f32 %v1158, %v1387
  %v1405 = vld [vmem:[%s422] sm:$0xf]
  %v1406 = vld [vmem:[%s422 + $0x8] sm:$0xf]
  %v1407 = vld [vmem:[%s422 + $0x10] sm:$0xf]
  %v1408 = vld [vmem:[%s422 + $0x18] sm:$0xf]
  %v1409 = vld [vmem:[%s422 + $0x20] sm:$0xf]
  %v1410 = vld [vmem:[%s422 + $0x28] sm:$0xf]
  %v1411 = vld [vmem:[%s422 + $0x30] sm:$0xf]
  %v1412 = vld [vmem:[%s422 + $0x38] sm:$0xf]
  %v1413 = vld [vmem:[%s422 + $0x50] sm:$0xf]
  %v1414 = vld [vmem:[%s422 + $0x58] sm:$0xf]
  %v1415 = vld [vmem:[%s422 + $0x60] sm:$0xf]
  %v1416 = vld [vmem:[%s422 + $0x68] sm:$0xf]
  %v1417 = vld [vmem:[%s422 + $0x70] sm:$0xf]
  %v1418 = vld [vmem:[%s422 + $0x78] sm:$0xf]
  %v1419 = vld [vmem:[%s422 + $0x80] sm:$0xf]
  %v1420 = vld [vmem:[%s422 + $0x88] sm:$0xf]
  %s1421 = scalar_lea.vmem %s3, 48
  %v1422 = vld [vmem:[%s1421] sm:$0xf]
  %v1423 = vld [vmem:[%s1421 + $0x4] sm:$0xf]
  %v1424 = vld [vmem:[%s1421 + $0x8] sm:$0xf]
  %v1425 = vld [vmem:[%s1421 + $0xc] sm:$0xf]
  %v1442 = vunpack.c.l.b16 %v1405
  %v1443 = vunpack.c.l.b16 %v1406
  %v1444 = vunpack.c.l.b16 %v1407
  %v1445 = vunpack.c.l.b16 %v1408
  %v1446 = vunpack.c.l.b16 %v1409
  %v1447 = vunpack.c.l.b16 %v1410
  %v1448 = vunpack.c.l.b16 %v1411
  %v1449 = vunpack.c.l.b16 %v1412
  %v1450 = vunpack.c.l.b16 %v1413
  %v1451 = vunpack.c.l.b16 %v1414
  %v1452 = vunpack.c.l.b16 %v1415
  %v1453 = vunpack.c.l.b16 %v1416
  %v1454 = vunpack.c.l.b16 %v1417
  %v1455 = vunpack.c.l.b16 %v1418
  %v1456 = vunpack.c.l.b16 %v1419
  %v1457 = vunpack.c.l.b16 %v1420
  %v1458 = vpack.c.b16 %v1443, %v1442
  %v1459 = vpack.c.b16 %v1445, %v1444
  %v1460 = vpack.c.b16 %v1447, %v1446
  %v1461 = vpack.c.b16 %v1449, %v1448
  %v1462 = vpack.c.b16 %v1451, %v1450
  %v1463 = vpack.c.b16 %v1453, %v1452
  %v1464 = vpack.c.b16 %v1455, %v1454
  %v1465 = vpack.c.b16 %v1457, %v1456
  %v1470 = vunpack.c.l.b16 %v1422
  %v1471 = vunpack.c.l.b16 %v1423
  %v1472 = vunpack.c.l.b16 %v1424
  %v1473 = vunpack.c.l.b16 %v1425
  %v1474 = vpack.c.b16 %v1471, %v1470
  %v1475 = vpack.c.b16 %v1473, %v1472
  %v1479 = vsel %vm961, %v1458, 0
  %v1482 = vsel %vm961, %v1459, 0
  %v1485 = vsel %vm961, %v1460, 0
  %v1488 = vsel %vm961, %v1461, 0
  %v1491 = vsel %vm961, %v1462, 0
  %v1494 = vsel %vm961, %v1463, 0
  %v1497 = vsel %vm961, %v1464, 0
  %v1500 = vsel %vm961, %v1465, 0
  %1502 = vmatpush.bf16.msra.mxu0 0
  %1503 = vmatpush.bf16.msra.mxu0 0
  %1504 = vmatpush.bf16.msra.mxu0 0
  %1505 = vmatpush.bf16.msra.mxu0 0
  %1506 = vmatpush.bf16.msra.mxu0 0
  %1507 = vmatpush.bf16.msra.mxu0 0
  %1508 = vmatpush.bf16.msra.mxu0 %v1475
  %1509 = vmatpush.bf16.msra.mxu0 %v1474
  %1510 = vmatmul.bf16.gmra.mxu0 %v1479
  %v1511 = vpop.f32.mrf.mxu0
  %v1512 = vadd.f32 0.0, %v1511
  %v1513 = vpop.f32.mrf.mxu0
  %v1514 = vadd.f32 0.0, %v1513
  %1515 = vmatmul.bf16.gmra.mxu0 %v1482
  %v1516 = vpop.f32.mrf.mxu0
  %v1517 = vadd.f32 0.0, %v1516
  %v1518 = vpop.f32.mrf.mxu0
  %v1519 = vadd.f32 0.0, %v1518
  %1520 = vmatmul.bf16.gmra.mxu0 %v1485
  %v1521 = vpop.f32.mrf.mxu0
  %v1522 = vadd.f32 0.0, %v1521
  %v1523 = vpop.f32.mrf.mxu0
  %v1524 = vadd.f32 0.0, %v1523
  %1525 = vmatmul.bf16.gmra.mxu0 %v1488
  %v1526 = vpop.f32.mrf.mxu0
  %v1527 = vadd.f32 0.0, %v1526
  %v1528 = vpop.f32.mrf.mxu0
  %v1529 = vadd.f32 0.0, %v1528
  %1530 = vmatmul.bf16.gmra.mxu0 %v1491
  %v1531 = vpop.f32.mrf.mxu0
  %v1532 = vadd.f32 0.0, %v1531
  %v1533 = vpop.f32.mrf.mxu0
  %v1534 = vadd.f32 0.0, %v1533
  %1535 = vmatmul.bf16.gmra.mxu0 %v1494
  %v1536 = vpop.f32.mrf.mxu0
  %v1537 = vadd.f32 0.0, %v1536
  %v1538 = vpop.f32.mrf.mxu0
  %v1539 = vadd.f32 0.0, %v1538
  %1540 = vmatmul.bf16.gmra.mxu0 %v1497
  %v1541 = vpop.f32.mrf.mxu0
  %v1542 = vadd.f32 0.0, %v1541
  %v1543 = vpop.f32.mrf.mxu0
  %v1544 = vadd.f32 0.0, %v1543
  %1545 = vmatmul.bf16.gmra.mxu0 %v1500
  %v1546 = vpop.f32.mrf.mxu0
  %v1547 = vadd.f32 0.0, %v1546
  %v1548 = vpop.f32.mrf.mxu0
  %v1549 = vadd.f32 0.0, %v1548
  %1550 = vdwg.mxu0
  %v1551 = vadd.f32 %v1389, %v1512
  %v1552 = vadd.f32 %v1390, %v1514
  %v1553 = vadd.f32 %v1391, %v1517
  %v1554 = vadd.f32 %v1392, %v1519
  %v1555 = vadd.f32 %v1393, %v1522
  %v1556 = vadd.f32 %v1394, %v1524
  %v1557 = vadd.f32 %v1395, %v1527
  %v1558 = vadd.f32 %v1396, %v1529
  %v1559 = vadd.f32 %v1397, %v1532
  %v1560 = vadd.f32 %v1398, %v1534
  %v1561 = vadd.f32 %v1399, %v1537
  %v1562 = vadd.f32 %v1400, %v1539
  %v1563 = vadd.f32 %v1401, %v1542
  %v1564 = vadd.f32 %v1402, %v1544
  %v1565 = vadd.f32 %v1403, %v1547
  %v1566 = vadd.f32 %v1404, %v1549
  %v1567 = vld [vmem:[%s422] sm:$0xf]
  %v1568 = vld [vmem:[%s422 + $0x4] sm:$0x1]
  %v1569 = vld [vmem:[%s422 + $0x8] sm:$0xf]
  %v1570 = vld [vmem:[%s422 + $0xc] sm:$0x1]
  %v1571 = vld [vmem:[%s422 + $0x10] sm:$0xf]
  %v1572 = vld [vmem:[%s422 + $0x14] sm:$0x1]
  %v1573 = vld [vmem:[%s422 + $0x18] sm:$0xf]
  %v1574 = vld [vmem:[%s422 + $0x1c] sm:$0x1]
  %v1575 = vld [vmem:[%s422 + $0x20] sm:$0xf]
  %v1576 = vld [vmem:[%s422 + $0x24] sm:$0x1]
  %v1577 = vld [vmem:[%s422 + $0x28] sm:$0xf]
  %v1578 = vld [vmem:[%s422 + $0x2c] sm:$0x1]
  %v1579 = vld [vmem:[%s422 + $0x30] sm:$0xf]
  %v1580 = vld [vmem:[%s422 + $0x34] sm:$0x1]
  %v1581 = vld [vmem:[%s422 + $0x38] sm:$0xf]
  %v1582 = vld [vmem:[%s422 + $0x3c] sm:$0x1]
  %v1583 = vld [vmem:[%s422 + $0x50] sm:$0xf]
  %v1584 = vld [vmem:[%s422 + $0x54] sm:$0x1]
  %v1585 = vld [vmem:[%s422 + $0x58] sm:$0xf]
  %v1586 = vld [vmem:[%s422 + $0x5c] sm:$0x1]
  %v1587 = vld [vmem:[%s422 + $0x60] sm:$0xf]
  %v1588 = vld [vmem:[%s422 + $0x64] sm:$0x1]
  %v1589 = vld [vmem:[%s422 + $0x68] sm:$0xf]
  %v1590 = vld [vmem:[%s422 + $0x6c] sm:$0x1]
  %v1591 = vld [vmem:[%s422 + $0x70] sm:$0xf]
  %v1592 = vld [vmem:[%s422 + $0x74] sm:$0x1]
  %v1593 = vld [vmem:[%s422 + $0x78] sm:$0xf]
  %v1594 = vld [vmem:[%s422 + $0x7c] sm:$0x1]
  %v1595 = vld [vmem:[%s422 + $0x80] sm:$0xf]
  %v1596 = vld [vmem:[%s422 + $0x84] sm:$0x1]
  %v1597 = vld [vmem:[%s422 + $0x88] sm:$0xf]
  %v1598 = vld [vmem:[%s422 + $0x8c] sm:$0x1]
  %v1600 = vshrl.u32 %v1567, 16
  %v1602 = vrot.slane %v1600, 4
  %v1603 = vshll.u32 %v1567, 16
  %v1605 = vrot.slane %v1603, 5
  %v1606 = vor.u32 %v1602, %v1605
  %v1607 = vrot.slane %v1606, 4
  %v1609 = vshll.u32 %v1568, 16
  %v1611 = vrot.slane %v1609, 5
  %v1612 = vsel %vm695, %v1607, %v1611
  %v1614 = vshrl.u32 %v1569, 16
  %v1616 = vrot.slane %v1614, 4
  %v1617 = vshll.u32 %v1569, 16
  %v1619 = vrot.slane %v1617, 5
  %v1620 = vor.u32 %v1616, %v1619
  %v1621 = vrot.slane %v1620, 4
  %v1623 = vshll.u32 %v1570, 16
  %v1625 = vrot.slane %v1623, 5
  %v1626 = vsel %vm695, %v1621, %v1625
  %v1628 = vshrl.u32 %v1571, 16
  %v1630 = vrot.slane %v1628, 4
  %v1631 = vshll.u32 %v1571, 16
  %v1633 = vrot.slane %v1631, 5
  %v1634 = vor.u32 %v1630, %v1633
  %v1635 = vrot.slane %v1634, 4
  %v1637 = vshll.u32 %v1572, 16
  %v1639 = vrot.slane %v1637, 5
  %v1640 = vsel %vm695, %v1635, %v1639
  %v1642 = vshrl.u32 %v1573, 16
  %v1644 = vrot.slane %v1642, 4
  %v1645 = vshll.u32 %v1573, 16
  %v1647 = vrot.slane %v1645, 5
  %v1648 = vor.u32 %v1644, %v1647
  %v1649 = vrot.slane %v1648, 4
  %v1651 = vshll.u32 %v1574, 16
  %v1653 = vrot.slane %v1651, 5
  %v1654 = vsel %vm695, %v1649, %v1653
  %v1656 = vshrl.u32 %v1575, 16
  %v1658 = vrot.slane %v1656, 4
  %v1659 = vshll.u32 %v1575, 16
  %v1661 = vrot.slane %v1659, 5
  %v1662 = vor.u32 %v1658, %v1661
  %v1663 = vrot.slane %v1662, 4
  %v1665 = vshll.u32 %v1576, 16
  %v1667 = vrot.slane %v1665, 5
  %v1668 = vsel %vm695, %v1663, %v1667
  %v1670 = vshrl.u32 %v1577, 16
  %v1672 = vrot.slane %v1670, 4
  %v1673 = vshll.u32 %v1577, 16
  %v1675 = vrot.slane %v1673, 5
  %v1676 = vor.u32 %v1672, %v1675
  %v1677 = vrot.slane %v1676, 4
  %v1679 = vshll.u32 %v1578, 16
  %v1681 = vrot.slane %v1679, 5
  %v1682 = vsel %vm695, %v1677, %v1681
  %v1684 = vshrl.u32 %v1579, 16
  %v1686 = vrot.slane %v1684, 4
  %v1687 = vshll.u32 %v1579, 16
  %v1689 = vrot.slane %v1687, 5
  %v1690 = vor.u32 %v1686, %v1689
  %v1691 = vrot.slane %v1690, 4
  %v1693 = vshll.u32 %v1580, 16
  %v1695 = vrot.slane %v1693, 5
  %v1696 = vsel %vm695, %v1691, %v1695
  %v1698 = vshrl.u32 %v1581, 16
  %v1700 = vrot.slane %v1698, 4
  %v1701 = vshll.u32 %v1581, 16
  %v1703 = vrot.slane %v1701, 5
  %v1704 = vor.u32 %v1700, %v1703
  %v1705 = vrot.slane %v1704, 4
  %v1707 = vshll.u32 %v1582, 16
  %v1709 = vrot.slane %v1707, 5
  %v1710 = vsel %vm695, %v1705, %v1709
  %v1712 = vshrl.u32 %v1583, 16
  %v1714 = vrot.slane %v1712, 4
  %v1715 = vshll.u32 %v1583, 16
  %v1717 = vrot.slane %v1715, 5
  %v1718 = vor.u32 %v1714, %v1717
  %v1719 = vrot.slane %v1718, 4
  %v1721 = vshll.u32 %v1584, 16
  %v1723 = vrot.slane %v1721, 5
  %v1724 = vsel %vm695, %v1719, %v1723
  %v1726 = vshrl.u32 %v1585, 16
  %v1728 = vrot.slane %v1726, 4
  %v1729 = vshll.u32 %v1585, 16
  %v1731 = vrot.slane %v1729, 5
  %v1732 = vor.u32 %v1728, %v1731
  %v1733 = vrot.slane %v1732, 4
  %v1735 = vshll.u32 %v1586, 16
  %v1737 = vrot.slane %v1735, 5
  %v1738 = vsel %vm695, %v1733, %v1737
  %v1740 = vshrl.u32 %v1587, 16
  %v1742 = vrot.slane %v1740, 4
  %v1743 = vshll.u32 %v1587, 16
  %v1745 = vrot.slane %v1743, 5
  %v1746 = vor.u32 %v1742, %v1745
  %v1747 = vrot.slane %v1746, 4
  %v1749 = vshll.u32 %v1588, 16
  %v1751 = vrot.slane %v1749, 5
  %v1752 = vsel %vm695, %v1747, %v1751
  %v1754 = vshrl.u32 %v1589, 16
  %v1756 = vrot.slane %v1754, 4
  %v1757 = vshll.u32 %v1589, 16
  %v1759 = vrot.slane %v1757, 5
  %v1760 = vor.u32 %v1756, %v1759
  %v1761 = vrot.slane %v1760, 4
  %v1763 = vshll.u32 %v1590, 16
  %v1765 = vrot.slane %v1763, 5
  %v1766 = vsel %vm695, %v1761, %v1765
  %v1768 = vshrl.u32 %v1591, 16
  %v1770 = vrot.slane %v1768, 4
  %v1771 = vshll.u32 %v1591, 16
  %v1773 = vrot.slane %v1771, 5
  %v1774 = vor.u32 %v1770, %v1773
  %v1775 = vrot.slane %v1774, 4
  %v1777 = vshll.u32 %v1592, 16
  %v1779 = vrot.slane %v1777, 5
  %v1780 = vsel %vm695, %v1775, %v1779
  %v1782 = vshrl.u32 %v1593, 16
  %v1784 = vrot.slane %v1782, 4
  %v1785 = vshll.u32 %v1593, 16
  %v1787 = vrot.slane %v1785, 5
  %v1788 = vor.u32 %v1784, %v1787
  %v1789 = vrot.slane %v1788, 4
  %v1791 = vshll.u32 %v1594, 16
  %v1793 = vrot.slane %v1791, 5
  %v1794 = vsel %vm695, %v1789, %v1793
  %v1796 = vshrl.u32 %v1595, 16
  %v1798 = vrot.slane %v1796, 4
  %v1799 = vshll.u32 %v1595, 16
  %v1801 = vrot.slane %v1799, 5
  %v1802 = vor.u32 %v1798, %v1801
  %v1803 = vrot.slane %v1802, 4
  %v1805 = vshll.u32 %v1596, 16
  %v1807 = vrot.slane %v1805, 5
  %v1808 = vsel %vm695, %v1803, %v1807
  %v1810 = vshrl.u32 %v1597, 16
  %v1812 = vrot.slane %v1810, 4
  %v1813 = vshll.u32 %v1597, 16
  %v1815 = vrot.slane %v1813, 5
  %v1816 = vor.u32 %v1812, %v1815
  %v1817 = vrot.slane %v1816, 4
  %v1819 = vshll.u32 %v1598, 16
  %v1821 = vrot.slane %v1819, 5
  %v1822 = vsel %vm695, %v1817, %v1821
  %s1823 = scalar_lea.vmem %s3, 64
  %v1824 = vld [vmem:[%s1823] sm:$0xf]
  %v1825 = vld [vmem:[%s1823 + $0x4] sm:$0xf]
  %v1826 = vld [vmem:[%s1823 + $0x8] sm:$0xf]
  %v1827 = vld [vmem:[%s1823 + $0xc] sm:$0xf]
  %v1828 = vunpack.c.l.b16 %v1612
  %v1829 = vunpack.c.l.b16 %v1626
  %v1830 = vunpack.c.l.b16 %v1640
  %v1831 = vunpack.c.l.b16 %v1654
  %v1832 = vunpack.c.l.b16 %v1668
  %v1833 = vunpack.c.l.b16 %v1682
  %v1834 = vunpack.c.l.b16 %v1696
  %v1835 = vunpack.c.l.b16 %v1710
  %v1836 = vunpack.c.l.b16 %v1724
  %v1837 = vunpack.c.l.b16 %v1738
  %v1838 = vunpack.c.l.b16 %v1752
  %v1839 = vunpack.c.l.b16 %v1766
  %v1840 = vunpack.c.l.b16 %v1780
  %v1841 = vunpack.c.l.b16 %v1794
  %v1842 = vunpack.c.l.b16 %v1808
  %v1843 = vunpack.c.l.b16 %v1822
  %v1844 = vpack.c.b16 %v1829, %v1828
  %v1845 = vpack.c.b16 %v1831, %v1830
  %v1846 = vpack.c.b16 %v1833, %v1832
  %v1847 = vpack.c.b16 %v1835, %v1834
  %v1848 = vpack.c.b16 %v1837, %v1836
  %v1849 = vpack.c.b16 %v1839, %v1838
  %v1850 = vpack.c.b16 %v1841, %v1840
  %v1851 = vpack.c.b16 %v1843, %v1842
  %v1856 = vunpack.c.l.b16 %v1824
  %v1857 = vunpack.c.l.b16 %v1825
  %v1858 = vunpack.c.l.b16 %v1826
  %v1859 = vunpack.c.l.b16 %v1827
  %v1860 = vpack.c.b16 %v1857, %v1856
  %v1861 = vpack.c.b16 %v1859, %v1858
  %v1865 = vsel %vm961, %v1844, 0
  %v1868 = vsel %vm961, %v1845, 0
  %v1871 = vsel %vm961, %v1846, 0
  %v1874 = vsel %vm961, %v1847, 0
  %v1877 = vsel %vm961, %v1848, 0
  %v1880 = vsel %vm961, %v1849, 0
  %v1883 = vsel %vm961, %v1850, 0
  %v1886 = vsel %vm961, %v1851, 0
  %1888 = vmatpush.bf16.msra.mxu0 0
  %1889 = vmatpush.bf16.msra.mxu0 0
  %1890 = vmatpush.bf16.msra.mxu0 0
  %1891 = vmatpush.bf16.msra.mxu0 0
  %1892 = vmatpush.bf16.msra.mxu0 0
  %1893 = vmatpush.bf16.msra.mxu0 0
  %1894 = vmatpush.bf16.msra.mxu0 %v1861
  %1895 = vmatpush.bf16.msra.mxu0 %v1860
  %1896 = vmatmul.bf16.gmra.mxu0 %v1865
  %v1897 = vpop.f32.mrf.mxu0
  %v1898 = vadd.f32 0.0, %v1897
  %v1899 = vpop.f32.mrf.mxu0
  %v1900 = vadd.f32 0.0, %v1899
  %1901 = vmatmul.bf16.gmra.mxu0 %v1868
  %v1902 = vpop.f32.mrf.mxu0
  %v1903 = vadd.f32 0.0, %v1902
  %v1904 = vpop.f32.mrf.mxu0
  %v1905 = vadd.f32 0.0, %v1904
  %1906 = vmatmul.bf16.gmra.mxu0 %v1871
  %v1907 = vpop.f32.mrf.mxu0
  %v1908 = vadd.f32 0.0, %v1907
  %v1909 = vpop.f32.mrf.mxu0
  %v1910 = vadd.f32 0.0, %v1909
  %1911 = vmatmul.bf16.gmra.mxu0 %v1874
  %v1912 = vpop.f32.mrf.mxu0
  %v1913 = vadd.f32 0.0, %v1912
  %v1914 = vpop.f32.mrf.mxu0
  %v1915 = vadd.f32 0.0, %v1914
  %1916 = vmatmul.bf16.gmra.mxu0 %v1877
  %v1917 = vpop.f32.mrf.mxu0
  %v1918 = vadd.f32 0.0, %v1917
  %v1919 = vpop.f32.mrf.mxu0
  %v1920 = vadd.f32 0.0, %v1919
  %1921 = vmatmul.bf16.gmra.mxu0 %v1880
  %v1922 = vpop.f32.mrf.mxu0
  %v1923 = vadd.f32 0.0, %v1922
  %v1924 = vpop.f32.mrf.mxu0
  %v1925 = vadd.f32 0.0, %v1924
  %1926 = vmatmul.bf16.gmra.mxu0 %v1883
  %v1927 = vpop.f32.mrf.mxu0
  %v1928 = vadd.f32 0.0, %v1927
  %v1929 = vpop.f32.mrf.mxu0
  %v1930 = vadd.f32 0.0, %v1929
  %1931 = vmatmul.bf16.gmra.mxu0 %v1886
  %v1932 = vpop.f32.mrf.mxu0
  %v1933 = vadd.f32 0.0, %v1932
  %v1934 = vpop.f32.mrf.mxu0
  %v1935 = vadd.f32 0.0, %v1934
  %1936 = vdwg.mxu0
  %v1937 = vadd.f32 %v1551, %v1898
  %v1938 = vadd.f32 %v1552, %v1900
  %v1939 = vadd.f32 %v1553, %v1903
  %v1940 = vadd.f32 %v1554, %v1905
  %v1941 = vadd.f32 %v1555, %v1908
  %v1942 = vadd.f32 %v1556, %v1910
  %v1943 = vadd.f32 %v1557, %v1913
  %v1944 = vadd.f32 %v1558, %v1915
  %v1945 = vadd.f32 %v1559, %v1918
  %v1946 = vadd.f32 %v1560, %v1920
  %v1947 = vadd.f32 %v1561, %v1923
  %v1948 = vadd.f32 %v1562, %v1925
  %v1949 = vadd.f32 %v1563, %v1928
  %v1950 = vadd.f32 %v1564, %v1930
  %v1951 = vadd.f32 %v1565, %v1933
  %v1952 = vadd.f32 %v1566, %v1935
  %v1953 = vld [vmem:[%s422] sm:$0xe]
  %v1954 = vld [vmem:[%s422 + $0x8] sm:$0xe]
  %v1955 = vld [vmem:[%s422 + $0x10] sm:$0xe]
  %v1956 = vld [vmem:[%s422 + $0x18] sm:$0xe]
  %v1957 = vld [vmem:[%s422 + $0x20] sm:$0xe]
  %v1958 = vld [vmem:[%s422 + $0x28] sm:$0xe]
  %v1959 = vld [vmem:[%s422 + $0x30] sm:$0xe]
  %v1960 = vld [vmem:[%s422 + $0x38] sm:$0xe]
  %v1961 = vld [vmem:[%s422 + $0x50] sm:$0xe]
  %v1962 = vld [vmem:[%s422 + $0x58] sm:$0xe]
  %v1963 = vld [vmem:[%s422 + $0x60] sm:$0xe]
  %v1964 = vld [vmem:[%s422 + $0x68] sm:$0xe]
  %v1965 = vld [vmem:[%s422 + $0x70] sm:$0xe]
  %v1966 = vld [vmem:[%s422 + $0x78] sm:$0xe]
  %v1967 = vld [vmem:[%s422 + $0x80] sm:$0xe]
  %v1968 = vld [vmem:[%s422 + $0x88] sm:$0xe]
  %v2001 = vrot.slane %v1953, 5
  %v2002 = vrot.slane %v2001, 4
  %v2003 = vrot.slane %v1568, 5
  %v2004 = vsel %vm1210, %v2002, %v2003
  %v2005 = vrot.slane %v1954, 5
  %v2006 = vrot.slane %v2005, 4
  %v2007 = vrot.slane %v1570, 5
  %v2008 = vsel %vm1210, %v2006, %v2007
  %v2009 = vrot.slane %v1955, 5
  %v2010 = vrot.slane %v2009, 4
  %v2011 = vrot.slane %v1572, 5
  %v2012 = vsel %vm1210, %v2010, %v2011
  %v2013 = vrot.slane %v1956, 5
  %v2014 = vrot.slane %v2013, 4
  %v2015 = vrot.slane %v1574, 5
  %v2016 = vsel %vm1210, %v2014, %v2015
  %v2017 = vrot.slane %v1957, 5
  %v2018 = vrot.slane %v2017, 4
  %v2019 = vrot.slane %v1576, 5
  %v2020 = vsel %vm1210, %v2018, %v2019
  %v2021 = vrot.slane %v1958, 5
  %v2022 = vrot.slane %v2021, 4
  %v2023 = vrot.slane %v1578, 5
  %v2024 = vsel %vm1210, %v2022, %v2023
  %v2025 = vrot.slane %v1959, 5
  %v2026 = vrot.slane %v2025, 4
  %v2027 = vrot.slane %v1580, 5
  %v2028 = vsel %vm1210, %v2026, %v2027
  %v2029 = vrot.slane %v1960, 5
  %v2030 = vrot.slane %v2029, 4
  %v2031 = vrot.slane %v1582, 5
  %v2032 = vsel %vm1210, %v2030, %v2031
  %v2033 = vrot.slane %v1961, 5
  %v2034 = vrot.slane %v2033, 4
  %v2035 = vrot.slane %v1584, 5
  %v2036 = vsel %vm1210, %v2034, %v2035
  %v2037 = vrot.slane %v1962, 5
  %v2038 = vrot.slane %v2037, 4
  %v2039 = vrot.slane %v1586, 5
  %v2040 = vsel %vm1210, %v2038, %v2039
  %v2041 = vrot.slane %v1963, 5
  %v2042 = vrot.slane %v2041, 4
  %v2043 = vrot.slane %v1588, 5
  %v2044 = vsel %vm1210, %v2042, %v2043
  %v2045 = vrot.slane %v1964, 5
  %v2046 = vrot.slane %v2045, 4
  %v2047 = vrot.slane %v1590, 5
  %v2048 = vsel %vm1210, %v2046, %v2047
  %v2049 = vrot.slane %v1965, 5
  %v2050 = vrot.slane %v2049, 4
  %v2051 = vrot.slane %v1592, 5
  %v2052 = vsel %vm1210, %v2050, %v2051
  %v2053 = vrot.slane %v1966, 5
  %v2054 = vrot.slane %v2053, 4
  %v2055 = vrot.slane %v1594, 5
  %v2056 = vsel %vm1210, %v2054, %v2055
  %v2057 = vrot.slane %v1967, 5
  %v2058 = vrot.slane %v2057, 4
  %v2059 = vrot.slane %v1596, 5
  %v2060 = vsel %vm1210, %v2058, %v2059
  %v2061 = vrot.slane %v1968, 5
  %v2062 = vrot.slane %v2061, 4
  %v2063 = vrot.slane %v1598, 5
  %v2064 = vsel %vm1210, %v2062, %v2063
  %s2065 = scalar_lea.vmem %s3, 80
  %v2066 = vld [vmem:[%s2065] sm:$0xf]
  %v2067 = vld [vmem:[%s2065 + $0x4] sm:$0xf]
  %v2068 = vld [vmem:[%s2065 + $0x8] sm:$0xf]
  %v2069 = vld [vmem:[%s2065 + $0xc] sm:$0xf]
  %v2070 = vunpack.c.l.b16 %v2004
  %v2071 = vunpack.c.l.b16 %v2008
  %v2072 = vunpack.c.l.b16 %v2012
  %v2073 = vunpack.c.l.b16 %v2016
  %v2074 = vunpack.c.l.b16 %v2020
  %v2075 = vunpack.c.l.b16 %v2024
  %v2076 = vunpack.c.l.b16 %v2028
  %v2077 = vunpack.c.l.b16 %v2032
  %v2078 = vunpack.c.l.b16 %v2036
  %v2079 = vunpack.c.l.b16 %v2040
  %v2080 = vunpack.c.l.b16 %v2044
  %v2081 = vunpack.c.l.b16 %v2048
  %v2082 = vunpack.c.l.b16 %v2052
  %v2083 = vunpack.c.l.b16 %v2056
  %v2084 = vunpack.c.l.b16 %v2060
  %v2085 = vunpack.c.l.b16 %v2064
  %v2086 = vpack.c.b16 %v2071, %v2070
  %v2087 = vpack.c.b16 %v2073, %v2072
  %v2088 = vpack.c.b16 %v2075, %v2074
  %v2089 = vpack.c.b16 %v2077, %v2076
  %v2090 = vpack.c.b16 %v2079, %v2078
  %v2091 = vpack.c.b16 %v2081, %v2080
  %v2092 = vpack.c.b16 %v2083, %v2082
  %v2093 = vpack.c.b16 %v2085, %v2084
  %v2098 = vunpack.c.l.b16 %v2066
  %v2099 = vunpack.c.l.b16 %v2067
  %v2100 = vunpack.c.l.b16 %v2068
  %v2101 = vunpack.c.l.b16 %v2069
  %v2102 = vpack.c.b16 %v2099, %v2098
  %v2103 = vpack.c.b16 %v2101, %v2100
  %v2107 = vsel %vm961, %v2086, 0
  %v2110 = vsel %vm961, %v2087, 0
  %v2113 = vsel %vm961, %v2088, 0
  %v2116 = vsel %vm961, %v2089, 0
  %v2119 = vsel %vm961, %v2090, 0
  %v2122 = vsel %vm961, %v2091, 0
  %v2125 = vsel %vm961, %v2092, 0
  %v2128 = vsel %vm961, %v2093, 0
  %2130 = vmatpush.bf16.msra.mxu0 0
  %2131 = vmatpush.bf16.msra.mxu0 0
  %2132 = vmatpush.bf16.msra.mxu0 0
  %2133 = vmatpush.bf16.msra.mxu0 0
  %2134 = vmatpush.bf16.msra.mxu0 0
  %2135 = vmatpush.bf16.msra.mxu0 0
  %2136 = vmatpush.bf16.msra.mxu0 %v2103
  %2137 = vmatpush.bf16.msra.mxu0 %v2102
  %2138 = vmatmul.bf16.gmra.mxu0 %v2107
  %v2139 = vpop.f32.mrf.mxu0
  %v2140 = vadd.f32 0.0, %v2139
  %v2141 = vpop.f32.mrf.mxu0
  %v2142 = vadd.f32 0.0, %v2141
  %2143 = vmatmul.bf16.gmra.mxu0 %v2110
  %v2144 = vpop.f32.mrf.mxu0
  %v2145 = vadd.f32 0.0, %v2144
  %v2146 = vpop.f32.mrf.mxu0
  %v2147 = vadd.f32 0.0, %v2146
  %2148 = vmatmul.bf16.gmra.mxu0 %v2113
  %v2149 = vpop.f32.mrf.mxu0
  %v2150 = vadd.f32 0.0, %v2149
  %v2151 = vpop.f32.mrf.mxu0
  %v2152 = vadd.f32 0.0, %v2151
  %2153 = vmatmul.bf16.gmra.mxu0 %v2116
  %v2154 = vpop.f32.mrf.mxu0
  %v2155 = vadd.f32 0.0, %v2154
  %v2156 = vpop.f32.mrf.mxu0
  %v2157 = vadd.f32 0.0, %v2156
  %2158 = vmatmul.bf16.gmra.mxu0 %v2119
  %v2159 = vpop.f32.mrf.mxu0
  %v2160 = vadd.f32 0.0, %v2159
  %v2161 = vpop.f32.mrf.mxu0
  %v2162 = vadd.f32 0.0, %v2161
  %2163 = vmatmul.bf16.gmra.mxu0 %v2122
  %v2164 = vpop.f32.mrf.mxu0
  %v2165 = vadd.f32 0.0, %v2164
  %v2166 = vpop.f32.mrf.mxu0
  %v2167 = vadd.f32 0.0, %v2166
  %2168 = vmatmul.bf16.gmra.mxu0 %v2125
  %v2169 = vpop.f32.mrf.mxu0
  %v2170 = vadd.f32 0.0, %v2169
  %v2171 = vpop.f32.mrf.mxu0
  %v2172 = vadd.f32 0.0, %v2171
  %2173 = vmatmul.bf16.gmra.mxu0 %v2128
  %v2174 = vpop.f32.mrf.mxu0
  %v2175 = vadd.f32 0.0, %v2174
  %v2176 = vpop.f32.mrf.mxu0
  %v2177 = vadd.f32 0.0, %v2176
  %2178 = vdwg.mxu0
  %v2179 = vadd.f32 %v1937, %v2140
  %v2180 = vadd.f32 %v1938, %v2142
  %v2181 = vadd.f32 %v1939, %v2145
  %v2182 = vadd.f32 %v1940, %v2147
  %v2183 = vadd.f32 %v1941, %v2150
  %v2184 = vadd.f32 %v1942, %v2152
  %v2185 = vadd.f32 %v1943, %v2155
  %v2186 = vadd.f32 %v1944, %v2157
  %v2187 = vadd.f32 %v1945, %v2160
  %v2188 = vadd.f32 %v1946, %v2162
  %v2189 = vadd.f32 %v1947, %v2165
  %v2190 = vadd.f32 %v1948, %v2167
  %v2191 = vadd.f32 %v1949, %v2170
  %v2192 = vadd.f32 %v1950, %v2172
  %v2193 = vadd.f32 %v1951, %v2175
  %v2194 = vadd.f32 %v1952, %v2177
  %s2195 = scalar_lea.vmem [#allocation2], 16
  %v2196 = vld [vmem:[%s2195] sm:$0xf]
  %v2197 = vld [vmem:[%s2195 + $0x8] sm:$0xf]
  %v2198 = vld [vmem:[%s2195 + $0x10] sm:$0xf]
  %v2199 = vld [vmem:[%s2195 + $0x18] sm:$0xf]
  %v2200 = vld [vmem:[%s2195 + $0x20] sm:$0xf]
  %v2201 = vld [vmem:[%s2195 + $0x28] sm:$0xf]
  %v2202 = vld [vmem:[%s2195 + $0x30] sm:$0xf]
  %v2203 = vld [vmem:[%s2195 + $0x38] sm:$0xf]
  %v2204 = vld [vmem:[%s2195 + $0x50] sm:$0xf]
  %v2205 = vld [vmem:[%s2195 + $0x58] sm:$0xf]
  %v2206 = vld [vmem:[%s2195 + $0x60] sm:$0xf]
  %v2207 = vld [vmem:[%s2195 + $0x68] sm:$0xf]
  %v2208 = vld [vmem:[%s2195 + $0x70] sm:$0xf]
  %v2209 = vld [vmem:[%s2195 + $0x78] sm:$0xf]
  %v2210 = vld [vmem:[%s2195 + $0x80] sm:$0xf]
  %v2211 = vld [vmem:[%s2195 + $0x88] sm:$0xf]
  %s2212 = scalar_lea.vmem %s3, 96
  %v2213 = vld [vmem:[%s2212] sm:$0xf]
  %v2214 = vld [vmem:[%s2212 + $0x4] sm:$0xf]
  %v2215 = vld [vmem:[%s2212 + $0x8] sm:$0xf]
  %v2216 = vld [vmem:[%s2212 + $0xc] sm:$0xf]
  %v2233 = vunpack.c.l.b16 %v2196
  %v2234 = vunpack.c.l.b16 %v2197
  %v2235 = vunpack.c.l.b16 %v2198
  %v2236 = vunpack.c.l.b16 %v2199
  %v2237 = vunpack.c.l.b16 %v2200
  %v2238 = vunpack.c.l.b16 %v2201
  %v2239 = vunpack.c.l.b16 %v2202
  %v2240 = vunpack.c.l.b16 %v2203
  %v2241 = vunpack.c.l.b16 %v2204
  %v2242 = vunpack.c.l.b16 %v2205
  %v2243 = vunpack.c.l.b16 %v2206
  %v2244 = vunpack.c.l.b16 %v2207
  %v2245 = vunpack.c.l.b16 %v2208
  %v2246 = vunpack.c.l.b16 %v2209
  %v2247 = vunpack.c.l.b16 %v2210
  %v2248 = vunpack.c.l.b16 %v2211
  %v2249 = vpack.c.b16 %v2234, %v2233
  %v2250 = vpack.c.b16 %v2236, %v2235
  %v2251 = vpack.c.b16 %v2238, %v2237
  %v2252 = vpack.c.b16 %v2240, %v2239
  %v2253 = vpack.c.b16 %v2242, %v2241
  %v2254 = vpack.c.b16 %v2244, %v2243
  %v2255 = vpack.c.b16 %v2246, %v2245
  %v2256 = vpack.c.b16 %v2248, %v2247
  %v2261 = vunpack.c.l.b16 %v2213
  %v2262 = vunpack.c.l.b16 %v2214
  %v2263 = vunpack.c.l.b16 %v2215
  %v2264 = vunpack.c.l.b16 %v2216
  %v2265 = vpack.c.b16 %v2262, %v2261
  %v2266 = vpack.c.b16 %v2264, %v2263
  %v2270 = vsel %vm961, %v2249, 0
  %v2273 = vsel %vm961, %v2250, 0
  %v2276 = vsel %vm961, %v2251, 0
  %v2279 = vsel %vm961, %v2252, 0
  %v2282 = vsel %vm961, %v2253, 0
  %v2285 = vsel %vm961, %v2254, 0
  %v2288 = vsel %vm961, %v2255, 0
  %v2291 = vsel %vm961, %v2256, 0
  %2293 = vmatpush.bf16.msra.mxu0 0
  %2294 = vmatpush.bf16.msra.mxu0 0
  %2295 = vmatpush.bf16.msra.mxu0 0
  %2296 = vmatpush.bf16.msra.mxu0 0
  %2297 = vmatpush.bf16.msra.mxu0 0
  %2298 = vmatpush.bf16.msra.mxu0 0
  %2299 = vmatpush.bf16.msra.mxu0 %v2266
  %2300 = vmatpush.bf16.msra.mxu0 %v2265
  %2301 = vmatmul.bf16.gmra.mxu0 %v2270
  %v2302 = vpop.f32.mrf.mxu0
  %v2303 = vadd.f32 0.0, %v2302
  %v2304 = vpop.f32.mrf.mxu0
  %v2305 = vadd.f32 0.0, %v2304
  %2306 = vmatmul.bf16.gmra.mxu0 %v2273
  %v2307 = vpop.f32.mrf.mxu0
  %v2308 = vadd.f32 0.0, %v2307
  %v2309 = vpop.f32.mrf.mxu0
  %v2310 = vadd.f32 0.0, %v2309
  %2311 = vmatmul.bf16.gmra.mxu0 %v2276
  %v2312 = vpop.f32.mrf.mxu0
  %v2313 = vadd.f32 0.0, %v2312
  %v2314 = vpop.f32.mrf.mxu0
  %v2315 = vadd.f32 0.0, %v2314
  %2316 = vmatmul.bf16.gmra.mxu0 %v2279
  %v2317 = vpop.f32.mrf.mxu0
  %v2318 = vadd.f32 0.0, %v2317
  %v2319 = vpop.f32.mrf.mxu0
  %v2320 = vadd.f32 0.0, %v2319
  %2321 = vmatmul.bf16.gmra.mxu0 %v2282
  %v2322 = vpop.f32.mrf.mxu0
  %v2323 = vadd.f32 0.0, %v2322
  %v2324 = vpop.f32.mrf.mxu0
  %v2325 = vadd.f32 0.0, %v2324
  %2326 = vmatmul.bf16.gmra.mxu0 %v2285
  %v2327 = vpop.f32.mrf.mxu0
  %v2328 = vadd.f32 0.0, %v2327
  %v2329 = vpop.f32.mrf.mxu0
  %v2330 = vadd.f32 0.0, %v2329
  %2331 = vmatmul.bf16.gmra.mxu0 %v2288
  %v2332 = vpop.f32.mrf.mxu0
  %v2333 = vadd.f32 0.0, %v2332
  %v2334 = vpop.f32.mrf.mxu0
  %v2335 = vadd.f32 0.0, %v2334
  %2336 = vmatmul.bf16.gmra.mxu0 %v2291
  %v2337 = vpop.f32.mrf.mxu0
  %v2338 = vadd.f32 0.0, %v2337
  %v2339 = vpop.f32.mrf.mxu0
  %v2340 = vadd.f32 0.0, %v2339
  %2341 = vdwg.mxu0
  %v2342 = vadd.f32 %v2179, %v2303
  %v2343 = vadd.f32 %v2180, %v2305
  %v2344 = vadd.f32 %v2181, %v2308
  %v2345 = vadd.f32 %v2182, %v2310
  %v2346 = vadd.f32 %v2183, %v2313
  %v2347 = vadd.f32 %v2184, %v2315
  %v2348 = vadd.f32 %v2185, %v2318
  %v2349 = vadd.f32 %v2186, %v2320
  %v2350 = vadd.f32 %v2187, %v2323
  %v2351 = vadd.f32 %v2188, %v2325
  %v2352 = vadd.f32 %v2189, %v2328
  %v2353 = vadd.f32 %v2190, %v2330
  %v2354 = vadd.f32 %v2191, %v2333
  %v2355 = vadd.f32 %v2192, %v2335
  %v2356 = vadd.f32 %v2193, %v2338
  %v2357 = vadd.f32 %v2194, %v2340
  %v2358 = vld [vmem:[%s2195] sm:$0xf]
  %v2359 = vld [vmem:[%s2195 + $0x4] sm:$0x1]
  %v2360 = vld [vmem:[%s2195 + $0x8] sm:$0xf]
  %v2361 = vld [vmem:[%s2195 + $0xc] sm:$0x1]
  %v2362 = vld [vmem:[%s2195 + $0x10] sm:$0xf]
  %v2363 = vld [vmem:[%s2195 + $0x14] sm:$0x1]
  %v2364 = vld [vmem:[%s2195 + $0x18] sm:$0xf]
  %v2365 = vld [vmem:[%s2195 + $0x1c] sm:$0x1]
  %v2366 = vld [vmem:[%s2195 + $0x20] sm:$0xf]
  %v2367 = vld [vmem:[%s2195 + $0x24] sm:$0x1]
  %v2368 = vld [vmem:[%s2195 + $0x28] sm:$0xf]
  %v2369 = vld [vmem:[%s2195 + $0x2c] sm:$0x1]
  %v2370 = vld [vmem:[%s2195 + $0x30] sm:$0xf]
  %v2371 = vld [vmem:[%s2195 + $0x34] sm:$0x1]
  %v2372 = vld [vmem:[%s2195 + $0x38] sm:$0xf]
  %v2373 = vld [vmem:[%s2195 + $0x3c] sm:$0x1]
  %v2374 = vld [vmem:[%s2195 + $0x50] sm:$0xf]
  %v2375 = vld [vmem:[%s2195 + $0x54] sm:$0x1]
  %v2376 = vld [vmem:[%s2195 + $0x58] sm:$0xf]
  %v2377 = vld [vmem:[%s2195 + $0x5c] sm:$0x1]
  %v2378 = vld [vmem:[%s2195 + $0x60] sm:$0xf]
  %v2379 = vld [vmem:[%s2195 + $0x64] sm:$0x1]
  %v2380 = vld [vmem:[%s2195 + $0x68] sm:$0xf]
  %v2381 = vld [vmem:[%s2195 + $0x6c] sm:$0x1]
  %v2382 = vld [vmem:[%s2195 + $0x70] sm:$0xf]
  %v2383 = vld [vmem:[%s2195 + $0x74] sm:$0x1]
  %v2384 = vld [vmem:[%s2195 + $0x78] sm:$0xf]
  %v2385 = vld [vmem:[%s2195 + $0x7c] sm:$0x1]
  %v2386 = vld [vmem:[%s2195 + $0x80] sm:$0xf]
  %v2387 = vld [vmem:[%s2195 + $0x84] sm:$0x1]
  %v2388 = vld [vmem:[%s2195 + $0x88] sm:$0xf]
  %v2389 = vld [vmem:[%s2195 + $0x8c] sm:$0x1]
  %v2391 = vshrl.u32 %v2358, 16
  %v2393 = vrot.slane %v2391, 4
  %v2394 = vshll.u32 %v2358, 16
  %v2396 = vrot.slane %v2394, 5
  %v2397 = vor.u32 %v2393, %v2396
  %v2398 = vrot.slane %v2397, 4
  %v2400 = vshll.u32 %v2359, 16
  %v2402 = vrot.slane %v2400, 5
  %v2403 = vsel %vm695, %v2398, %v2402
  %v2405 = vshrl.u32 %v2360, 16
  %v2407 = vrot.slane %v2405, 4
  %v2408 = vshll.u32 %v2360, 16
  %v2410 = vrot.slane %v2408, 5
  %v2411 = vor.u32 %v2407, %v2410
  %v2412 = vrot.slane %v2411, 4
  %v2414 = vshll.u32 %v2361, 16
  %v2416 = vrot.slane %v2414, 5
  %v2417 = vsel %vm695, %v2412, %v2416
  %v2419 = vshrl.u32 %v2362, 16
  %v2421 = vrot.slane %v2419, 4
  %v2422 = vshll.u32 %v2362, 16
  %v2424 = vrot.slane %v2422, 5
  %v2425 = vor.u32 %v2421, %v2424
  %v2426 = vrot.slane %v2425, 4
  %v2428 = vshll.u32 %v2363, 16
  %v2430 = vrot.slane %v2428, 5
  %v2431 = vsel %vm695, %v2426, %v2430
  %v2433 = vshrl.u32 %v2364, 16
  %v2435 = vrot.slane %v2433, 4
  %v2436 = vshll.u32 %v2364, 16
  %v2438 = vrot.slane %v2436, 5
  %v2439 = vor.u32 %v2435, %v2438
  %v2440 = vrot.slane %v2439, 4
  %v2442 = vshll.u32 %v2365, 16
  %v2444 = vrot.slane %v2442, 5
  %v2445 = vsel %vm695, %v2440, %v2444
  %v2447 = vshrl.u32 %v2366, 16
  %v2449 = vrot.slane %v2447, 4
  %v2450 = vshll.u32 %v2366, 16
  %v2452 = vrot.slane %v2450, 5
  %v2453 = vor.u32 %v2449, %v2452
  %v2454 = vrot.slane %v2453, 4
  %v2456 = vshll.u32 %v2367, 16
  %v2458 = vrot.slane %v2456, 5
  %v2459 = vsel %vm695, %v2454, %v2458
  %v2461 = vshrl.u32 %v2368, 16
  %v2463 = vrot.slane %v2461, 4
  %v2464 = vshll.u32 %v2368, 16
  %v2466 = vrot.slane %v2464, 5
  %v2467 = vor.u32 %v2463, %v2466
  %v2468 = vrot.slane %v2467, 4
  %v2470 = vshll.u32 %v2369, 16
  %v2472 = vrot.slane %v2470, 5
  %v2473 = vsel %vm695, %v2468, %v2472
  %v2475 = vshrl.u32 %v2370, 16
  %v2477 = vrot.slane %v2475, 4
  %v2478 = vshll.u32 %v2370, 16
  %v2480 = vrot.slane %v2478, 5
  %v2481 = vor.u32 %v2477, %v2480
  %v2482 = vrot.slane %v2481, 4
  %v2484 = vshll.u32 %v2371, 16
  %v2486 = vrot.slane %v2484, 5
  %v2487 = vsel %vm695, %v2482, %v2486
  %v2489 = vshrl.u32 %v2372, 16
  %v2491 = vrot.slane %v2489, 4
  %v2492 = vshll.u32 %v2372, 16
  %v2494 = vrot.slane %v2492, 5
  %v2495 = vor.u32 %v2491, %v2494
  %v2496 = vrot.slane %v2495, 4
  %v2498 = vshll.u32 %v2373, 16
  %v2500 = vrot.slane %v2498, 5
  %v2501 = vsel %vm695, %v2496, %v2500
  %v2503 = vshrl.u32 %v2374, 16
  %v2505 = vrot.slane %v2503, 4
  %v2506 = vshll.u32 %v2374, 16
  %v2508 = vrot.slane %v2506, 5
  %v2509 = vor.u32 %v2505, %v2508
  %v2510 = vrot.slane %v2509, 4
  %v2512 = vshll.u32 %v2375, 16
  %v2514 = vrot.slane %v2512, 5
  %v2515 = vsel %vm695, %v2510, %v2514
  %v2517 = vshrl.u32 %v2376, 16
  %v2519 = vrot.slane %v2517, 4
  %v2520 = vshll.u32 %v2376, 16
  %v2522 = vrot.slane %v2520, 5
  %v2523 = vor.u32 %v2519, %v2522
  %v2524 = vrot.slane %v2523, 4
  %v2526 = vshll.u32 %v2377, 16
  %v2528 = vrot.slane %v2526, 5
  %v2529 = vsel %vm695, %v2524, %v2528
  %v2531 = vshrl.u32 %v2378, 16
  %v2533 = vrot.slane %v2531, 4
  %v2534 = vshll.u32 %v2378, 16
  %v2536 = vrot.slane %v2534, 5
  %v2537 = vor.u32 %v2533, %v2536
  %v2538 = vrot.slane %v2537, 4
  %v2540 = vshll.u32 %v2379, 16
  %v2542 = vrot.slane %v2540, 5
  %v2543 = vsel %vm695, %v2538, %v2542
  %v2545 = vshrl.u32 %v2380, 16
  %v2547 = vrot.slane %v2545, 4
  %v2548 = vshll.u32 %v2380, 16
  %v2550 = vrot.slane %v2548, 5
  %v2551 = vor.u32 %v2547, %v2550
  %v2552 = vrot.slane %v2551, 4
  %v2554 = vshll.u32 %v2381, 16
  %v2556 = vrot.slane %v2554, 5
  %v2557 = vsel %vm695, %v2552, %v2556
  %v2559 = vshrl.u32 %v2382, 16
  %v2561 = vrot.slane %v2559, 4
  %v2562 = vshll.u32 %v2382, 16
  %v2564 = vrot.slane %v2562, 5
  %v2565 = vor.u32 %v2561, %v2564
  %v2566 = vrot.slane %v2565, 4
  %v2568 = vshll.u32 %v2383, 16
  %v2570 = vrot.slane %v2568, 5
  %v2571 = vsel %vm695, %v2566, %v2570
  %v2573 = vshrl.u32 %v2384, 16
  %v2575 = vrot.slane %v2573, 4
  %v2576 = vshll.u32 %v2384, 16
  %v2578 = vrot.slane %v2576, 5
  %v2579 = vor.u32 %v2575, %v2578
  %v2580 = vrot.slane %v2579, 4
  %v2582 = vshll.u32 %v2385, 16
  %v2584 = vrot.slane %v2582, 5
  %v2585 = vsel %vm695, %v2580, %v2584
  %v2587 = vshrl.u32 %v2386, 16
  %v2589 = vrot.slane %v2587, 4
  %v2590 = vshll.u32 %v2386, 16
  %v2592 = vrot.slane %v2590, 5
  %v2593 = vor.u32 %v2589, %v2592
  %v2594 = vrot.slane %v2593, 4
  %v2596 = vshll.u32 %v2387, 16
  %v2598 = vrot.slane %v2596, 5
  %v2599 = vsel %vm695, %v2594, %v2598
  %v2601 = vshrl.u32 %v2388, 16
  %v2603 = vrot.slane %v2601, 4
  %v2604 = vshll.u32 %v2388, 16
  %v2606 = vrot.slane %v2604, 5
  %v2607 = vor.u32 %v2603, %v2606
  %v2608 = vrot.slane %v2607, 4
  %v2610 = vshll.u32 %v2389, 16
  %v2612 = vrot.slane %v2610, 5
  %v2613 = vsel %vm695, %v2608, %v2612
  %s2614 = scalar_lea.vmem %s3, 112
  %v2615 = vld [vmem:[%s2614] sm:$0xf]
  %v2616 = vld [vmem:[%s2614 + $0x4] sm:$0xf]
  %v2617 = vld [vmem:[%s2614 + $0x8] sm:$0xf]
  %v2618 = vld [vmem:[%s2614 + $0xc] sm:$0xf]
  %v2619 = vunpack.c.l.b16 %v2403
  %v2620 = vunpack.c.l.b16 %v2417
  %v2621 = vunpack.c.l.b16 %v2431
  %v2622 = vunpack.c.l.b16 %v2445
  %v2623 = vunpack.c.l.b16 %v2459
  %v2624 = vunpack.c.l.b16 %v2473
  %v2625 = vunpack.c.l.b16 %v2487
  %v2626 = vunpack.c.l.b16 %v2501
  %v2627 = vunpack.c.l.b16 %v2515
  %v2628 = vunpack.c.l.b16 %v2529
  %v2629 = vunpack.c.l.b16 %v2543
  %v2630 = vunpack.c.l.b16 %v2557
  %v2631 = vunpack.c.l.b16 %v2571
  %v2632 = vunpack.c.l.b16 %v2585
  %v2633 = vunpack.c.l.b16 %v2599
  %v2634 = vunpack.c.l.b16 %v2613
  %v2635 = vpack.c.b16 %v2620, %v2619
  %v2636 = vpack.c.b16 %v2622, %v2621
  %v2637 = vpack.c.b16 %v2624, %v2623
  %v2638 = vpack.c.b16 %v2626, %v2625
  %v2639 = vpack.c.b16 %v2628, %v2627
  %v2640 = vpack.c.b16 %v2630, %v2629
  %v2641 = vpack.c.b16 %v2632, %v2631
  %v2642 = vpack.c.b16 %v2634, %v2633
  %v2647 = vunpack.c.l.b16 %v2615
  %v2648 = vunpack.c.l.b16 %v2616
  %v2649 = vunpack.c.l.b16 %v2617
  %v2650 = vunpack.c.l.b16 %v2618
  %v2651 = vpack.c.b16 %v2648, %v2647
  %v2652 = vpack.c.b16 %v2650, %v2649
  %v2656 = vsel %vm961, %v2635, 0
  %v2659 = vsel %vm961, %v2636, 0
  %v2662 = vsel %vm961, %v2637, 0
  %v2665 = vsel %vm961, %v2638, 0
  %v2668 = vsel %vm961, %v2639, 0
  %v2671 = vsel %vm961, %v2640, 0
  %v2674 = vsel %vm961, %v2641, 0
  %v2677 = vsel %vm961, %v2642, 0
  %2679 = vmatpush.bf16.msra.mxu0 0
  %2680 = vmatpush.bf16.msra.mxu0 0
  %2681 = vmatpush.bf16.msra.mxu0 0
  %2682 = vmatpush.bf16.msra.mxu0 0
  %2683 = vmatpush.bf16.msra.mxu0 0
  %2684 = vmatpush.bf16.msra.mxu0 0
  %2685 = vmatpush.bf16.msra.mxu0 %v2652
  %2686 = vmatpush.bf16.msra.mxu0 %v2651
  %2687 = vmatmul.bf16.gmra.mxu0 %v2656
  %v2688 = vpop.f32.mrf.mxu0
  %v2689 = vadd.f32 0.0, %v2688
  %v2690 = vpop.f32.mrf.mxu0
  %v2691 = vadd.f32 0.0, %v2690
  %2692 = vmatmul.bf16.gmra.mxu0 %v2659
  %v2693 = vpop.f32.mrf.mxu0
  %v2694 = vadd.f32 0.0, %v2693
  %v2695 = vpop.f32.mrf.mxu0
  %v2696 = vadd.f32 0.0, %v2695
  %2697 = vmatmul.bf16.gmra.mxu0 %v2662
  %v2698 = vpop.f32.mrf.mxu0
  %v2699 = vadd.f32 0.0, %v2698
  %v2700 = vpop.f32.mrf.mxu0
  %v2701 = vadd.f32 0.0, %v2700
  %2702 = vmatmul.bf16.gmra.mxu0 %v2665
  %v2703 = vpop.f32.mrf.mxu0
  %v2704 = vadd.f32 0.0, %v2703
  %v2705 = vpop.f32.mrf.mxu0
  %v2706 = vadd.f32 0.0, %v2705
  %2707 = vmatmul.bf16.gmra.mxu0 %v2668
  %v2708 = vpop.f32.mrf.mxu0
  %v2709 = vadd.f32 0.0, %v2708
  %v2710 = vpop.f32.mrf.mxu0
  %v2711 = vadd.f32 0.0, %v2710
  %2712 = vmatmul.bf16.gmra.mxu0 %v2671
  %v2713 = vpop.f32.mrf.mxu0
  %v2714 = vadd.f32 0.0, %v2713
  %v2715 = vpop.f32.mrf.mxu0
  %v2716 = vadd.f32 0.0, %v2715
  %2717 = vmatmul.bf16.gmra.mxu0 %v2674
  %v2718 = vpop.f32.mrf.mxu0
  %v2719 = vadd.f32 0.0, %v2718
  %v2720 = vpop.f32.mrf.mxu0
  %v2721 = vadd.f32 0.0, %v2720
  %2722 = vmatmul.bf16.gmra.mxu0 %v2677
  %v2723 = vpop.f32.mrf.mxu0
  %v2724 = vadd.f32 0.0, %v2723
  %v2725 = vpop.f32.mrf.mxu0
  %v2726 = vadd.f32 0.0, %v2725
  %2727 = vdwg.mxu0
  %v2728 = vadd.f32 %v2342, %v2689
  %v2729 = vadd.f32 %v2343, %v2691
  %v2730 = vadd.f32 %v2344, %v2694
  %v2731 = vadd.f32 %v2345, %v2696
  %v2732 = vadd.f32 %v2346, %v2699
  %v2733 = vadd.f32 %v2347, %v2701
  %v2734 = vadd.f32 %v2348, %v2704
  %v2735 = vadd.f32 %v2349, %v2706
  %v2736 = vadd.f32 %v2350, %v2709
  %v2737 = vadd.f32 %v2351, %v2711
  %v2738 = vadd.f32 %v2352, %v2714
  %v2739 = vadd.f32 %v2353, %v2716
  %v2740 = vadd.f32 %v2354, %v2719
  %v2741 = vadd.f32 %v2355, %v2721
  %v2742 = vadd.f32 %v2356, %v2724
  %v2743 = vadd.f32 %v2357, %v2726
  %v2744 = vld [vmem:[%s2195] sm:$0xe]
  %v2745 = vld [vmem:[%s2195 + $0x8] sm:$0xe]
  %v2746 = vld [vmem:[%s2195 + $0x10] sm:$0xe]
  %v2747 = vld [vmem:[%s2195 + $0x18] sm:$0xe]
  %v2748 = vld [vmem:[%s2195 + $0x20] sm:$0xe]
  %v2749 = vld [vmem:[%s2195 + $0x28] sm:$0xe]
  %v2750 = vld [vmem:[%s2195 + $0x30] sm:$0xe]
  %v2751 = vld [vmem:[%s2195 + $0x38] sm:$0xe]
  %v2752 = vld [vmem:[%s2195 + $0x50] sm:$0xe]
  %v2753 = vld [vmem:[%s2195 + $0x58] sm:$0xe]
  %v2754 = vld [vmem:[%s2195 + $0x60] sm:$0xe]
  %v2755 = vld [vmem:[%s2195 + $0x68] sm:$0xe]
  %v2756 = vld [vmem:[%s2195 + $0x70] sm:$0xe]
  %v2757 = vld [vmem:[%s2195 + $0x78] sm:$0xe]
  %v2758 = vld [vmem:[%s2195 + $0x80] sm:$0xe]
  %v2759 = vld [vmem:[%s2195 + $0x88] sm:$0xe]
  %v2792 = vrot.slane %v2744, 5
  %v2793 = vrot.slane %v2792, 4
  %v2794 = vrot.slane %v2359, 5
  %v2795 = vsel %vm1210, %v2793, %v2794
  %v2796 = vrot.slane %v2745, 5
  %v2797 = vrot.slane %v2796, 4
  %v2798 = vrot.slane %v2361, 5
  %v2799 = vsel %vm1210, %v2797, %v2798
  %v2800 = vrot.slane %v2746, 5
  %v2801 = vrot.slane %v2800, 4
  %v2802 = vrot.slane %v2363, 5
  %v2803 = vsel %vm1210, %v2801, %v2802
  %v2804 = vrot.slane %v2747, 5
  %v2805 = vrot.slane %v2804, 4
  %v2806 = vrot.slane %v2365, 5
  %v2807 = vsel %vm1210, %v2805, %v2806
  %v2808 = vrot.slane %v2748, 5
  %v2809 = vrot.slane %v2808, 4
  %v2810 = vrot.slane %v2367, 5
  %v2811 = vsel %vm1210, %v2809, %v2810
  %v2812 = vrot.slane %v2749, 5
  %v2813 = vrot.slane %v2812, 4
  %v2814 = vrot.slane %v2369, 5
  %v2815 = vsel %vm1210, %v2813, %v2814
  %v2816 = vrot.slane %v2750, 5
  %v2817 = vrot.slane %v2816, 4
  %v2818 = vrot.slane %v2371, 5
  %v2819 = vsel %vm1210, %v2817, %v2818
  %v2820 = vrot.slane %v2751, 5
  %v2821 = vrot.slane %v2820, 4
  %v2822 = vrot.slane %v2373, 5
  %v2823 = vsel %vm1210, %v2821, %v2822
  %v2824 = vrot.slane %v2752, 5
  %v2825 = vrot.slane %v2824, 4
  %v2826 = vrot.slane %v2375, 5
  %v2827 = vsel %vm1210, %v2825, %v2826
  %v2828 = vrot.slane %v2753, 5
  %v2829 = vrot.slane %v2828, 4
  %v2830 = vrot.slane %v2377, 5
  %v2831 = vsel %vm1210, %v2829, %v2830
  %v2832 = vrot.slane %v2754, 5
  %v2833 = vrot.slane %v2832, 4
  %v2834 = vrot.slane %v2379, 5
  %v2835 = vsel %vm1210, %v2833, %v2834
  %v2836 = vrot.slane %v2755, 5
  %v2837 = vrot.slane %v2836, 4
  %v2838 = vrot.slane %v2381, 5
  %v2839 = vsel %vm1210, %v2837, %v2838
  %v2840 = vrot.slane %v2756, 5
  %v2841 = vrot.slane %v2840, 4
  %v2842 = vrot.slane %v2383, 5
  %v2843 = vsel %vm1210, %v2841, %v2842
  %v2844 = vrot.slane %v2757, 5
  %v2845 = vrot.slane %v2844, 4
  %v2846 = vrot.slane %v2385, 5
  %v2847 = vsel %vm1210, %v2845, %v2846
  %v2848 = vrot.slane %v2758, 5
  %v2849 = vrot.slane %v2848, 4
  %v2850 = vrot.slane %v2387, 5
  %v2851 = vsel %vm1210, %v2849, %v2850
  %v2852 = vrot.slane %v2759, 5
  %v2853 = vrot.slane %v2852, 4
  %v2854 = vrot.slane %v2389, 5
  %v2855 = vsel %vm1210, %v2853, %v2854
  %s2856 = scalar_lea.vmem %s3, 128
  %v2857 = vld [vmem:[%s2856] sm:$0xf]
  %v2858 = vld [vmem:[%s2856 + $0x4] sm:$0xf]
  %v2859 = vld [vmem:[%s2856 + $0x8] sm:$0xf]
  %v2860 = vld [vmem:[%s2856 + $0xc] sm:$0xf]
  %v2861 = vunpack.c.l.b16 %v2795
  %v2862 = vunpack.c.l.b16 %v2799
  %v2863 = vunpack.c.l.b16 %v2803
  %v2864 = vunpack.c.l.b16 %v2807
  %v2865 = vunpack.c.l.b16 %v2811
  %v2866 = vunpack.c.l.b16 %v2815
  %v2867 = vunpack.c.l.b16 %v2819
  %v2868 = vunpack.c.l.b16 %v2823
  %v2869 = vunpack.c.l.b16 %v2827
  %v2870 = vunpack.c.l.b16 %v2831
  %v2871 = vunpack.c.l.b16 %v2835
  %v2872 = vunpack.c.l.b16 %v2839
  %v2873 = vunpack.c.l.b16 %v2843
  %v2874 = vunpack.c.l.b16 %v2847
  %v2875 = vunpack.c.l.b16 %v2851
  %v2876 = vunpack.c.l.b16 %v2855
  %v2877 = vpack.c.b16 %v2862, %v2861
  %v2878 = vpack.c.b16 %v2864, %v2863
  %v2879 = vpack.c.b16 %v2866, %v2865
  %v2880 = vpack.c.b16 %v2868, %v2867
  %v2881 = vpack.c.b16 %v2870, %v2869
  %v2882 = vpack.c.b16 %v2872, %v2871
  %v2883 = vpack.c.b16 %v2874, %v2873
  %v2884 = vpack.c.b16 %v2876, %v2875
  %v2889 = vunpack.c.l.b16 %v2857
  %v2890 = vunpack.c.l.b16 %v2858
  %v2891 = vunpack.c.l.b16 %v2859
  %v2892 = vunpack.c.l.b16 %v2860
  %v2893 = vpack.c.b16 %v2890, %v2889
  %v2894 = vpack.c.b16 %v2892, %v2891
  %v2898 = vsel %vm961, %v2877, 0
  %v2901 = vsel %vm961, %v2878, 0
  %v2904 = vsel %vm961, %v2879, 0
  %v2907 = vsel %vm961, %v2880, 0
  %v2910 = vsel %vm961, %v2881, 0
  %v2913 = vsel %vm961, %v2882, 0
  %v2916 = vsel %vm961, %v2883, 0
  %v2919 = vsel %vm961, %v2884, 0
  %2921 = vmatpush.bf16.msra.mxu0 0
  %2922 = vmatpush.bf16.msra.mxu0 0
  %2923 = vmatpush.bf16.msra.mxu0 0
  %2924 = vmatpush.bf16.msra.mxu0 0
  %2925 = vmatpush.bf16.msra.mxu0 0
  %2926 = vmatpush.bf16.msra.mxu0 0
  %2927 = vmatpush.bf16.msra.mxu0 %v2894
  %2928 = vmatpush.bf16.msra.mxu0 %v2893
  %2929 = vmatmul.bf16.gmra.mxu0 %v2898
  %v2930 = vpop.f32.mrf.mxu0
  %v2931 = vadd.f32 0.0, %v2930
  %v2932 = vpop.f32.mrf.mxu0
  %v2933 = vadd.f32 0.0, %v2932
  %2934 = vmatmul.bf16.gmra.mxu0 %v2901
  %v2935 = vpop.f32.mrf.mxu0
  %v2936 = vadd.f32 0.0, %v2935
  %v2937 = vpop.f32.mrf.mxu0
  %v2938 = vadd.f32 0.0, %v2937
  %2939 = vmatmul.bf16.gmra.mxu0 %v2904
  %v2940 = vpop.f32.mrf.mxu0
  %v2941 = vadd.f32 0.0, %v2940
  %v2942 = vpop.f32.mrf.mxu0
  %v2943 = vadd.f32 0.0, %v2942
  %2944 = vmatmul.bf16.gmra.mxu0 %v2907
  %v2945 = vpop.f32.mrf.mxu0
  %v2946 = vadd.f32 0.0, %v2945
  %v2947 = vpop.f32.mrf.mxu0
  %v2948 = vadd.f32 0.0, %v2947
  %2949 = vmatmul.bf16.gmra.mxu0 %v2910
  %v2950 = vpop.f32.mrf.mxu0
  %v2951 = vadd.f32 0.0, %v2950
  %v2952 = vpop.f32.mrf.mxu0
  %v2953 = vadd.f32 0.0, %v2952
  %2954 = vmatmul.bf16.gmra.mxu0 %v2913
  %v2955 = vpop.f32.mrf.mxu0
  %v2956 = vadd.f32 0.0, %v2955
  %v2957 = vpop.f32.mrf.mxu0
  %v2958 = vadd.f32 0.0, %v2957
  %2959 = vmatmul.bf16.gmra.mxu0 %v2916
  %v2960 = vpop.f32.mrf.mxu0
  %v2961 = vadd.f32 0.0, %v2960
  %v2962 = vpop.f32.mrf.mxu0
  %v2963 = vadd.f32 0.0, %v2962
  %2964 = vmatmul.bf16.gmra.mxu0 %v2919
  %v2965 = vpop.f32.mrf.mxu0
  %v2966 = vadd.f32 0.0, %v2965
  %v2967 = vpop.f32.mrf.mxu0
  %v2968 = vadd.f32 0.0, %v2967
  %2969 = vdwg.mxu0
  %v2970 = vadd.f32 %v2728, %v2931
  %v2971 = vadd.f32 %v2729, %v2933
  %v2972 = vadd.f32 %v2730, %v2936
  %v2973 = vadd.f32 %v2731, %v2938
  %v2974 = vadd.f32 %v2732, %v2941
  %v2975 = vadd.f32 %v2733, %v2943
  %v2976 = vadd.f32 %v2734, %v2946
  %v2977 = vadd.f32 %v2735, %v2948
  %v2978 = vadd.f32 %v2736, %v2951
  %v2979 = vadd.f32 %v2737, %v2953
  %v2980 = vadd.f32 %v2738, %v2956
  %v2981 = vadd.f32 %v2739, %v2958
  %v2982 = vadd.f32 %v2740, %v2961
  %v2983 = vadd.f32 %v2741, %v2963
  %v2984 = vadd.f32 %v2742, %v2966
  %v2985 = vadd.f32 %v2743, %v2968
  %v2986 = vld [vmem:[%s4] sm:$0x1]
  %v2988 = vperm.slane %v2986, 0
  %v2990 = vmul.f32 %v2970, %v2988
  %v2991 = vmul.f32 %v2971, %v2988
  %v2992 = vmul.f32 %v2972, %v2988
  %v2993 = vmul.f32 %v2973, %v2988
  %v2994 = vmul.f32 %v2974, %v2988
  %v2995 = vmul.f32 %v2975, %v2988
  %v2996 = vmul.f32 %v2976, %v2988
  %v2997 = vmul.f32 %v2977, %v2988
  %v2998 = vmul.f32 %v2978, %v2988
  %v2999 = vmul.f32 %v2979, %v2988
  %v3000 = vmul.f32 %v2980, %v2988
  %v3001 = vmul.f32 %v2981, %v2988
  %v3002 = vmul.f32 %v2982, %v2988
  %v3003 = vmul.f32 %v2983, %v2988
  %v3004 = vmul.f32 %v2984, %v2988
  %v3005 = vmul.f32 %v2985, %v2988
  %v3006 = vld [vmem:[%s5] sm:$0x1]
  %v3008 = vperm.slane %v3006, 0
  %v3010 = vadd.f32 %v2990, %v3008
  %v3011 = vadd.f32 %v2991, %v3008
  %v3012 = vadd.f32 %v2992, %v3008
  %v3013 = vadd.f32 %v2993, %v3008
  %v3014 = vadd.f32 %v2994, %v3008
  %v3015 = vadd.f32 %v2995, %v3008
  %v3016 = vadd.f32 %v2996, %v3008
  %v3017 = vadd.f32 %v2997, %v3008
  %v3018 = vadd.f32 %v2998, %v3008
  %v3019 = vadd.f32 %v2999, %v3008
  %v3020 = vadd.f32 %v3000, %v3008
  %v3021 = vadd.f32 %v3001, %v3008
  %v3022 = vadd.f32 %v3002, %v3008
  %v3023 = vadd.f32 %v3003, %v3008
  %v3024 = vadd.f32 %v3004, %v3008
  %v3025 = vadd.f32 %v3005, %v3008
  %v3026 = vmax.f32 %v3010, 0.0
  %v3027 = vmax.f32 %v3011, 0.0
  %v3028 = vmax.f32 %v3012, 0.0
  %v3029 = vmax.f32 %v3013, 0.0
  %v3030 = vmax.f32 %v3014, 0.0
  %v3031 = vmax.f32 %v3015, 0.0
  %v3032 = vmax.f32 %v3016, 0.0
  %v3033 = vmax.f32 %v3017, 0.0
  %v3034 = vmax.f32 %v3018, 0.0
  %v3035 = vmax.f32 %v3019, 0.0
  %v3036 = vmax.f32 %v3020, 0.0
  %v3037 = vmax.f32 %v3021, 0.0
  %v3038 = vmax.f32 %v3022, 0.0
  %v3039 = vmax.f32 %v3023, 0.0
  %v3040 = vmax.f32 %v3024, 0.0
  %v3041 = vmax.f32 %v3025, 0.0
  %v3042 = vpack.c.bf16 %v3026, %v3026
  %v3043 = vpack.c.bf16 %v3027, %v3027
  %v3044 = vpack.c.bf16 %v3028, %v3028
  %v3045 = vpack.c.bf16 %v3029, %v3029
  %v3046 = vpack.c.bf16 %v3030, %v3030
  %v3047 = vpack.c.bf16 %v3031, %v3031
  %v3048 = vpack.c.bf16 %v3032, %v3032
  %v3049 = vpack.c.bf16 %v3033, %v3033
  %v3050 = vpack.c.bf16 %v3034, %v3034
  %v3051 = vpack.c.bf16 %v3035, %v3035
  %v3052 = vpack.c.bf16 %v3036, %v3036
  %v3053 = vpack.c.bf16 %v3037, %v3037
  %v3054 = vpack.c.bf16 %v3038, %v3038
  %v3055 = vpack.c.bf16 %v3039, %v3039
  %v3056 = vpack.c.bf16 %v3040, %v3040
  %v3057 = vpack.c.bf16 %v3041, %v3041
  %v3059 = vshrl.u32 %v3042, 16
  %v3061 = vrot.slane %v3059, 7
  %v3062 = vshll.u32 %v3042, 16
  %v3064 = vor.u32 %v3061, %v3062
  %v3065 = vrot.slane %v3061, 4
  %v3067 = vshrl.u32 %v3043, 16
  %v3069 = vrot.slane %v3067, 7
  %v3070 = vshll.u32 %v3043, 16
  %v3072 = vor.u32 %v3069, %v3070
  %v3073 = vrot.slane %v3069, 4
  %v3075 = vshrl.u32 %v3044, 16
  %v3077 = vrot.slane %v3075, 7
  %v3078 = vshll.u32 %v3044, 16
  %v3080 = vor.u32 %v3077, %v3078
  %v3081 = vrot.slane %v3077, 4
  %v3083 = vshrl.u32 %v3045, 16
  %v3085 = vrot.slane %v3083, 7
  %v3086 = vshll.u32 %v3045, 16
  %v3088 = vor.u32 %v3085, %v3086
  %v3089 = vrot.slane %v3085, 4
  %v3091 = vshrl.u32 %v3046, 16
  %v3093 = vrot.slane %v3091, 7
  %v3094 = vshll.u32 %v3046, 16
  %v3096 = vor.u32 %v3093, %v3094
  %v3097 = vrot.slane %v3093, 4
  %v3099 = vshrl.u32 %v3047, 16
  %v3101 = vrot.slane %v3099, 7
  %v3102 = vshll.u32 %v3047, 16
  %v3104 = vor.u32 %v3101, %v3102
  %v3105 = vrot.slane %v3101, 4
  %v3107 = vshrl.u32 %v3048, 16
  %v3109 = vrot.slane %v3107, 7
  %v3110 = vshll.u32 %v3048, 16
  %v3112 = vor.u32 %v3109, %v3110
  %v3113 = vrot.slane %v3109, 4
  %v3115 = vshrl.u32 %v3049, 16
  %v3117 = vrot.slane %v3115, 7
  %v3118 = vshll.u32 %v3049, 16
  %v3120 = vor.u32 %v3117, %v3118
  %v3121 = vrot.slane %v3117, 4
  %v3123 = vshrl.u32 %v3050, 16
  %v3125 = vrot.slane %v3123, 7
  %v3126 = vshll.u32 %v3050, 16
  %v3128 = vor.u32 %v3125, %v3126
  %v3129 = vrot.slane %v3125, 4
  %v3131 = vshrl.u32 %v3051, 16
  %v3133 = vrot.slane %v3131, 7
  %v3134 = vshll.u32 %v3051, 16
  %v3136 = vor.u32 %v3133, %v3134
  %v3137 = vrot.slane %v3133, 4
  %v3139 = vshrl.u32 %v3052, 16
  %v3141 = vrot.slane %v3139, 7
  %v3142 = vshll.u32 %v3052, 16
  %v3144 = vor.u32 %v3141, %v3142
  %v3145 = vrot.slane %v3141, 4
  %v3147 = vshrl.u32 %v3053, 16
  %v3149 = vrot.slane %v3147, 7
  %v3150 = vshll.u32 %v3053, 16
  %v3152 = vor.u32 %v3149, %v3150
  %v3153 = vrot.slane %v3149, 4
  %v3155 = vshrl.u32 %v3054, 16
  %v3157 = vrot.slane %v3155, 7
  %v3158 = vshll.u32 %v3054, 16
  %v3160 = vor.u32 %v3157, %v3158
  %v3161 = vrot.slane %v3157, 4
  %v3163 = vshrl.u32 %v3055, 16
  %v3165 = vrot.slane %v3163, 7
  %v3166 = vshll.u32 %v3055, 16
  %v3168 = vor.u32 %v3165, %v3166
  %v3169 = vrot.slane %v3165, 4
  %v3171 = vshrl.u32 %v3056, 16
  %v3173 = vrot.slane %v3171, 7
  %v3174 = vshll.u32 %v3056, 16
  %v3176 = vor.u32 %v3173, %v3174
  %v3177 = vrot.slane %v3173, 4
  %v3179 = vshrl.u32 %v3057, 16
  %v3181 = vrot.slane %v3179, 7
  %v3182 = vshll.u32 %v3057, 16
  %v3184 = vor.u32 %v3181, %v3182
  %v3185 = vrot.slane %v3181, 4
  %s3218 = scalar_lea.vmem [#allocation3], 8
  %vm3219 = vcmask 1043456
  %vm3220 = vmand %vm3219, %vm424
  %v3221 = vld [vmem:[%s3218] sm:$0xf]
  %v3222 = vsel %vm3220, %v3064, %v3221
  %3223 = vst [vmem:[%s3218] sm:$0xf] %v3222
  %vm3224 = vcmask 1040384
  %vm3225 = vmand %vm3224, %vm430
  %v3226 = vld [vmem:[%s3218 + $0x4] sm:$0x1]
  %v3227 = vsel %vm3225, %v3065, %v3226
  %3228 = vst [vmem:[%s3218 + $0x4] sm:$0x1] %v3227
  %v3229 = vld [vmem:[%s3218 + $0x8] sm:$0xf]
  %v3230 = vsel %vm3220, %v3072, %v3229
  %3231 = vst [vmem:[%s3218 + $0x8] sm:$0xf] %v3230
  %v3232 = vld [vmem:[%s3218 + $0xc] sm:$0x1]
  %v3233 = vsel %vm3225, %v3073, %v3232
  %3234 = vst [vmem:[%s3218 + $0xc] sm:$0x1] %v3233
  %v3235 = vld [vmem:[%s3218 + $0x10] sm:$0xf]
  %v3236 = vsel %vm3220, %v3080, %v3235
  %3237 = vst [vmem:[%s3218 + $0x10] sm:$0xf] %v3236
  %v3238 = vld [vmem:[%s3218 + $0x14] sm:$0x1]
  %v3239 = vsel %vm3225, %v3081, %v3238
  %3240 = vst [vmem:[%s3218 + $0x14] sm:$0x1] %v3239
  %v3241 = vld [vmem:[%s3218 + $0x18] sm:$0xf]
  %v3242 = vsel %vm3220, %v3088, %v3241
  %3243 = vst [vmem:[%s3218 + $0x18] sm:$0xf] %v3242
  %v3244 = vld [vmem:[%s3218 + $0x1c] sm:$0x1]
  %v3245 = vsel %vm3225, %v3089, %v3244
  %3246 = vst [vmem:[%s3218 + $0x1c] sm:$0x1] %v3245
  %v3247 = vld [vmem:[%s3218 + $0x20] sm:$0xf]
  %v3248 = vsel %vm3220, %v3096, %v3247
  %3249 = vst [vmem:[%s3218 + $0x20] sm:$0xf] %v3248
  %v3250 = vld [vmem:[%s3218 + $0x24] sm:$0x1]
  %v3251 = vsel %vm3225, %v3097, %v3250
  %3252 = vst [vmem:[%s3218 + $0x24] sm:$0x1] %v3251
  %v3253 = vld [vmem:[%s3218 + $0x28] sm:$0xf]
  %v3254 = vsel %vm3220, %v3104, %v3253
  %3255 = vst [vmem:[%s3218 + $0x28] sm:$0xf] %v3254
  %v3256 = vld [vmem:[%s3218 + $0x2c] sm:$0x1]
  %v3257 = vsel %vm3225, %v3105, %v3256
  %3258 = vst [vmem:[%s3218 + $0x2c] sm:$0x1] %v3257
  %v3259 = vld [vmem:[%s3218 + $0x30] sm:$0xf]
  %v3260 = vsel %vm3220, %v3112, %v3259
  %3261 = vst [vmem:[%s3218 + $0x30] sm:$0xf] %v3260
  %v3262 = vld [vmem:[%s3218 + $0x34] sm:$0x1]
  %v3263 = vsel %vm3225, %v3113, %v3262
  %3264 = vst [vmem:[%s3218 + $0x34] sm:$0x1] %v3263
  %v3265 = vld [vmem:[%s3218 + $0x38] sm:$0xf]
  %v3266 = vsel %vm3220, %v3120, %v3265
  %3267 = vst [vmem:[%s3218 + $0x38] sm:$0xf] %v3266
  %v3268 = vld [vmem:[%s3218 + $0x3c] sm:$0x1]
  %v3269 = vsel %vm3225, %v3121, %v3268
  %3270 = vst [vmem:[%s3218 + $0x3c] sm:$0x1] %v3269
  %v3271 = vld [vmem:[%s3218 + $0x50] sm:$0xf]
  %v3272 = vsel %vm3220, %v3128, %v3271
  %3273 = vst [vmem:[%s3218 + $0x50] sm:$0xf] %v3272
  %v3274 = vld [vmem:[%s3218 + $0x54] sm:$0x1]
  %v3275 = vsel %vm3225, %v3129, %v3274
  %3276 = vst [vmem:[%s3218 + $0x54] sm:$0x1] %v3275
  %v3277 = vld [vmem:[%s3218 + $0x58] sm:$0xf]
  %v3278 = vsel %vm3220, %v3136, %v3277
  %3279 = vst [vmem:[%s3218 + $0x58] sm:$0xf] %v3278
  %v3280 = vld [vmem:[%s3218 + $0x5c] sm:$0x1]
  %v3281 = vsel %vm3225, %v3137, %v3280
  %3282 = vst [vmem:[%s3218 + $0x5c] sm:$0x1] %v3281
  %v3283 = vld [vmem:[%s3218 + $0x60] sm:$0xf]
  %v3284 = vsel %vm3220, %v3144, %v3283
  %3285 = vst [vmem:[%s3218 + $0x60] sm:$0xf] %v3284
  %v3286 = vld [vmem:[%s3218 + $0x64] sm:$0x1]
  %v3287 = vsel %vm3225, %v3145, %v3286
  %3288 = vst [vmem:[%s3218 + $0x64] sm:$0x1] %v3287
  %v3289 = vld [vmem:[%s3218 + $0x68] sm:$0xf]
  %v3290 = vsel %vm3220, %v3152, %v3289
  %3291 = vst [vmem:[%s3218 + $0x68] sm:$0xf] %v3290
  %v3292 = vld [vmem:[%s3218 + $0x6c] sm:$0x1]
  %v3293 = vsel %vm3225, %v3153, %v3292
  %3294 = vst [vmem:[%s3218 + $0x6c] sm:$0x1] %v3293
  %v3295 = vld [vmem:[%s3218 + $0x70] sm:$0xf]
  %v3296 = vsel %vm3220, %v3160, %v3295
  %3297 = vst [vmem:[%s3218 + $0x70] sm:$0xf] %v3296
  %v3298 = vld [vmem:[%s3218 + $0x74] sm:$0x1]
  %v3299 = vsel %vm3225, %v3161, %v3298
  %3300 = vst [vmem:[%s3218 + $0x74] sm:$0x1] %v3299
  %v3301 = vld [vmem:[%s3218 + $0x78] sm:$0xf]
  %v3302 = vsel %vm3220, %v3168, %v3301
  %3303 = vst [vmem:[%s3218 + $0x78] sm:$0xf] %v3302
  %v3304 = vld [vmem:[%s3218 + $0x7c] sm:$0x1]
  %v3305 = vsel %vm3225, %v3169, %v3304
  %3306 = vst [vmem:[%s3218 + $0x7c] sm:$0x1] %v3305
  %v3307 = vld [vmem:[%s3218 + $0x80] sm:$0xf]
  %v3308 = vsel %vm3220, %v3176, %v3307
  %3309 = vst [vmem:[%s3218 + $0x80] sm:$0xf] %v3308
  %v3310 = vld [vmem:[%s3218 + $0x84] sm:$0x1]
  %v3311 = vsel %vm3225, %v3177, %v3310
  %3312 = vst [vmem:[%s3218 + $0x84] sm:$0x1] %v3311
  %v3313 = vld [vmem:[%s3218 + $0x88] sm:$0xf]
  %v3314 = vsel %vm3220, %v3184, %v3313
  %3315 = vst [vmem:[%s3218 + $0x88] sm:$0xf] %v3314
  %v3316 = vld [vmem:[%s3218 + $0x8c] sm:$0x1]
  %v3317 = vsel %vm3225, %v3185, %v3316
  %3318 = vst [vmem:[%s3218 + $0x8c] sm:$0x1] %v3317
  %3319 = vst [vmem:[#allocation3] sm:$0xf] 0
  %3320 = vst [vmem:[#allocation3 + $0x4] sm:$0x1] 0
  %3321 = vst [vmem:[#allocation3 + $0x50] sm:$0xf] 0
  %3322 = vst [vmem:[#allocation3 + $0x54] sm:$0x1] 0
  %s3323 = scalar_lea.vmem [#allocation3], 72
  %3324 = vst [vmem:[%s3323] sm:$0xf] 0
  %3325 = vst [vmem:[%s3323 + $0x4] sm:$0x1] 0
  %3326 = vst [vmem:[%s3323 + $0x50] sm:$0xf] 0
  %3327 = vst [vmem:[%s3323 + $0x54] sm:$0x1] 0
  %v3328 = vld [vmem:[#allocation3] sm:$0x1]
  %v3329 = vsel %vm3225, 0, %v3328
  %3330 = vst [vmem:[#allocation3] sm:$0x1] %v3329
  %v3331 = vld [vmem:[#allocation3 + $0x8] sm:$0x1]
  %v3332 = vsel %vm3225, 0, %v3331
  %3333 = vst [vmem:[#allocation3 + $0x8] sm:$0x1] %v3332
  %v3334 = vld [vmem:[#allocation3 + $0x10] sm:$0x1]
  %v3335 = vsel %vm3225, 0, %v3334
  %3336 = vst [vmem:[#allocation3 + $0x10] sm:$0x1] %v3335
  %v3337 = vld [vmem:[#allocation3 + $0x18] sm:$0x1]
  %v3338 = vsel %vm3225, 0, %v3337
  %3339 = vst [vmem:[#allocation3 + $0x18] sm:$0x1] %v3338
  %v3340 = vld [vmem:[#allocation3 + $0x20] sm:$0x1]
  %v3341 = vsel %vm3225, 0, %v3340
  %3342 = vst [vmem:[#allocation3 + $0x20] sm:$0x1] %v3341
  %v3343 = vld [vmem:[#allocation3 + $0x28] sm:$0x1]
  %v3344 = vsel %vm3225, 0, %v3343
  %3345 = vst [vmem:[#allocation3 + $0x28] sm:$0x1] %v3344
  %v3346 = vld [vmem:[#allocation3 + $0x30] sm:$0x1]
  %v3347 = vsel %vm3225, 0, %v3346
  %3348 = vst [vmem:[#allocation3 + $0x30] sm:$0x1] %v3347
  %v3349 = vld [vmem:[#allocation3 + $0x38] sm:$0x1]
  %v3350 = vsel %vm3225, 0, %v3349
  %3351 = vst [vmem:[#allocation3 + $0x38] sm:$0x1] %v3350
  %v3352 = vld [vmem:[#allocation3 + $0x40] sm:$0x1]
  %v3353 = vsel %vm3225, 0, %v3352
  %3354 = vst [vmem:[#allocation3 + $0x40] sm:$0x1] %v3353
  %v3355 = vld [vmem:[#allocation3 + $0x48] sm:$0x1]
  %v3356 = vsel %vm3225, 0, %v3355
  %3357 = vst [vmem:[#allocation3 + $0x48] sm:$0x1] %v3356
  %v3358 = vld [vmem:[#allocation3 + $0x50] sm:$0x1]
  %v3359 = vsel %vm3225, 0, %v3358
  %3360 = vst [vmem:[#allocation3 + $0x50] sm:$0x1] %v3359
  %v3361 = vld [vmem:[#allocation3 + $0x58] sm:$0x1]
  %v3362 = vsel %vm3225, 0, %v3361
  %3363 = vst [vmem:[#allocation3 + $0x58] sm:$0x1] %v3362
  %v3364 = vld [vmem:[#allocation3 + $0x60] sm:$0x1]
  %v3365 = vsel %vm3225, 0, %v3364
  %3366 = vst [vmem:[#allocation3 + $0x60] sm:$0x1] %v3365
  %v3367 = vld [vmem:[#allocation3 + $0x68] sm:$0x1]
  %v3368 = vsel %vm3225, 0, %v3367
  %3369 = vst [vmem:[#allocation3 + $0x68] sm:$0x1] %v3368
  %v3370 = vld [vmem:[#allocation3 + $0x70] sm:$0x1]
  %v3371 = vsel %vm3225, 0, %v3370
  %3372 = vst [vmem:[#allocation3 + $0x70] sm:$0x1] %v3371
  %v3373 = vld [vmem:[#allocation3 + $0x78] sm:$0x1]
  %v3374 = vsel %vm3225, 0, %v3373
  %3375 = vst [vmem:[#allocation3 + $0x78] sm:$0x1] %v3374
  %v3376 = vld [vmem:[#allocation3 + $0x80] sm:$0x1]
  %v3377 = vsel %vm3225, 0, %v3376
  %3378 = vst [vmem:[#allocation3 + $0x80] sm:$0x1] %v3377
  %v3379 = vld [vmem:[#allocation3 + $0x88] sm:$0x1]
  %v3380 = vsel %vm3225, 0, %v3379
  %3381 = vst [vmem:[#allocation3 + $0x88] sm:$0x1] %v3380
  %v3382 = vld [vmem:[#allocation3 + $0x90] sm:$0x1]
  %v3383 = vsel %vm3225, 0, %v3382
  %3384 = vst [vmem:[#allocation3 + $0x90] sm:$0x1] %v3383
  %v3385 = vld [vmem:[#allocation3 + $0x98] sm:$0x1]
  %v3386 = vsel %vm3225, 0, %v3385
  %3387 = vst [vmem:[#allocation3 + $0x98] sm:$0x1] %v3386
  %vm3388 = vmand %vm3224, %vm424
  %v3389 = vld [vmem:[#allocation3 + $0x4] sm:$0x1]
  %v3390 = vsel %vm3388, 0, %v3389
  %3391 = vst [vmem:[#allocation3 + $0x4] sm:$0x1] %v3390
  %v3392 = vld [vmem:[#allocation3 + $0xc] sm:$0x1]
  %v3393 = vsel %vm3388, 0, %v3392
  %3394 = vst [vmem:[#allocation3 + $0xc] sm:$0x1] %v3393
  %v3395 = vld [vmem:[#allocation3 + $0x14] sm:$0x1]
  %v3396 = vsel %vm3388, 0, %v3395
  %3397 = vst [vmem:[#allocation3 + $0x14] sm:$0x1] %v3396
  %v3398 = vld [vmem:[#allocation3 + $0x1c] sm:$0x1]
  %v3399 = vsel %vm3388, 0, %v3398
  %3400 = vst [vmem:[#allocation3 + $0x1c] sm:$0x1] %v3399
  %v3401 = vld [vmem:[#allocation3 + $0x24] sm:$0x1]
  %v3402 = vsel %vm3388, 0, %v3401
  %3403 = vst [vmem:[#allocation3 + $0x24] sm:$0x1] %v3402
  %v3404 = vld [vmem:[#allocation3 + $0x2c] sm:$0x1]
  %v3405 = vsel %vm3388, 0, %v3404
  %3406 = vst [vmem:[#allocation3 + $0x2c] sm:$0x1] %v3405
  %v3407 = vld [vmem:[#allocation3 + $0x34] sm:$0x1]
  %v3408 = vsel %vm3388, 0, %v3407
  %3409 = vst [vmem:[#allocation3 + $0x34] sm:$0x1] %v3408
  %v3410 = vld [vmem:[#allocation3 + $0x3c] sm:$0x1]
  %v3411 = vsel %vm3388, 0, %v3410
  %3412 = vst [vmem:[#allocation3 + $0x3c] sm:$0x1] %v3411
  %v3413 = vld [vmem:[#allocation3 + $0x44] sm:$0x1]
  %v3414 = vsel %vm3388, 0, %v3413
  %3415 = vst [vmem:[#allocation3 + $0x44] sm:$0x1] %v3414
  %v3416 = vld [vmem:[#allocation3 + $0x4c] sm:$0x1]
  %v3417 = vsel %vm3388, 0, %v3416
  %3418 = vst [vmem:[#allocation3 + $0x4c] sm:$0x1] %v3417
  %v3419 = vld [vmem:[#allocation3 + $0x54] sm:$0x1]
  %v3420 = vsel %vm3388, 0, %v3419
  %3421 = vst [vmem:[#allocation3 + $0x54] sm:$0x1] %v3420
  %v3422 = vld [vmem:[#allocation3 + $0x5c] sm:$0x1]
  %v3423 = vsel %vm3388, 0, %v3422
  %3424 = vst [vmem:[#allocation3 + $0x5c] sm:$0x1] %v3423
  %v3425 = vld [vmem:[#allocation3 + $0x64] sm:$0x1]
  %v3426 = vsel %vm3388, 0, %v3425
  %3427 = vst [vmem:[#allocation3 + $0x64] sm:$0x1] %v3426
  %v3428 = vld [vmem:[#allocation3 + $0x6c] sm:$0x1]
  %v3429 = vsel %vm3388, 0, %v3428
  %3430 = vst [vmem:[#allocation3 + $0x6c] sm:$0x1] %v3429
  %v3431 = vld [vmem:[#allocation3 + $0x74] sm:$0x1]
  %v3432 = vsel %vm3388, 0, %v3431
  %3433 = vst [vmem:[#allocation3 + $0x74] sm:$0x1] %v3432
  %v3434 = vld [vmem:[#allocation3 + $0x7c] sm:$0x1]
  %v3435 = vsel %vm3388, 0, %v3434
  %3436 = vst [vmem:[#allocation3 + $0x7c] sm:$0x1] %v3435
  %v3437 = vld [vmem:[#allocation3 + $0x84] sm:$0x1]
  %v3438 = vsel %vm3388, 0, %v3437
  %3439 = vst [vmem:[#allocation3 + $0x84] sm:$0x1] %v3438
  %v3440 = vld [vmem:[#allocation3 + $0x8c] sm:$0x1]
  %v3441 = vsel %vm3388, 0, %v3440
  %3442 = vst [vmem:[#allocation3 + $0x8c] sm:$0x1] %v3441
  %v3443 = vld [vmem:[#allocation3 + $0x94] sm:$0x1]
  %v3444 = vsel %vm3388, 0, %v3443
  %3445 = vst [vmem:[#allocation3 + $0x94] sm:$0x1] %v3444
  %v3446 = vld [vmem:[#allocation3 + $0x9c] sm:$0x1]
  %v3447 = vsel %vm3388, 0, %v3446
  %3448 = vst [vmem:[#allocation3 + $0x9c] sm:$0x1] %v3447
  %v3449 = vld [vmem:[#allocation3] sm:$0xf]
  %v3450 = vld [vmem:[#allocation3 + $0x8] sm:$0xf]
  %v3451 = vld [vmem:[#allocation3 + $0x10] sm:$0xf]
  %v3452 = vld [vmem:[#allocation3 + $0x18] sm:$0xf]
  %v3453 = vld [vmem:[#allocation3 + $0x20] sm:$0xf]
  %v3454 = vld [vmem:[#allocation3 + $0x28] sm:$0xf]
  %v3455 = vld [vmem:[#allocation3 + $0x30] sm:$0xf]
  %v3456 = vld [vmem:[#allocation3 + $0x38] sm:$0xf]
  %v3457 = vld [vmem:[#allocation3 + $0x50] sm:$0xf]
  %v3458 = vld [vmem:[#allocation3 + $0x58] sm:$0xf]
  %v3459 = vld [vmem:[#allocation3 + $0x60] sm:$0xf]
  %v3460 = vld [vmem:[#allocation3 + $0x68] sm:$0xf]
  %v3461 = vld [vmem:[#allocation3 + $0x70] sm:$0xf]
  %v3462 = vld [vmem:[#allocation3 + $0x78] sm:$0xf]
  %v3463 = vld [vmem:[#allocation3 + $0x80] sm:$0xf]
  %v3464 = vld [vmem:[#allocation3 + $0x88] sm:$0xf]
  %v3465 = vld [vmem:[%s6] sm:$0xf]
  %v3466 = vld [vmem:[%s6 + $0x4] sm:$0xf]
  %v3467 = vld [vmem:[%s6 + $0x8] sm:$0xf]
  %v3468 = vld [vmem:[%s6 + $0xc] sm:$0xf]
  %v3469 = vld [vmem:[%s6 + $0x10] sm:$0xf]
  %v3470 = vld [vmem:[%s6 + $0x14] sm:$0xf]
  %v3471 = vld [vmem:[%s6 + $0x18] sm:$0xf]
  %v3472 = vld [vmem:[%s6 + $0x1c] sm:$0xf]
  %v3473 = vld [vmem:[%s6 + $0x20] sm:$0xf]
  %v3474 = vld [vmem:[%s6 + $0x24] sm:$0xf]
  %v3475 = vld [vmem:[%s6 + $0x28] sm:$0xf]
  %v3476 = vld [vmem:[%s6 + $0x2c] sm:$0xf]
  %v3477 = vld [vmem:[%s6 + $0x30] sm:$0xf]
  %v3478 = vld [vmem:[%s6 + $0x34] sm:$0xf]
  %v3479 = vld [vmem:[%s6 + $0x38] sm:$0xf]
  %v3480 = vld [vmem:[%s6 + $0x3c] sm:$0xf]
  %v3481 = vld [vmem:[#allocation3 + $0x4] sm:$0x1]
  %v3482 = vld [vmem:[#allocation3 + $0xc] sm:$0x1]
  %v3483 = vld [vmem:[#allocation3 + $0x14] sm:$0x1]
  %v3484 = vld [vmem:[#allocation3 + $0x1c] sm:$0x1]
  %v3485 = vld [vmem:[#allocation3 + $0x24] sm:$0x1]
  %v3486 = vld [vmem:[#allocation3 + $0x2c] sm:$0x1]
  %v3487 = vld [vmem:[#allocation3 + $0x34] sm:$0x1]
  %v3488 = vld [vmem:[#allocation3 + $0x3c] sm:$0x1]
  %v3489 = vld [vmem:[#allocation3 + $0x54] sm:$0x1]
  %v3490 = vld [vmem:[#allocation3 + $0x5c] sm:$0x1]
  %v3491 = vld [vmem:[#allocation3 + $0x64] sm:$0x1]
  %v3492 = vld [vmem:[#allocation3 + $0x6c] sm:$0x1]
  %v3493 = vld [vmem:[#allocation3 + $0x74] sm:$0x1]
  %v3494 = vld [vmem:[#allocation3 + $0x7c] sm:$0x1]
  %v3495 = vld [vmem:[#allocation3 + $0x84] sm:$0x1]
  %v3496 = vld [vmem:[#allocation3 + $0x8c] sm:$0x1]
  %v3498 = vshrl.u32 %v3449, 16
  %v3500 = vrot.slane %v3498, 4
  %v3501 = vshll.u32 %v3449, 16
  %v3503 = vrot.slane %v3501, 5
  %v3504 = vor.u32 %v3500, %v3503
  %v3505 = vrot.slane %v3504, 4
  %v3507 = vshll.u32 %v3481, 16
  %v3509 = vrot.slane %v3507, 5
  %v3510 = vsel %vm695, %v3505, %v3509
  %v3512 = vshrl.u32 %v3450, 16
  %v3514 = vrot.slane %v3512, 4
  %v3515 = vshll.u32 %v3450, 16
  %v3517 = vrot.slane %v3515, 5
  %v3518 = vor.u32 %v3514, %v3517
  %v3519 = vrot.slane %v3518, 4
  %v3521 = vshll.u32 %v3482, 16
  %v3523 = vrot.slane %v3521, 5
  %v3524 = vsel %vm695, %v3519, %v3523
  %v3526 = vshrl.u32 %v3451, 16
  %v3528 = vrot.slane %v3526, 4
  %v3529 = vshll.u32 %v3451, 16
  %v3531 = vrot.slane %v3529, 5
  %v3532 = vor.u32 %v3528, %v3531
  %v3533 = vrot.slane %v3532, 4
  %v3535 = vshll.u32 %v3483, 16
  %v3537 = vrot.slane %v3535, 5
  %v3538 = vsel %vm695, %v3533, %v3537
  %v3540 = vshrl.u32 %v3452, 16
  %v3542 = vrot.slane %v3540, 4
  %v3543 = vshll.u32 %v3452, 16
  %v3545 = vrot.slane %v3543, 5
  %v3546 = vor.u32 %v3542, %v3545
  %v3547 = vrot.slane %v3546, 4
  %v3549 = vshll.u32 %v3484, 16
  %v3551 = vrot.slane %v3549, 5
  %v3552 = vsel %vm695, %v3547, %v3551
  %v3554 = vshrl.u32 %v3453, 16
  %v3556 = vrot.slane %v3554, 4
  %v3557 = vshll.u32 %v3453, 16
  %v3559 = vrot.slane %v3557, 5
  %v3560 = vor.u32 %v3556, %v3559
  %v3561 = vrot.slane %v3560, 4
  %v3563 = vshll.u32 %v3485, 16
  %v3565 = vrot.slane %v3563, 5
  %v3566 = vsel %vm695, %v3561, %v3565
  %v3568 = vshrl.u32 %v3454, 16
  %v3570 = vrot.slane %v3568, 4
  %v3571 = vshll.u32 %v3454, 16
  %v3573 = vrot.slane %v3571, 5
  %v3574 = vor.u32 %v3570, %v3573
  %v3575 = vrot.slane %v3574, 4
  %v3577 = vshll.u32 %v3486, 16
  %v3579 = vrot.slane %v3577, 5
  %v3580 = vsel %vm695, %v3575, %v3579
  %v3582 = vshrl.u32 %v3455, 16
  %v3584 = vrot.slane %v3582, 4
  %v3585 = vshll.u32 %v3455, 16
  %v3587 = vrot.slane %v3585, 5
  %v3588 = vor.u32 %v3584, %v3587
  %v3589 = vrot.slane %v3588, 4
  %v3591 = vshll.u32 %v3487, 16
  %v3593 = vrot.slane %v3591, 5
  %v3594 = vsel %vm695, %v3589, %v3593
  %v3596 = vshrl.u32 %v3456, 16
  %v3598 = vrot.slane %v3596, 4
  %v3599 = vshll.u32 %v3456, 16
  %v3601 = vrot.slane %v3599, 5
  %v3602 = vor.u32 %v3598, %v3601
  %v3603 = vrot.slane %v3602, 4
  %v3605 = vshll.u32 %v3488, 16
  %v3607 = vrot.slane %v3605, 5
  %v3608 = vsel %vm695, %v3603, %v3607
  %v3610 = vshrl.u32 %v3457, 16
  %v3612 = vrot.slane %v3610, 4
  %v3613 = vshll.u32 %v3457, 16
  %v3615 = vrot.slane %v3613, 5
  %v3616 = vor.u32 %v3612, %v3615
  %v3617 = vrot.slane %v3616, 4
  %v3619 = vshll.u32 %v3489, 16
  %v3621 = vrot.slane %v3619, 5
  %v3622 = vsel %vm695, %v3617, %v3621
  %v3624 = vshrl.u32 %v3458, 16
  %v3626 = vrot.slane %v3624, 4
  %v3627 = vshll.u32 %v3458, 16
  %v3629 = vrot.slane %v3627, 5
  %v3630 = vor.u32 %v3626, %v3629
  %v3631 = vrot.slane %v3630, 4
  %v3633 = vshll.u32 %v3490, 16
  %v3635 = vrot.slane %v3633, 5
  %v3636 = vsel %vm695, %v3631, %v3635
  %v3638 = vshrl.u32 %v3459, 16
  %v3640 = vrot.slane %v3638, 4
  %v3641 = vshll.u32 %v3459, 16
  %v3643 = vrot.slane %v3641, 5
  %v3644 = vor.u32 %v3640, %v3643
  %v3645 = vrot.slane %v3644, 4
  %v3647 = vshll.u32 %v3491, 16
  %v3649 = vrot.slane %v3647, 5
  %v3650 = vsel %vm695, %v3645, %v3649
  %v3652 = vshrl.u32 %v3460, 16
  %v3654 = vrot.slane %v3652, 4
  %v3655 = vshll.u32 %v3460, 16
  %v3657 = vrot.slane %v3655, 5
  %v3658 = vor.u32 %v3654, %v3657
  %v3659 = vrot.slane %v3658, 4
  %v3661 = vshll.u32 %v3492, 16
  %v3663 = vrot.slane %v3661, 5
  %v3664 = vsel %vm695, %v3659, %v3663
  %v3666 = vshrl.u32 %v3461, 16
  %v3668 = vrot.slane %v3666, 4
  %v3669 = vshll.u32 %v3461, 16
  %v3671 = vrot.slane %v3669, 5
  %v3672 = vor.u32 %v3668, %v3671
  %v3673 = vrot.slane %v3672, 4
  %v3675 = vshll.u32 %v3493, 16
  %v3677 = vrot.slane %v3675, 5
  %v3678 = vsel %vm695, %v3673, %v3677
  %v3680 = vshrl.u32 %v3462, 16
  %v3682 = vrot.slane %v3680, 4
  %v3683 = vshll.u32 %v3462, 16
  %v3685 = vrot.slane %v3683, 5
  %v3686 = vor.u32 %v3682, %v3685
  %v3687 = vrot.slane %v3686, 4
  %v3689 = vshll.u32 %v3494, 16
  %v3691 = vrot.slane %v3689, 5
  %v3692 = vsel %vm695, %v3687, %v3691
  %v3694 = vshrl.u32 %v3463, 16
  %v3696 = vrot.slane %v3694, 4
  %v3697 = vshll.u32 %v3463, 16
  %v3699 = vrot.slane %v3697, 5
  %v3700 = vor.u32 %v3696, %v3699
  %v3701 = vrot.slane %v3700, 4
  %v3703 = vshll.u32 %v3495, 16
  %v3705 = vrot.slane %v3703, 5
  %v3706 = vsel %vm695, %v3701, %v3705
  %v3708 = vshrl.u32 %v3464, 16
  %v3710 = vrot.slane %v3708, 4
  %v3711 = vshll.u32 %v3464, 16
  %v3713 = vrot.slane %v3711, 5
  %v3714 = vor.u32 %v3710, %v3713
  %v3715 = vrot.slane %v3714, 4
  %v3717 = vshll.u32 %v3496, 16
  %v3719 = vrot.slane %v3717, 5
  %v3720 = vsel %vm695, %v3715, %v3719
  %s3721 = scalar_lea.vmem %s6, 64
  %v3722 = vld [vmem:[%s3721] sm:$0xf]
  %v3723 = vld [vmem:[%s3721 + $0x4] sm:$0xf]
  %v3724 = vld [vmem:[%s3721 + $0x8] sm:$0xf]
  %v3725 = vld [vmem:[%s3721 + $0xc] sm:$0xf]
  %v3726 = vld [vmem:[%s3721 + $0x10] sm:$0xf]
  %v3727 = vld [vmem:[%s3721 + $0x14] sm:$0xf]
  %v3728 = vld [vmem:[%s3721 + $0x18] sm:$0xf]
  %v3729 = vld [vmem:[%s3721 + $0x1c] sm:$0xf]
  %v3730 = vld [vmem:[%s3721 + $0x20] sm:$0xf]
  %v3731 = vld [vmem:[%s3721 + $0x24] sm:$0xf]
  %v3732 = vld [vmem:[%s3721 + $0x28] sm:$0xf]
  %v3733 = vld [vmem:[%s3721 + $0x2c] sm:$0xf]
  %v3734 = vld [vmem:[%s3721 + $0x30] sm:$0xf]
  %v3735 = vld [vmem:[%s3721 + $0x34] sm:$0xf]
  %v3736 = vld [vmem:[%s3721 + $0x38] sm:$0xf]
  %v3737 = vld [vmem:[%s3721 + $0x3c] sm:$0xf]
  %v3738 = vunpack.c.l.b16 %v3510
  %v3739 = vunpack.c.l.b16 %v3524
  %v3740 = vunpack.c.l.b16 %v3538
  %v3741 = vunpack.c.l.b16 %v3552
  %v3742 = vunpack.c.l.b16 %v3566
  %v3743 = vunpack.c.l.b16 %v3580
  %v3744 = vunpack.c.l.b16 %v3594
  %v3745 = vunpack.c.l.b16 %v3608
  %v3746 = vunpack.c.l.b16 %v3622
  %v3747 = vunpack.c.l.b16 %v3636
  %v3748 = vunpack.c.l.b16 %v3650
  %v3749 = vunpack.c.l.b16 %v3664
  %v3750 = vunpack.c.l.b16 %v3678
  %v3751 = vunpack.c.l.b16 %v3692
  %v3752 = vunpack.c.l.b16 %v3706
  %v3753 = vunpack.c.l.b16 %v3720
  %v3754 = vpack.c.b16 %v3739, %v3738
  %v3755 = vpack.c.b16 %v3741, %v3740
  %v3756 = vpack.c.b16 %v3743, %v3742
  %v3757 = vpack.c.b16 %v3745, %v3744
  %v3758 = vpack.c.b16 %v3747, %v3746
  %v3759 = vpack.c.b16 %v3749, %v3748
  %v3760 = vpack.c.b16 %v3751, %v3750
  %v3761 = vpack.c.b16 %v3753, %v3752
  %v3786 = vunpack.c.l.b16 %v3722
  %v3787 = vunpack.c.l.b16 %v3723
  %v3788 = vunpack.c.l.b16 %v3724
  %v3789 = vunpack.c.l.b16 %v3725
  %v3790 = vunpack.c.l.b16 %v3726
  %v3791 = vunpack.c.l.b16 %v3727
  %v3792 = vunpack.c.l.b16 %v3728
  %v3793 = vunpack.c.l.b16 %v3729
  %v3794 = vunpack.c.l.b16 %v3730
  %v3795 = vunpack.c.l.b16 %v3731
  %v3796 = vunpack.c.l.b16 %v3732
  %v3797 = vunpack.c.l.b16 %v3733
  %v3798 = vunpack.c.l.b16 %v3734
  %v3799 = vunpack.c.l.b16 %v3735
  %v3800 = vunpack.c.l.b16 %v3736
  %v3801 = vunpack.c.l.b16 %v3737
  %v3802 = vpack.c.b16 %v3787, %v3786
  %v3803 = vpack.c.b16 %v3789, %v3788
  %v3804 = vpack.c.b16 %v3791, %v3790
  %v3805 = vpack.c.b16 %v3793, %v3792
  %v3806 = vpack.c.b16 %v3795, %v3794
  %v3807 = vpack.c.b16 %v3797, %v3796
  %v3808 = vpack.c.b16 %v3799, %v3798
  %v3809 = vpack.c.b16 %v3801, %v3800
  %3818 = vmatpush.bf16.msra.mxu0 %v3809
  %3819 = vmatpush.bf16.msra.mxu0 %v3808
  %3820 = vmatpush.bf16.msra.mxu0 %v3807
  %3821 = vmatpush.bf16.msra.mxu0 %v3806
  %3822 = vmatpush.bf16.msra.mxu0 %v3805
  %3823 = vmatpush.bf16.msra.mxu0 %v3804
  %3824 = vmatpush.bf16.msra.mxu0 %v3803
  %3825 = vmatpush.bf16.msra.mxu0 %v3802
  %3826 = vmatmul.bf16.gmra.mxu0 %v3754
  %v3827 = vpop.f32.mrf.mxu0
  %v3828 = vadd.f32 0.0, %v3827
  %v3829 = vpop.f32.mrf.mxu0
  %v3830 = vadd.f32 0.0, %v3829
  %3831 = vmatmul.bf16.gmra.mxu0 %v3755
  %v3832 = vpop.f32.mrf.mxu0
  %v3833 = vadd.f32 0.0, %v3832
  %v3834 = vpop.f32.mrf.mxu0
  %v3835 = vadd.f32 0.0, %v3834
  %3836 = vmatmul.bf16.gmra.mxu0 %v3756
  %v3837 = vpop.f32.mrf.mxu0
  %v3838 = vadd.f32 0.0, %v3837
  %v3839 = vpop.f32.mrf.mxu0
  %v3840 = vadd.f32 0.0, %v3839
  %3841 = vmatmul.bf16.gmra.mxu0 %v3757
  %v3842 = vpop.f32.mrf.mxu0
  %v3843 = vadd.f32 0.0, %v3842
  %v3844 = vpop.f32.mrf.mxu0
  %v3845 = vadd.f32 0.0, %v3844
  %3846 = vmatmul.bf16.gmra.mxu0 %v3758
  %v3847 = vpop.f32.mrf.mxu0
  %v3848 = vadd.f32 0.0, %v3847
  %v3849 = vpop.f32.mrf.mxu0
  %v3850 = vadd.f32 0.0, %v3849
  %3851 = vmatmul.bf16.gmra.mxu0 %v3759
  %v3852 = vpop.f32.mrf.mxu0
  %v3853 = vadd.f32 0.0, %v3852
  %v3854 = vpop.f32.mrf.mxu0
  %v3855 = vadd.f32 0.0, %v3854
  %3856 = vmatmul.bf16.gmra.mxu0 %v3760
  %v3857 = vpop.f32.mrf.mxu0
  %v3858 = vadd.f32 0.0, %v3857
  %v3859 = vpop.f32.mrf.mxu0
  %v3860 = vadd.f32 0.0, %v3859
  %3861 = vmatmul.bf16.gmra.mxu0 %v3761
  %v3862 = vpop.f32.mrf.mxu0
  %v3863 = vadd.f32 0.0, %v3862
  %v3864 = vpop.f32.mrf.mxu0
  %v3865 = vadd.f32 0.0, %v3864
  %3866 = vdwg.mxu0
  %v3883 = vunpack.c.l.b16 %v3449
  %v3884 = vunpack.c.l.b16 %v3450
  %v3885 = vunpack.c.l.b16 %v3451
  %v3886 = vunpack.c.l.b16 %v3452
  %v3887 = vunpack.c.l.b16 %v3453
  %v3888 = vunpack.c.l.b16 %v3454
  %v3889 = vunpack.c.l.b16 %v3455
  %v3890 = vunpack.c.l.b16 %v3456
  %v3891 = vunpack.c.l.b16 %v3457
  %v3892 = vunpack.c.l.b16 %v3458
  %v3893 = vunpack.c.l.b16 %v3459
  %v3894 = vunpack.c.l.b16 %v3460
  %v3895 = vunpack.c.l.b16 %v3461
  %v3896 = vunpack.c.l.b16 %v3462
  %v3897 = vunpack.c.l.b16 %v3463
  %v3898 = vunpack.c.l.b16 %v3464
  %v3899 = vpack.c.b16 %v3884, %v3883
  %v3900 = vpack.c.b16 %v3886, %v3885
  %v3901 = vpack.c.b16 %v3888, %v3887
  %v3902 = vpack.c.b16 %v3890, %v3889
  %v3903 = vpack.c.b16 %v3892, %v3891
  %v3904 = vpack.c.b16 %v3894, %v3893
  %v3905 = vpack.c.b16 %v3896, %v3895
  %v3906 = vpack.c.b16 %v3898, %v3897
  %v3931 = vunpack.c.l.b16 %v3465
  %v3932 = vunpack.c.l.b16 %v3466
  %v3933 = vunpack.c.l.b16 %v3467
  %v3934 = vunpack.c.l.b16 %v3468
  %v3935 = vunpack.c.l.b16 %v3469
  %v3936 = vunpack.c.l.b16 %v3470
  %v3937 = vunpack.c.l.b16 %v3471
  %v3938 = vunpack.c.l.b16 %v3472
  %v3939 = vunpack.c.l.b16 %v3473
  %v3940 = vunpack.c.l.b16 %v3474
  %v3941 = vunpack.c.l.b16 %v3475
  %v3942 = vunpack.c.l.b16 %v3476
  %v3943 = vunpack.c.l.b16 %v3477
  %v3944 = vunpack.c.l.b16 %v3478
  %v3945 = vunpack.c.l.b16 %v3479
  %v3946 = vunpack.c.l.b16 %v3480
  %v3947 = vpack.c.b16 %v3932, %v3931
  %v3948 = vpack.c.b16 %v3934, %v3933
  %v3949 = vpack.c.b16 %v3936, %v3935
  %v3950 = vpack.c.b16 %v3938, %v3937
  %v3951 = vpack.c.b16 %v3940, %v3939
  %v3952 = vpack.c.b16 %v3942, %v3941
  %v3953 = vpack.c.b16 %v3944, %v3943
  %v3954 = vpack.c.b16 %v3946, %v3945
  %3963 = vmatpush.bf16.msra.mxu0 %v3954
  %3964 = vmatpush.bf16.msra.mxu0 %v3953
  %3965 = vmatpush.bf16.msra.mxu0 %v3952
  %3966 = vmatpush.bf16.msra.mxu0 %v3951
  %3967 = vmatpush.bf16.msra.mxu0 %v3950
  %3968 = vmatpush.bf16.msra.mxu0 %v3949
  %3969 = vmatpush.bf16.msra.mxu0 %v3948
  %3970 = vmatpush.bf16.msra.mxu0 %v3947
  %3971 = vmatmul.bf16.gmra.mxu0 %v3899
  %v3972 = vpop.f32.mrf.mxu0
  %v3973 = vadd.f32 %v3828, %v3972
  %v3974 = vpop.f32.mrf.mxu0
  %v3975 = vadd.f32 %v3830, %v3974
  %3976 = vmatmul.bf16.gmra.mxu0 %v3900
  %v3977 = vpop.f32.mrf.mxu0
  %v3978 = vadd.f32 %v3833, %v3977
  %v3979 = vpop.f32.mrf.mxu0
  %v3980 = vadd.f32 %v3835, %v3979
  %3981 = vmatmul.bf16.gmra.mxu0 %v3901
  %v3982 = vpop.f32.mrf.mxu0
  %v3983 = vadd.f32 %v3838, %v3982
  %v3984 = vpop.f32.mrf.mxu0
  %v3985 = vadd.f32 %v3840, %v3984
  %3986 = vmatmul.bf16.gmra.mxu0 %v3902
  %v3987 = vpop.f32.mrf.mxu0
  %v3988 = vadd.f32 %v3843, %v3987
  %v3989 = vpop.f32.mrf.mxu0
  %v3990 = vadd.f32 %v3845, %v3989
  %3991 = vmatmul.bf16.gmra.mxu0 %v3903
  %v3992 = vpop.f32.mrf.mxu0
  %v3993 = vadd.f32 %v3848, %v3992
  %v3994 = vpop.f32.mrf.mxu0
  %v3995 = vadd.f32 %v3850, %v3994
  %3996 = vmatmul.bf16.gmra.mxu0 %v3904
  %v3997 = vpop.f32.mrf.mxu0
  %v3998 = vadd.f32 %v3853, %v3997
  %v3999 = vpop.f32.mrf.mxu0
  %v4000 = vadd.f32 %v3855, %v3999
  %4001 = vmatmul.bf16.gmra.mxu0 %v3905
  %v4002 = vpop.f32.mrf.mxu0
  %v4003 = vadd.f32 %v3858, %v4002
  %v4004 = vpop.f32.mrf.mxu0
  %v4005 = vadd.f32 %v3860, %v4004
  %4006 = vmatmul.bf16.gmra.mxu0 %v3906
  %v4007 = vpop.f32.mrf.mxu0
  %v4008 = vadd.f32 %v3863, %v4007
  %v4009 = vpop.f32.mrf.mxu0
  %v4010 = vadd.f32 %v3865, %v4009
  %4011 = vdwg.mxu0
  %v4012 = vld [vmem:[#allocation3] sm:$0xe]
  %v4013 = vld [vmem:[#allocation3 + $0x8] sm:$0xe]
  %v4014 = vld [vmem:[#allocation3 + $0x10] sm:$0xe]
  %v4015 = vld [vmem:[#allocation3 + $0x18] sm:$0xe]
  %v4016 = vld [vmem:[#allocation3 + $0x20] sm:$0xe]
  %v4017 = vld [vmem:[#allocation3 + $0x28] sm:$0xe]
  %v4018 = vld [vmem:[#allocation3 + $0x30] sm:$0xe]
  %v4019 = vld [vmem:[#allocation3 + $0x38] sm:$0xe]
  %v4020 = vld [vmem:[#allocation3 + $0x50] sm:$0xe]
  %v4021 = vld [vmem:[#allocation3 + $0x58] sm:$0xe]
  %v4022 = vld [vmem:[#allocation3 + $0x60] sm:$0xe]
  %v4023 = vld [vmem:[#allocation3 + $0x68] sm:$0xe]
  %v4024 = vld [vmem:[#allocation3 + $0x70] sm:$0xe]
  %v4025 = vld [vmem:[#allocation3 + $0x78] sm:$0xe]
  %v4026 = vld [vmem:[#allocation3 + $0x80] sm:$0xe]
  %v4027 = vld [vmem:[#allocation3 + $0x88] sm:$0xe]
  %v4060 = vrot.slane %v4012, 5
  %v4061 = vrot.slane %v4060, 4
  %v4062 = vrot.slane %v3481, 5
  %v4063 = vsel %vm1210, %v4061, %v4062
  %v4064 = vrot.slane %v4013, 5
  %v4065 = vrot.slane %v4064, 4
  %v4066 = vrot.slane %v3482, 5
  %v4067 = vsel %vm1210, %v4065, %v4066
  %v4068 = vrot.slane %v4014, 5
  %v4069 = vrot.slane %v4068, 4
  %v4070 = vrot.slane %v3483, 5
  %v4071 = vsel %vm1210, %v4069, %v4070
  %v4072 = vrot.slane %v4015, 5
  %v4073 = vrot.slane %v4072, 4
  %v4074 = vrot.slane %v3484, 5
  %v4075 = vsel %vm1210, %v4073, %v4074
  %v4076 = vrot.slane %v4016, 5
  %v4077 = vrot.slane %v4076, 4
  %v4078 = vrot.slane %v3485, 5
  %v4079 = vsel %vm1210, %v4077, %v4078
  %v4080 = vrot.slane %v4017, 5
  %v4081 = vrot.slane %v4080, 4
  %v4082 = vrot.slane %v3486, 5
  %v4083 = vsel %vm1210, %v4081, %v4082
  %v4084 = vrot.slane %v4018, 5
  %v4085 = vrot.slane %v4084, 4
  %v4086 = vrot.slane %v3487, 5
  %v4087 = vsel %vm1210, %v4085, %v4086
  %v4088 = vrot.slane %v4019, 5
  %v4089 = vrot.slane %v4088, 4
  %v4090 = vrot.slane %v3488, 5
  %v4091 = vsel %vm1210, %v4089, %v4090
  %v4092 = vrot.slane %v4020, 5
  %v4093 = vrot.slane %v4092, 4
  %v4094 = vrot.slane %v3489, 5
  %v4095 = vsel %vm1210, %v4093, %v4094
  %v4096 = vrot.slane %v4021, 5
  %v4097 = vrot.slane %v4096, 4
  %v4098 = vrot.slane %v3490, 5
  %v4099 = vsel %vm1210, %v4097, %v4098
  %v4100 = vrot.slane %v4022, 5
  %v4101 = vrot.slane %v4100, 4
  %v4102 = vrot.slane %v3491, 5
  %v4103 = vsel %vm1210, %v4101, %v4102
  %v4104 = vrot.slane %v4023, 5
  %v4105 = vrot.slane %v4104, 4
  %v4106 = vrot.slane %v3492, 5
  %v4107 = vsel %vm1210, %v4105, %v4106
  %v4108 = vrot.slane %v4024, 5
  %v4109 = vrot.slane %v4108, 4
  %v4110 = vrot.slane %v3493, 5
  %v4111 = vsel %vm1210, %v4109, %v4110
  %v4112 = vrot.slane %v4025, 5
  %v4113 = vrot.slane %v4112, 4
  %v4114 = vrot.slane %v3494, 5
  %v4115 = vsel %vm1210, %v4113, %v4114
  %v4116 = vrot.slane %v4026, 5
  %v4117 = vrot.slane %v4116, 4
  %v4118 = vrot.slane %v3495, 5
  %v4119 = vsel %vm1210, %v4117, %v4118
  %v4120 = vrot.slane %v4027, 5
  %v4121 = vrot.slane %v4120, 4
  %v4122 = vrot.slane %v3496, 5
  %v4123 = vsel %vm1210, %v4121, %v4122
  %s4124 = scalar_lea.vmem %s6, 128
  %v4125 = vld [vmem:[%s4124] sm:$0xf]
  %v4126 = vld [vmem:[%s4124 + $0x4] sm:$0xf]
  %v4127 = vld [vmem:[%s4124 + $0x8] sm:$0xf]
  %v4128 = vld [vmem:[%s4124 + $0xc] sm:$0xf]
  %v4129 = vld [vmem:[%s4124 + $0x10] sm:$0xf]
  %v4130 = vld [vmem:[%s4124 + $0x14] sm:$0xf]
  %v4131 = vld [vmem:[%s4124 + $0x18] sm:$0xf]
  %v4132 = vld [vmem:[%s4124 + $0x1c] sm:$0xf]
  %v4133 = vld [vmem:[%s4124 + $0x20] sm:$0xf]
  %v4134 = vld [vmem:[%s4124 + $0x24] sm:$0xf]
  %v4135 = vld [vmem:[%s4124 + $0x28] sm:$0xf]
  %v4136 = vld [vmem:[%s4124 + $0x2c] sm:$0xf]
  %v4137 = vld [vmem:[%s4124 + $0x30] sm:$0xf]
  %v4138 = vld [vmem:[%s4124 + $0x34] sm:$0xf]
  %v4139 = vld [vmem:[%s4124 + $0x38] sm:$0xf]
  %v4140 = vld [vmem:[%s4124 + $0x3c] sm:$0xf]
  %v4141 = vunpack.c.l.b16 %v4063
  %v4142 = vunpack.c.l.b16 %v4067
  %v4143 = vunpack.c.l.b16 %v4071
  %v4144 = vunpack.c.l.b16 %v4075
  %v4145 = vunpack.c.l.b16 %v4079
  %v4146 = vunpack.c.l.b16 %v4083
  %v4147 = vunpack.c.l.b16 %v4087
  %v4148 = vunpack.c.l.b16 %v4091
  %v4149 = vunpack.c.l.b16 %v4095
  %v4150 = vunpack.c.l.b16 %v4099
  %v4151 = vunpack.c.l.b16 %v4103
  %v4152 = vunpack.c.l.b16 %v4107
  %v4153 = vunpack.c.l.b16 %v4111
  %v4154 = vunpack.c.l.b16 %v4115
  %v4155 = vunpack.c.l.b16 %v4119
  %v4156 = vunpack.c.l.b16 %v4123
  %v4157 = vpack.c.b16 %v4142, %v4141
  %v4158 = vpack.c.b16 %v4144, %v4143
  %v4159 = vpack.c.b16 %v4146, %v4145
  %v4160 = vpack.c.b16 %v4148, %v4147
  %v4161 = vpack.c.b16 %v4150, %v4149
  %v4162 = vpack.c.b16 %v4152, %v4151
  %v4163 = vpack.c.b16 %v4154, %v4153
  %v4164 = vpack.c.b16 %v4156, %v4155
  %v4189 = vunpack.c.l.b16 %v4125
  %v4190 = vunpack.c.l.b16 %v4126
  %v4191 = vunpack.c.l.b16 %v4127
  %v4192 = vunpack.c.l.b16 %v4128
  %v4193 = vunpack.c.l.b16 %v4129
  %v4194 = vunpack.c.l.b16 %v4130
  %v4195 = vunpack.c.l.b16 %v4131
  %v4196 = vunpack.c.l.b16 %v4132
  %v4197 = vunpack.c.l.b16 %v4133
  %v4198 = vunpack.c.l.b16 %v4134
  %v4199 = vunpack.c.l.b16 %v4135
  %v4200 = vunpack.c.l.b16 %v4136
  %v4201 = vunpack.c.l.b16 %v4137
  %v4202 = vunpack.c.l.b16 %v4138
  %v4203 = vunpack.c.l.b16 %v4139
  %v4204 = vunpack.c.l.b16 %v4140
  %v4205 = vpack.c.b16 %v4190, %v4189
  %v4206 = vpack.c.b16 %v4192, %v4191
  %v4207 = vpack.c.b16 %v4194, %v4193
  %v4208 = vpack.c.b16 %v4196, %v4195
  %v4209 = vpack.c.b16 %v4198, %v4197
  %v4210 = vpack.c.b16 %v4200, %v4199
  %v4211 = vpack.c.b16 %v4202, %v4201
  %v4212 = vpack.c.b16 %v4204, %v4203
  %4221 = vmatpush.bf16.msra.mxu0 %v4212
  %4222 = vmatpush.bf16.msra.mxu0 %v4211
  %4223 = vmatpush.bf16.msra.mxu0 %v4210
  %4224 = vmatpush.bf16.msra.mxu0 %v4209
  %4225 = vmatpush.bf16.msra.mxu0 %v4208
  %4226 = vmatpush.bf16.msra.mxu0 %v4207
  %4227 = vmatpush.bf16.msra.mxu0 %v4206
  %4228 = vmatpush.bf16.msra.mxu0 %v4205
  %4229 = vmatmul.bf16.gmra.mxu0 %v4157
  %v4230 = vpop.f32.mrf.mxu0
  %v4231 = vadd.f32 0.0, %v4230
  %v4232 = vpop.f32.mrf.mxu0
  %v4233 = vadd.f32 0.0, %v4232
  %4234 = vmatmul.bf16.gmra.mxu0 %v4158
  %v4235 = vpop.f32.mrf.mxu0
  %v4236 = vadd.f32 0.0, %v4235
  %v4237 = vpop.f32.mrf.mxu0
  %v4238 = vadd.f32 0.0, %v4237
  %4239 = vmatmul.bf16.gmra.mxu0 %v4159
  %v4240 = vpop.f32.mrf.mxu0
  %v4241 = vadd.f32 0.0, %v4240
  %v4242 = vpop.f32.mrf.mxu0
  %v4243 = vadd.f32 0.0, %v4242
  %4244 = vmatmul.bf16.gmra.mxu0 %v4160
  %v4245 = vpop.f32.mrf.mxu0
  %v4246 = vadd.f32 0.0, %v4245
  %v4247 = vpop.f32.mrf.mxu0
  %v4248 = vadd.f32 0.0, %v4247
  %4249 = vmatmul.bf16.gmra.mxu0 %v4161
  %v4250 = vpop.f32.mrf.mxu0
  %v4251 = vadd.f32 0.0, %v4250
  %v4252 = vpop.f32.mrf.mxu0
  %v4253 = vadd.f32 0.0, %v4252
  %4254 = vmatmul.bf16.gmra.mxu0 %v4162
  %v4255 = vpop.f32.mrf.mxu0
  %v4256 = vadd.f32 0.0, %v4255
  %v4257 = vpop.f32.mrf.mxu0
  %v4258 = vadd.f32 0.0, %v4257
  %4259 = vmatmul.bf16.gmra.mxu0 %v4163
  %v4260 = vpop.f32.mrf.mxu0
  %v4261 = vadd.f32 0.0, %v4260
  %v4262 = vpop.f32.mrf.mxu0
  %v4263 = vadd.f32 0.0, %v4262
  %4264 = vmatmul.bf16.gmra.mxu0 %v4164
  %v4265 = vpop.f32.mrf.mxu0
  %v4266 = vadd.f32 0.0, %v4265
  %v4267 = vpop.f32.mrf.mxu0
  %v4268 = vadd.f32 0.0, %v4267
  %4269 = vdwg.mxu0
  %v4270 = vadd.f32 %v3973, %v4231
  %v4271 = vadd.f32 %v3975, %v4233
  %v4272 = vadd.f32 %v3978, %v4236
  %v4273 = vadd.f32 %v3980, %v4238
  %v4274 = vadd.f32 %v3983, %v4241
  %v4275 = vadd.f32 %v3985, %v4243
  %v4276 = vadd.f32 %v3988, %v4246
  %v4277 = vadd.f32 %v3990, %v4248
  %v4278 = vadd.f32 %v3993, %v4251
  %v4279 = vadd.f32 %v3995, %v4253
  %v4280 = vadd.f32 %v3998, %v4256
  %v4281 = vadd.f32 %v4000, %v4258
  %v4282 = vadd.f32 %v4003, %v4261
  %v4283 = vadd.f32 %v4005, %v4263
  %v4284 = vadd.f32 %v4008, %v4266
  %v4285 = vadd.f32 %v4010, %v4268
  %v4286 = vld [vmem:[%s3218] sm:$0xf]
  %v4287 = vld [vmem:[%s3218 + $0x8] sm:$0xf]
  %v4288 = vld [vmem:[%s3218 + $0x10] sm:$0xf]
  %v4289 = vld [vmem:[%s3218 + $0x18] sm:$0xf]
  %v4290 = vld [vmem:[%s3218 + $0x20] sm:$0xf]
  %v4291 = vld [vmem:[%s3218 + $0x28] sm:$0xf]
  %v4292 = vld [vmem:[%s3218 + $0x30] sm:$0xf]
  %v4293 = vld [vmem:[%s3218 + $0x38] sm:$0xf]
  %v4294 = vld [vmem:[%s3218 + $0x50] sm:$0xf]
  %v4295 = vld [vmem:[%s3218 + $0x58] sm:$0xf]
  %v4296 = vld [vmem:[%s3218 + $0x60] sm:$0xf]
  %v4297 = vld [vmem:[%s3218 + $0x68] sm:$0xf]
  %v4298 = vld [vmem:[%s3218 + $0x70] sm:$0xf]
  %v4299 = vld [vmem:[%s3218 + $0x78] sm:$0xf]
  %v4300 = vld [vmem:[%s3218 + $0x80] sm:$0xf]
  %v4301 = vld [vmem:[%s3218 + $0x88] sm:$0xf]
  %s4302 = scalar_lea.vmem %s6, 192
  %v4303 = vld [vmem:[%s4302] sm:$0xf]
  %v4304 = vld [vmem:[%s4302 + $0x4] sm:$0xf]
  %v4305 = vld [vmem:[%s4302 + $0x8] sm:$0xf]
  %v4306 = vld [vmem:[%s4302 + $0xc] sm:$0xf]
  %v4307 = vld [vmem:[%s4302 + $0x10] sm:$0xf]
  %v4308 = vld [vmem:[%s4302 + $0x14] sm:$0xf]
  %v4309 = vld [vmem:[%s4302 + $0x18] sm:$0xf]
  %v4310 = vld [vmem:[%s4302 + $0x1c] sm:$0xf]
  %v4311 = vld [vmem:[%s4302 + $0x20] sm:$0xf]
  %v4312 = vld [vmem:[%s4302 + $0x24] sm:$0xf]
  %v4313 = vld [vmem:[%s4302 + $0x28] sm:$0xf]
  %v4314 = vld [vmem:[%s4302 + $0x2c] sm:$0xf]
  %v4315 = vld [vmem:[%s4302 + $0x30] sm:$0xf]
  %v4316 = vld [vmem:[%s4302 + $0x34] sm:$0xf]
  %v4317 = vld [vmem:[%s4302 + $0x38] sm:$0xf]
  %v4318 = vld [vmem:[%s4302 + $0x3c] sm:$0xf]
  %v4335 = vunpack.c.l.b16 %v4286
  %v4336 = vunpack.c.l.b16 %v4287
  %v4337 = vunpack.c.l.b16 %v4288
  %v4338 = vunpack.c.l.b16 %v4289
  %v4339 = vunpack.c.l.b16 %v4290
  %v4340 = vunpack.c.l.b16 %v4291
  %v4341 = vunpack.c.l.b16 %v4292
  %v4342 = vunpack.c.l.b16 %v4293
  %v4343 = vunpack.c.l.b16 %v4294
  %v4344 = vunpack.c.l.b16 %v4295
  %v4345 = vunpack.c.l.b16 %v4296
  %v4346 = vunpack.c.l.b16 %v4297
  %v4347 = vunpack.c.l.b16 %v4298
  %v4348 = vunpack.c.l.b16 %v4299
  %v4349 = vunpack.c.l.b16 %v4300
  %v4350 = vunpack.c.l.b16 %v4301
  %v4351 = vpack.c.b16 %v4336, %v4335
  %v4352 = vpack.c.b16 %v4338, %v4337
  %v4353 = vpack.c.b16 %v4340, %v4339
  %v4354 = vpack.c.b16 %v4342, %v4341
  %v4355 = vpack.c.b16 %v4344, %v4343
  %v4356 = vpack.c.b16 %v4346, %v4345
  %v4357 = vpack.c.b16 %v4348, %v4347
  %v4358 = vpack.c.b16 %v4350, %v4349
  %v4383 = vunpack.c.l.b16 %v4303
  %v4384 = vunpack.c.l.b16 %v4304
  %v4385 = vunpack.c.l.b16 %v4305
  %v4386 = vunpack.c.l.b16 %v4306
  %v4387 = vunpack.c.l.b16 %v4307
  %v4388 = vunpack.c.l.b16 %v4308
  %v4389 = vunpack.c.l.b16 %v4309
  %v4390 = vunpack.c.l.b16 %v4310
  %v4391 = vunpack.c.l.b16 %v4311
  %v4392 = vunpack.c.l.b16 %v4312
  %v4393 = vunpack.c.l.b16 %v4313
  %v4394 = vunpack.c.l.b16 %v4314
  %v4395 = vunpack.c.l.b16 %v4315
  %v4396 = vunpack.c.l.b16 %v4316
  %v4397 = vunpack.c.l.b16 %v4317
  %v4398 = vunpack.c.l.b16 %v4318
  %v4399 = vpack.c.b16 %v4384, %v4383
  %v4400 = vpack.c.b16 %v4386, %v4385
  %v4401 = vpack.c.b16 %v4388, %v4387
  %v4402 = vpack.c.b16 %v4390, %v4389
  %v4403 = vpack.c.b16 %v4392, %v4391
  %v4404 = vpack.c.b16 %v4394, %v4393
  %v4405 = vpack.c.b16 %v4396, %v4395
  %v4406 = vpack.c.b16 %v4398, %v4397
  %4415 = vmatpush.bf16.msra.mxu0 %v4406
  %4416 = vmatpush.bf16.msra.mxu0 %v4405
  %4417 = vmatpush.bf16.msra.mxu0 %v4404
  %4418 = vmatpush.bf16.msra.mxu0 %v4403
  %4419 = vmatpush.bf16.msra.mxu0 %v4402
  %4420 = vmatpush.bf16.msra.mxu0 %v4401
  %4421 = vmatpush.bf16.msra.mxu0 %v4400
  %4422 = vmatpush.bf16.msra.mxu0 %v4399
  %4423 = vmatmul.bf16.gmra.mxu0 %v4351
  %v4424 = vpop.f32.mrf.mxu0
  %v4425 = vadd.f32 0.0, %v4424
  %v4426 = vpop.f32.mrf.mxu0
  %v4427 = vadd.f32 0.0, %v4426
  %4428 = vmatmul.bf16.gmra.mxu0 %v4352
  %v4429 = vpop.f32.mrf.mxu0
  %v4430 = vadd.f32 0.0, %v4429
  %v4431 = vpop.f32.mrf.mxu0
  %v4432 = vadd.f32 0.0, %v4431
  %4433 = vmatmul.bf16.gmra.mxu0 %v4353
  %v4434 = vpop.f32.mrf.mxu0
  %v4435 = vadd.f32 0.0, %v4434
  %v4436 = vpop.f32.mrf.mxu0
  %v4437 = vadd.f32 0.0, %v4436
  %4438 = vmatmul.bf16.gmra.mxu0 %v4354
  %v4439 = vpop.f32.mrf.mxu0
  %v4440 = vadd.f32 0.0, %v4439
  %v4441 = vpop.f32.mrf.mxu0
  %v4442 = vadd.f32 0.0, %v4441
  %4443 = vmatmul.bf16.gmra.mxu0 %v4355
  %v4444 = vpop.f32.mrf.mxu0
  %v4445 = vadd.f32 0.0, %v4444
  %v4446 = vpop.f32.mrf.mxu0
  %v4447 = vadd.f32 0.0, %v4446
  %4448 = vmatmul.bf16.gmra.mxu0 %v4356
  %v4449 = vpop.f32.mrf.mxu0
  %v4450 = vadd.f32 0.0, %v4449
  %v4451 = vpop.f32.mrf.mxu0
  %v4452 = vadd.f32 0.0, %v4451
  %4453 = vmatmul.bf16.gmra.mxu0 %v4357
  %v4454 = vpop.f32.mrf.mxu0
  %v4455 = vadd.f32 0.0, %v4454
  %v4456 = vpop.f32.mrf.mxu0
  %v4457 = vadd.f32 0.0, %v4456
  %4458 = vmatmul.bf16.gmra.mxu0 %v4358
  %v4459 = vpop.f32.mrf.mxu0
  %v4460 = vadd.f32 0.0, %v4459
  %v4461 = vpop.f32.mrf.mxu0
  %v4462 = vadd.f32 0.0, %v4461
  %4463 = vdwg.mxu0
  %v4464 = vadd.f32 %v4270, %v4425
  %v4465 = vadd.f32 %v4271, %v4427
  %v4466 = vadd.f32 %v4272, %v4430
  %v4467 = vadd.f32 %v4273, %v4432
  %v4468 = vadd.f32 %v4274, %v4435
  %v4469 = vadd.f32 %v4275, %v4437
  %v4470 = vadd.f32 %v4276, %v4440
  %v4471 = vadd.f32 %v4277, %v4442
  %v4472 = vadd.f32 %v4278, %v4445
  %v4473 = vadd.f32 %v4279, %v4447
  %v4474 = vadd.f32 %v4280, %v4450
  %v4475 = vadd.f32 %v4281, %v4452
  %v4476 = vadd.f32 %v4282, %v4455
  %v4477 = vadd.f32 %v4283, %v4457
  %v4478 = vadd.f32 %v4284, %v4460
  %v4479 = vadd.f32 %v4285, %v4462
  %v4480 = vld [vmem:[%s3218] sm:$0xf]
  %v4481 = vld [vmem:[%s3218 + $0x4] sm:$0x1]
  %v4482 = vld [vmem:[%s3218 + $0x8] sm:$0xf]
  %v4483 = vld [vmem:[%s3218 + $0xc] sm:$0x1]
  %v4484 = vld [vmem:[%s3218 + $0x10] sm:$0xf]
  %v4485 = vld [vmem:[%s3218 + $0x14] sm:$0x1]
  %v4486 = vld [vmem:[%s3218 + $0x18] sm:$0xf]
  %v4487 = vld [vmem:[%s3218 + $0x1c] sm:$0x1]
  %v4488 = vld [vmem:[%s3218 + $0x20] sm:$0xf]
  %v4489 = vld [vmem:[%s3218 + $0x24] sm:$0x1]
  %v4490 = vld [vmem:[%s3218 + $0x28] sm:$0xf]
  %v4491 = vld [vmem:[%s3218 + $0x2c] sm:$0x1]
  %v4492 = vld [vmem:[%s3218 + $0x30] sm:$0xf]
  %v4493 = vld [vmem:[%s3218 + $0x34] sm:$0x1]
  %v4494 = vld [vmem:[%s3218 + $0x38] sm:$0xf]
  %v4495 = vld [vmem:[%s3218 + $0x3c] sm:$0x1]
  %v4496 = vld [vmem:[%s3218 + $0x50] sm:$0xf]
  %v4497 = vld [vmem:[%s3218 + $0x54] sm:$0x1]
  %v4498 = vld [vmem:[%s3218 + $0x58] sm:$0xf]
  %v4499 = vld [vmem:[%s3218 + $0x5c] sm:$0x1]
  %v4500 = vld [vmem:[%s3218 + $0x60] sm:$0xf]
  %v4501 = vld [vmem:[%s3218 + $0x64] sm:$0x1]
  %v4502 = vld [vmem:[%s3218 + $0x68] sm:$0xf]
  %v4503 = vld [vmem:[%s3218 + $0x6c] sm:$0x1]
  %v4504 = vld [vmem:[%s3218 + $0x70] sm:$0xf]
  %v4505 = vld [vmem:[%s3218 + $0x74] sm:$0x1]
  %v4506 = vld [vmem:[%s3218 + $0x78] sm:$0xf]
  %v4507 = vld [vmem:[%s3218 + $0x7c] sm:$0x1]
  %v4508 = vld [vmem:[%s3218 + $0x80] sm:$0xf]
  %v4509 = vld [vmem:[%s3218 + $0x84] sm:$0x1]
  %v4510 = vld [vmem:[%s3218 + $0x88] sm:$0xf]
  %v4511 = vld [vmem:[%s3218 + $0x8c] sm:$0x1]
  %v4513 = vshrl.u32 %v4480, 16
  %v4515 = vrot.slane %v4513, 4
  %v4516 = vshll.u32 %v4480, 16
  %v4518 = vrot.slane %v4516, 5
  %v4519 = vor.u32 %v4515, %v4518
  %v4520 = vrot.slane %v4519, 4
  %v4522 = vshll.u32 %v4481, 16
  %v4524 = vrot.slane %v4522, 5
  %v4525 = vsel %vm695, %v4520, %v4524
  %v4527 = vshrl.u32 %v4482, 16
  %v4529 = vrot.slane %v4527, 4
  %v4530 = vshll.u32 %v4482, 16
  %v4532 = vrot.slane %v4530, 5
  %v4533 = vor.u32 %v4529, %v4532
  %v4534 = vrot.slane %v4533, 4
  %v4536 = vshll.u32 %v4483, 16
  %v4538 = vrot.slane %v4536, 5
  %v4539 = vsel %vm695, %v4534, %v4538
  %v4541 = vshrl.u32 %v4484, 16
  %v4543 = vrot.slane %v4541, 4
  %v4544 = vshll.u32 %v4484, 16
  %v4546 = vrot.slane %v4544, 5
  %v4547 = vor.u32 %v4543, %v4546
  %v4548 = vrot.slane %v4547, 4
  %v4550 = vshll.u32 %v4485, 16
  %v4552 = vrot.slane %v4550, 5
  %v4553 = vsel %vm695, %v4548, %v4552
  %v4555 = vshrl.u32 %v4486, 16
  %v4557 = vrot.slane %v4555, 4
  %v4558 = vshll.u32 %v4486, 16
  %v4560 = vrot.slane %v4558, 5
  %v4561 = vor.u32 %v4557, %v4560
  %v4562 = vrot.slane %v4561, 4
  %v4564 = vshll.u32 %v4487, 16
  %v4566 = vrot.slane %v4564, 5
  %v4567 = vsel %vm695, %v4562, %v4566
  %v4569 = vshrl.u32 %v4488, 16
  %v4571 = vrot.slane %v4569, 4
  %v4572 = vshll.u32 %v4488, 16
  %v4574 = vrot.slane %v4572, 5
  %v4575 = vor.u32 %v4571, %v4574
  %v4576 = vrot.slane %v4575, 4
  %v4578 = vshll.u32 %v4489, 16
  %v4580 = vrot.slane %v4578, 5
  %v4581 = vsel %vm695, %v4576, %v4580
  %v4583 = vshrl.u32 %v4490, 16
  %v4585 = vrot.slane %v4583, 4
  %v4586 = vshll.u32 %v4490, 16
  %v4588 = vrot.slane %v4586, 5
  %v4589 = vor.u32 %v4585, %v4588
  %v4590 = vrot.slane %v4589, 4
  %v4592 = vshll.u32 %v4491, 16
  %v4594 = vrot.slane %v4592, 5
  %v4595 = vsel %vm695, %v4590, %v4594
  %v4597 = vshrl.u32 %v4492, 16
  %v4599 = vrot.slane %v4597, 4
  %v4600 = vshll.u32 %v4492, 16
  %v4602 = vrot.slane %v4600, 5
  %v4603 = vor.u32 %v4599, %v4602
  %v4604 = vrot.slane %v4603, 4
  %v4606 = vshll.u32 %v4493, 16
  %v4608 = vrot.slane %v4606, 5
  %v4609 = vsel %vm695, %v4604, %v4608
  %v4611 = vshrl.u32 %v4494, 16
  %v4613 = vrot.slane %v4611, 4
  %v4614 = vshll.u32 %v4494, 16
  %v4616 = vrot.slane %v4614, 5
  %v4617 = vor.u32 %v4613, %v4616
  %v4618 = vrot.slane %v4617, 4
  %v4620 = vshll.u32 %v4495, 16
  %v4622 = vrot.slane %v4620, 5
  %v4623 = vsel %vm695, %v4618, %v4622
  %v4625 = vshrl.u32 %v4496, 16
  %v4627 = vrot.slane %v4625, 4
  %v4628 = vshll.u32 %v4496, 16
  %v4630 = vrot.slane %v4628, 5
  %v4631 = vor.u32 %v4627, %v4630
  %v4632 = vrot.slane %v4631, 4
  %v4634 = vshll.u32 %v4497, 16
  %v4636 = vrot.slane %v4634, 5
  %v4637 = vsel %vm695, %v4632, %v4636
  %v4639 = vshrl.u32 %v4498, 16
  %v4641 = vrot.slane %v4639, 4
  %v4642 = vshll.u32 %v4498, 16
  %v4644 = vrot.slane %v4642, 5
  %v4645 = vor.u32 %v4641, %v4644
  %v4646 = vrot.slane %v4645, 4
  %v4648 = vshll.u32 %v4499, 16
  %v4650 = vrot.slane %v4648, 5
  %v4651 = vsel %vm695, %v4646, %v4650
  %v4653 = vshrl.u32 %v4500, 16
  %v4655 = vrot.slane %v4653, 4
  %v4656 = vshll.u32 %v4500, 16
  %v4658 = vrot.slane %v4656, 5
  %v4659 = vor.u32 %v4655, %v4658
  %v4660 = vrot.slane %v4659, 4
  %v4662 = vshll.u32 %v4501, 16
  %v4664 = vrot.slane %v4662, 5
  %v4665 = vsel %vm695, %v4660, %v4664
  %v4667 = vshrl.u32 %v4502, 16
  %v4669 = vrot.slane %v4667, 4
  %v4670 = vshll.u32 %v4502, 16
  %v4672 = vrot.slane %v4670, 5
  %v4673 = vor.u32 %v4669, %v4672
  %v4674 = vrot.slane %v4673, 4
  %v4676 = vshll.u32 %v4503, 16
  %v4678 = vrot.slane %v4676, 5
  %v4679 = vsel %vm695, %v4674, %v4678
  %v4681 = vshrl.u32 %v4504, 16
  %v4683 = vrot.slane %v4681, 4
  %v4684 = vshll.u32 %v4504, 16
  %v4686 = vrot.slane %v4684, 5
  %v4687 = vor.u32 %v4683, %v4686
  %v4688 = vrot.slane %v4687, 4
  %v4690 = vshll.u32 %v4505, 16
  %v4692 = vrot.slane %v4690, 5
  %v4693 = vsel %vm695, %v4688, %v4692
  %v4695 = vshrl.u32 %v4506, 16
  %v4697 = vrot.slane %v4695, 4
  %v4698 = vshll.u32 %v4506, 16
  %v4700 = vrot.slane %v4698, 5
  %v4701 = vor.u32 %v4697, %v4700
  %v4702 = vrot.slane %v4701, 4
  %v4704 = vshll.u32 %v4507, 16
  %v4706 = vrot.slane %v4704, 5
  %v4707 = vsel %vm695, %v4702, %v4706
  %v4709 = vshrl.u32 %v4508, 16
  %v4711 = vrot.slane %v4709, 4
  %v4712 = vshll.u32 %v4508, 16
  %v4714 = vrot.slane %v4712, 5
  %v4715 = vor.u32 %v4711, %v4714
  %v4716 = vrot.slane %v4715, 4
  %v4718 = vshll.u32 %v4509, 16
  %v4720 = vrot.slane %v4718, 5
  %v4721 = vsel %vm695, %v4716, %v4720
  %v4723 = vshrl.u32 %v4510, 16
  %v4725 = vrot.slane %v4723, 4
  %v4726 = vshll.u32 %v4510, 16
  %v4728 = vrot.slane %v4726, 5
  %v4729 = vor.u32 %v4725, %v4728
  %v4730 = vrot.slane %v4729, 4
  %v4732 = vshll.u32 %v4511, 16
  %v4734 = vrot.slane %v4732, 5
  %v4735 = vsel %vm695, %v4730, %v4734
  %s4736 = scalar_lea.vmem %s6, 256
  %v4737 = vld [vmem:[%s4736] sm:$0xf]
  %v4738 = vld [vmem:[%s4736 + $0x4] sm:$0xf]
  %v4739 = vld [vmem:[%s4736 + $0x8] sm:$0xf]
  %v4740 = vld [vmem:[%s4736 + $0xc] sm:$0xf]
  %v4741 = vld [vmem:[%s4736 + $0x10] sm:$0xf]
  %v4742 = vld [vmem:[%s4736 + $0x14] sm:$0xf]
  %v4743 = vld [vmem:[%s4736 + $0x18] sm:$0xf]
  %v4744 = vld [vmem:[%s4736 + $0x1c] sm:$0xf]
  %v4745 = vld [vmem:[%s4736 + $0x20] sm:$0xf]
  %v4746 = vld [vmem:[%s4736 + $0x24] sm:$0xf]
  %v4747 = vld [vmem:[%s4736 + $0x28] sm:$0xf]
  %v4748 = vld [vmem:[%s4736 + $0x2c] sm:$0xf]
  %v4749 = vld [vmem:[%s4736 + $0x30] sm:$0xf]
  %v4750 = vld [vmem:[%s4736 + $0x34] sm:$0xf]
  %v4751 = vld [vmem:[%s4736 + $0x38] sm:$0xf]
  %v4752 = vld [vmem:[%s4736 + $0x3c] sm:$0xf]
  %v4753 = vunpack.c.l.b16 %v4525
  %v4754 = vunpack.c.l.b16 %v4539
  %v4755 = vunpack.c.l.b16 %v4553
  %v4756 = vunpack.c.l.b16 %v4567
  %v4757 = vunpack.c.l.b16 %v4581
  %v4758 = vunpack.c.l.b16 %v4595
  %v4759 = vunpack.c.l.b16 %v4609
  %v4760 = vunpack.c.l.b16 %v4623
  %v4761 = vunpack.c.l.b16 %v4637
  %v4762 = vunpack.c.l.b16 %v4651
  %v4763 = vunpack.c.l.b16 %v4665
  %v4764 = vunpack.c.l.b16 %v4679
  %v4765 = vunpack.c.l.b16 %v4693
  %v4766 = vunpack.c.l.b16 %v4707
  %v4767 = vunpack.c.l.b16 %v4721
  %v4768 = vunpack.c.l.b16 %v4735
  %v4769 = vpack.c.b16 %v4754, %v4753
  %v4770 = vpack.c.b16 %v4756, %v4755
  %v4771 = vpack.c.b16 %v4758, %v4757
  %v4772 = vpack.c.b16 %v4760, %v4759
  %v4773 = vpack.c.b16 %v4762, %v4761
  %v4774 = vpack.c.b16 %v4764, %v4763
  %v4775 = vpack.c.b16 %v4766, %v4765
  %v4776 = vpack.c.b16 %v4768, %v4767
  %v4801 = vunpack.c.l.b16 %v4737
  %v4802 = vunpack.c.l.b16 %v4738
  %v4803 = vunpack.c.l.b16 %v4739
  %v4804 = vunpack.c.l.b16 %v4740
  %v4805 = vunpack.c.l.b16 %v4741
  %v4806 = vunpack.c.l.b16 %v4742
  %v4807 = vunpack.c.l.b16 %v4743
  %v4808 = vunpack.c.l.b16 %v4744
  %v4809 = vunpack.c.l.b16 %v4745
  %v4810 = vunpack.c.l.b16 %v4746
  %v4811 = vunpack.c.l.b16 %v4747
  %v4812 = vunpack.c.l.b16 %v4748
  %v4813 = vunpack.c.l.b16 %v4749
  %v4814 = vunpack.c.l.b16 %v4750
  %v4815 = vunpack.c.l.b16 %v4751
  %v4816 = vunpack.c.l.b16 %v4752
  %v4817 = vpack.c.b16 %v4802, %v4801
  %v4818 = vpack.c.b16 %v4804, %v4803
  %v4819 = vpack.c.b16 %v4806, %v4805
  %v4820 = vpack.c.b16 %v4808, %v4807
  %v4821 = vpack.c.b16 %v4810, %v4809
  %v4822 = vpack.c.b16 %v4812, %v4811
  %v4823 = vpack.c.b16 %v4814, %v4813
  %v4824 = vpack.c.b16 %v4816, %v4815
  %4833 = vmatpush.bf16.msra.mxu0 %v4824
  %4834 = vmatpush.bf16.msra.mxu0 %v4823
  %4835 = vmatpush.bf16.msra.mxu0 %v4822
  %4836 = vmatpush.bf16.msra.mxu0 %v4821
  %4837 = vmatpush.bf16.msra.mxu0 %v4820
  %4838 = vmatpush.bf16.msra.mxu0 %v4819
  %4839 = vmatpush.bf16.msra.mxu0 %v4818
  %4840 = vmatpush.bf16.msra.mxu0 %v4817
  %4841 = vmatmul.bf16.gmra.mxu0 %v4769
  %v4842 = vpop.f32.mrf.mxu0
  %v4843 = vadd.f32 0.0, %v4842
  %v4844 = vpop.f32.mrf.mxu0
  %v4845 = vadd.f32 0.0, %v4844
  %4846 = vmatmul.bf16.gmra.mxu0 %v4770
  %v4847 = vpop.f32.mrf.mxu0
  %v4848 = vadd.f32 0.0, %v4847
  %v4849 = vpop.f32.mrf.mxu0
  %v4850 = vadd.f32 0.0, %v4849
  %4851 = vmatmul.bf16.gmra.mxu0 %v4771
  %v4852 = vpop.f32.mrf.mxu0
  %v4853 = vadd.f32 0.0, %v4852
  %v4854 = vpop.f32.mrf.mxu0
  %v4855 = vadd.f32 0.0, %v4854
  %4856 = vmatmul.bf16.gmra.mxu0 %v4772
  %v4857 = vpop.f32.mrf.mxu0
  %v4858 = vadd.f32 0.0, %v4857
  %v4859 = vpop.f32.mrf.mxu0
  %v4860 = vadd.f32 0.0, %v4859
  %4861 = vmatmul.bf16.gmra.mxu0 %v4773
  %v4862 = vpop.f32.mrf.mxu0
  %v4863 = vadd.f32 0.0, %v4862
  %v4864 = vpop.f32.mrf.mxu0
  %v4865 = vadd.f32 0.0, %v4864
  %4866 = vmatmul.bf16.gmra.mxu0 %v4774
  %v4867 = vpop.f32.mrf.mxu0
  %v4868 = vadd.f32 0.0, %v4867
  %v4869 = vpop.f32.mrf.mxu0
  %v4870 = vadd.f32 0.0, %v4869
  %4871 = vmatmul.bf16.gmra.mxu0 %v4775
  %v4872 = vpop.f32.mrf.mxu0
  %v4873 = vadd.f32 0.0, %v4872
  %v4874 = vpop.f32.mrf.mxu0
  %v4875 = vadd.f32 0.0, %v4874
  %4876 = vmatmul.bf16.gmra.mxu0 %v4776
  %v4877 = vpop.f32.mrf.mxu0
  %v4878 = vadd.f32 0.0, %v4877
  %v4879 = vpop.f32.mrf.mxu0
  %v4880 = vadd.f32 0.0, %v4879
  %4881 = vdwg.mxu0
  %v4882 = vadd.f32 %v4464, %v4843
  %v4883 = vadd.f32 %v4465, %v4845
  %v4884 = vadd.f32 %v4466, %v4848
  %v4885 = vadd.f32 %v4467, %v4850
  %v4886 = vadd.f32 %v4468, %v4853
  %v4887 = vadd.f32 %v4469, %v4855
  %v4888 = vadd.f32 %v4470, %v4858
  %v4889 = vadd.f32 %v4471, %v4860
  %v4890 = vadd.f32 %v4472, %v4863
  %v4891 = vadd.f32 %v4473, %v4865
  %v4892 = vadd.f32 %v4474, %v4868
  %v4893 = vadd.f32 %v4475, %v4870
  %v4894 = vadd.f32 %v4476, %v4873
  %v4895 = vadd.f32 %v4477, %v4875
  %v4896 = vadd.f32 %v4478, %v4878
  %v4897 = vadd.f32 %v4479, %v4880
  %v4898 = vld [vmem:[%s3218] sm:$0xe]
  %v4899 = vld [vmem:[%s3218 + $0x8] sm:$0xe]
  %v4900 = vld [vmem:[%s3218 + $0x10] sm:$0xe]
  %v4901 = vld [vmem:[%s3218 + $0x18] sm:$0xe]
  %v4902 = vld [vmem:[%s3218 + $0x20] sm:$0xe]
  %v4903 = vld [vmem:[%s3218 + $0x28] sm:$0xe]
  %v4904 = vld [vmem:[%s3218 + $0x30] sm:$0xe]
  %v4905 = vld [vmem:[%s3218 + $0x38] sm:$0xe]
  %v4906 = vld [vmem:[%s3218 + $0x50] sm:$0xe]
  %v4907 = vld [vmem:[%s3218 + $0x58] sm:$0xe]
  %v4908 = vld [vmem:[%s3218 + $0x60] sm:$0xe]
  %v4909 = vld [vmem:[%s3218 + $0x68] sm:$0xe]
  %v4910 = vld [vmem:[%s3218 + $0x70] sm:$0xe]
  %v4911 = vld [vmem:[%s3218 + $0x78] sm:$0xe]
  %v4912 = vld [vmem:[%s3218 + $0x80] sm:$0xe]
  %v4913 = vld [vmem:[%s3218 + $0x88] sm:$0xe]
  %v4946 = vrot.slane %v4898, 5
  %v4947 = vrot.slane %v4946, 4
  %v4948 = vrot.slane %v4481, 5
  %v4949 = vsel %vm1210, %v4947, %v4948
  %v4950 = vrot.slane %v4899, 5
  %v4951 = vrot.slane %v4950, 4
  %v4952 = vrot.slane %v4483, 5
  %v4953 = vsel %vm1210, %v4951, %v4952
  %v4954 = vrot.slane %v4900, 5
  %v4955 = vrot.slane %v4954, 4
  %v4956 = vrot.slane %v4485, 5
  %v4957 = vsel %vm1210, %v4955, %v4956
  %v4958 = vrot.slane %v4901, 5
  %v4959 = vrot.slane %v4958, 4
  %v4960 = vrot.slane %v4487, 5
  %v4961 = vsel %vm1210, %v4959, %v4960
  %v4962 = vrot.slane %v4902, 5
  %v4963 = vrot.slane %v4962, 4
  %v4964 = vrot.slane %v4489, 5
  %v4965 = vsel %vm1210, %v4963, %v4964
  %v4966 = vrot.slane %v4903, 5
  %v4967 = vrot.slane %v4966, 4
  %v4968 = vrot.slane %v4491, 5
  %v4969 = vsel %vm1210, %v4967, %v4968
  %v4970 = vrot.slane %v4904, 5
  %v4971 = vrot.slane %v4970, 4
  %v4972 = vrot.slane %v4493, 5
  %v4973 = vsel %vm1210, %v4971, %v4972
  %v4974 = vrot.slane %v4905, 5
  %v4975 = vrot.slane %v4974, 4
  %v4976 = vrot.slane %v4495, 5
  %v4977 = vsel %vm1210, %v4975, %v4976
  %v4978 = vrot.slane %v4906, 5
  %v4979 = vrot.slane %v4978, 4
  %v4980 = vrot.slane %v4497, 5
  %v4981 = vsel %vm1210, %v4979, %v4980
  %v4982 = vrot.slane %v4907, 5
  %v4983 = vrot.slane %v4982, 4
  %v4984 = vrot.slane %v4499, 5
  %v4985 = vsel %vm1210, %v4983, %v4984
  %v4986 = vrot.slane %v4908, 5
  %v4987 = vrot.slane %v4986, 4
  %v4988 = vrot.slane %v4501, 5
  %v4989 = vsel %vm1210, %v4987, %v4988
  %v4990 = vrot.slane %v4909, 5
  %v4991 = vrot.slane %v4990, 4
  %v4992 = vrot.slane %v4503, 5
  %v4993 = vsel %vm1210, %v4991, %v4992
  %v4994 = vrot.slane %v4910, 5
  %v4995 = vrot.slane %v4994, 4
  %v4996 = vrot.slane %v4505, 5
  %v4997 = vsel %vm1210, %v4995, %v4996
  %v4998 = vrot.slane %v4911, 5
  %v4999 = vrot.slane %v4998, 4
  %v5000 = vrot.slane %v4507, 5
  %v5001 = vsel %vm1210, %v4999, %v5000
  %v5002 = vrot.slane %v4912, 5
  %v5003 = vrot.slane %v5002, 4
  %v5004 = vrot.slane %v4509, 5
  %v5005 = vsel %vm1210, %v5003, %v5004
  %v5006 = vrot.slane %v4913, 5
  %v5007 = vrot.slane %v5006, 4
  %v5008 = vrot.slane %v4511, 5
  %v5009 = vsel %vm1210, %v5007, %v5008
  %s5010 = scalar_lea.vmem %s6, 320
  %v5011 = vld [vmem:[%s5010] sm:$0xf]
  %v5012 = vld [vmem:[%s5010 + $0x4] sm:$0xf]
  %v5013 = vld [vmem:[%s5010 + $0x8] sm:$0xf]
  %v5014 = vld [vmem:[%s5010 + $0xc] sm:$0xf]
  %v5015 = vld [vmem:[%s5010 + $0x10] sm:$0xf]
  %v5016 = vld [vmem:[%s5010 + $0x14] sm:$0xf]
  %v5017 = vld [vmem:[%s5010 + $0x18] sm:$0xf]
  %v5018 = vld [vmem:[%s5010 + $0x1c] sm:$0xf]
  %v5019 = vld [vmem:[%s5010 + $0x20] sm:$0xf]
  %v5020 = vld [vmem:[%s5010 + $0x24] sm:$0xf]
  %v5021 = vld [vmem:[%s5010 + $0x28] sm:$0xf]
  %v5022 = vld [vmem:[%s5010 + $0x2c] sm:$0xf]
  %v5023 = vld [vmem:[%s5010 + $0x30] sm:$0xf]
  %v5024 = vld [vmem:[%s5010 + $0x34] sm:$0xf]
  %v5025 = vld [vmem:[%s5010 + $0x38] sm:$0xf]
  %v5026 = vld [vmem:[%s5010 + $0x3c] sm:$0xf]
  %v5027 = vunpack.c.l.b16 %v4949
  %v5028 = vunpack.c.l.b16 %v4953
  %v5029 = vunpack.c.l.b16 %v4957
  %v5030 = vunpack.c.l.b16 %v4961
  %v5031 = vunpack.c.l.b16 %v4965
  %v5032 = vunpack.c.l.b16 %v4969
  %v5033 = vunpack.c.l.b16 %v4973
  %v5034 = vunpack.c.l.b16 %v4977
  %v5035 = vunpack.c.l.b16 %v4981
  %v5036 = vunpack.c.l.b16 %v4985
  %v5037 = vunpack.c.l.b16 %v4989
  %v5038 = vunpack.c.l.b16 %v4993
  %v5039 = vunpack.c.l.b16 %v4997
  %v5040 = vunpack.c.l.b16 %v5001
  %v5041 = vunpack.c.l.b16 %v5005
  %v5042 = vunpack.c.l.b16 %v5009
  %v5043 = vpack.c.b16 %v5028, %v5027
  %v5044 = vpack.c.b16 %v5030, %v5029
  %v5045 = vpack.c.b16 %v5032, %v5031
  %v5046 = vpack.c.b16 %v5034, %v5033
  %v5047 = vpack.c.b16 %v5036, %v5035
  %v5048 = vpack.c.b16 %v5038, %v5037
  %v5049 = vpack.c.b16 %v5040, %v5039
  %v5050 = vpack.c.b16 %v5042, %v5041
  %v5075 = vunpack.c.l.b16 %v5011
  %v5076 = vunpack.c.l.b16 %v5012
  %v5077 = vunpack.c.l.b16 %v5013
  %v5078 = vunpack.c.l.b16 %v5014
  %v5079 = vunpack.c.l.b16 %v5015
  %v5080 = vunpack.c.l.b16 %v5016
  %v5081 = vunpack.c.l.b16 %v5017
  %v5082 = vunpack.c.l.b16 %v5018
  %v5083 = vunpack.c.l.b16 %v5019
  %v5084 = vunpack.c.l.b16 %v5020
  %v5085 = vunpack.c.l.b16 %v5021
  %v5086 = vunpack.c.l.b16 %v5022
  %v5087 = vunpack.c.l.b16 %v5023
  %v5088 = vunpack.c.l.b16 %v5024
  %v5089 = vunpack.c.l.b16 %v5025
  %v5090 = vunpack.c.l.b16 %v5026
  %v5091 = vpack.c.b16 %v5076, %v5075
  %v5092 = vpack.c.b16 %v5078, %v5077
  %v5093 = vpack.c.b16 %v5080, %v5079
  %v5094 = vpack.c.b16 %v5082, %v5081
  %v5095 = vpack.c.b16 %v5084, %v5083
  %v5096 = vpack.c.b16 %v5086, %v5085
  %v5097 = vpack.c.b16 %v5088, %v5087
  %v5098 = vpack.c.b16 %v5090, %v5089
  %5107 = vmatpush.bf16.msra.mxu0 %v5098
  %5108 = vmatpush.bf16.msra.mxu0 %v5097
  %5109 = vmatpush.bf16.msra.mxu0 %v5096
  %5110 = vmatpush.bf16.msra.mxu0 %v5095
  %5111 = vmatpush.bf16.msra.mxu0 %v5094
  %5112 = vmatpush.bf16.msra.mxu0 %v5093
  %5113 = vmatpush.bf16.msra.mxu0 %v5092
  %5114 = vmatpush.bf16.msra.mxu0 %v5091
  %5115 = vmatmul.bf16.gmra.mxu0 %v5043
  %v5116 = vpop.f32.mrf.mxu0
  %v5117 = vadd.f32 0.0, %v5116
  %v5118 = vpop.f32.mrf.mxu0
  %v5119 = vadd.f32 0.0, %v5118
  %5120 = vmatmul.bf16.gmra.mxu0 %v5044
  %v5121 = vpop.f32.mrf.mxu0
  %v5122 = vadd.f32 0.0, %v5121
  %v5123 = vpop.f32.mrf.mxu0
  %v5124 = vadd.f32 0.0, %v5123
  %5125 = vmatmul.bf16.gmra.mxu0 %v5045
  %v5126 = vpop.f32.mrf.mxu0
  %v5127 = vadd.f32 0.0, %v5126
  %v5128 = vpop.f32.mrf.mxu0
  %v5129 = vadd.f32 0.0, %v5128
  %5130 = vmatmul.bf16.gmra.mxu0 %v5046
  %v5131 = vpop.f32.mrf.mxu0
  %v5132 = vadd.f32 0.0, %v5131
  %v5133 = vpop.f32.mrf.mxu0
  %v5134 = vadd.f32 0.0, %v5133
  %5135 = vmatmul.bf16.gmra.mxu0 %v5047
  %v5136 = vpop.f32.mrf.mxu0
  %v5137 = vadd.f32 0.0, %v5136
  %v5138 = vpop.f32.mrf.mxu0
  %v5139 = vadd.f32 0.0, %v5138
  %5140 = vmatmul.bf16.gmra.mxu0 %v5048
  %v5141 = vpop.f32.mrf.mxu0
  %v5142 = vadd.f32 0.0, %v5141
  %v5143 = vpop.f32.mrf.mxu0
  %v5144 = vadd.f32 0.0, %v5143
  %5145 = vmatmul.bf16.gmra.mxu0 %v5049
  %v5146 = vpop.f32.mrf.mxu0
  %v5147 = vadd.f32 0.0, %v5146
  %v5148 = vpop.f32.mrf.mxu0
  %v5149 = vadd.f32 0.0, %v5148
  %5150 = vmatmul.bf16.gmra.mxu0 %v5050
  %v5151 = vpop.f32.mrf.mxu0
  %v5152 = vadd.f32 0.0, %v5151
  %v5153 = vpop.f32.mrf.mxu0
  %v5154 = vadd.f32 0.0, %v5153
  %5155 = vdwg.mxu0
  %v5156 = vadd.f32 %v4882, %v5117
  %v5157 = vadd.f32 %v4883, %v5119
  %v5158 = vadd.f32 %v4884, %v5122
  %v5159 = vadd.f32 %v4885, %v5124
  %v5160 = vadd.f32 %v4886, %v5127
  %v5161 = vadd.f32 %v4887, %v5129
  %v5162 = vadd.f32 %v4888, %v5132
  %v5163 = vadd.f32 %v4889, %v5134
  %v5164 = vadd.f32 %v4890, %v5137
  %v5165 = vadd.f32 %v4891, %v5139
  %v5166 = vadd.f32 %v4892, %v5142
  %v5167 = vadd.f32 %v4893, %v5144
  %v5168 = vadd.f32 %v4894, %v5147
  %v5169 = vadd.f32 %v4895, %v5149
  %v5170 = vadd.f32 %v4896, %v5152
  %v5171 = vadd.f32 %v4897, %v5154
  %s5172 = scalar_lea.vmem [#allocation3], 16
  %v5173 = vld [vmem:[%s5172] sm:$0xf]
  %v5174 = vld [vmem:[%s5172 + $0x8] sm:$0xf]
  %v5175 = vld [vmem:[%s5172 + $0x10] sm:$0xf]
  %v5176 = vld [vmem:[%s5172 + $0x18] sm:$0xf]
  %v5177 = vld [vmem:[%s5172 + $0x20] sm:$0xf]
  %v5178 = vld [vmem:[%s5172 + $0x28] sm:$0xf]
  %v5179 = vld [vmem:[%s5172 + $0x30] sm:$0xf]
  %v5180 = vld [vmem:[%s5172 + $0x38] sm:$0xf]
  %v5181 = vld [vmem:[%s5172 + $0x50] sm:$0xf]
  %v5182 = vld [vmem:[%s5172 + $0x58] sm:$0xf]
  %v5183 = vld [vmem:[%s5172 + $0x60] sm:$0xf]
  %v5184 = vld [vmem:[%s5172 + $0x68] sm:$0xf]
  %v5185 = vld [vmem:[%s5172 + $0x70] sm:$0xf]
  %v5186 = vld [vmem:[%s5172 + $0x78] sm:$0xf]
  %v5187 = vld [vmem:[%s5172 + $0x80] sm:$0xf]
  %v5188 = vld [vmem:[%s5172 + $0x88] sm:$0xf]
  %s5189 = scalar_lea.vmem %s6, 384
  %v5190 = vld [vmem:[%s5189] sm:$0xf]
  %v5191 = vld [vmem:[%s5189 + $0x4] sm:$0xf]
  %v5192 = vld [vmem:[%s5189 + $0x8] sm:$0xf]
  %v5193 = vld [vmem:[%s5189 + $0xc] sm:$0xf]
  %v5194 = vld [vmem:[%s5189 + $0x10] sm:$0xf]
  %v5195 = vld [vmem:[%s5189 + $0x14] sm:$0xf]
  %v5196 = vld [vmem:[%s5189 + $0x18] sm:$0xf]
  %v5197 = vld [vmem:[%s5189 + $0x1c] sm:$0xf]
  %v5198 = vld [vmem:[%s5189 + $0x20] sm:$0xf]
  %v5199 = vld [vmem:[%s5189 + $0x24] sm:$0xf]
  %v5200 = vld [vmem:[%s5189 + $0x28] sm:$0xf]
  %v5201 = vld [vmem:[%s5189 + $0x2c] sm:$0xf]
  %v5202 = vld [vmem:[%s5189 + $0x30] sm:$0xf]
  %v5203 = vld [vmem:[%s5189 + $0x34] sm:$0xf]
  %v5204 = vld [vmem:[%s5189 + $0x38] sm:$0xf]
  %v5205 = vld [vmem:[%s5189 + $0x3c] sm:$0xf]
  %v5222 = vunpack.c.l.b16 %v5173
  %v5223 = vunpack.c.l.b16 %v5174
  %v5224 = vunpack.c.l.b16 %v5175
  %v5225 = vunpack.c.l.b16 %v5176
  %v5226 = vunpack.c.l.b16 %v5177
  %v5227 = vunpack.c.l.b16 %v5178
  %v5228 = vunpack.c.l.b16 %v5179
  %v5229 = vunpack.c.l.b16 %v5180
  %v5230 = vunpack.c.l.b16 %v5181
  %v5231 = vunpack.c.l.b16 %v5182
  %v5232 = vunpack.c.l.b16 %v5183
  %v5233 = vunpack.c.l.b16 %v5184
  %v5234 = vunpack.c.l.b16 %v5185
  %v5235 = vunpack.c.l.b16 %v5186
  %v5236 = vunpack.c.l.b16 %v5187
  %v5237 = vunpack.c.l.b16 %v5188
  %v5238 = vpack.c.b16 %v5223, %v5222
  %v5239 = vpack.c.b16 %v5225, %v5224
  %v5240 = vpack.c.b16 %v5227, %v5226
  %v5241 = vpack.c.b16 %v5229, %v5228
  %v5242 = vpack.c.b16 %v5231, %v5230
  %v5243 = vpack.c.b16 %v5233, %v5232
  %v5244 = vpack.c.b16 %v5235, %v5234
  %v5245 = vpack.c.b16 %v5237, %v5236
  %v5270 = vunpack.c.l.b16 %v5190
  %v5271 = vunpack.c.l.b16 %v5191
  %v5272 = vunpack.c.l.b16 %v5192
  %v5273 = vunpack.c.l.b16 %v5193
  %v5274 = vunpack.c.l.b16 %v5194
  %v5275 = vunpack.c.l.b16 %v5195
  %v5276 = vunpack.c.l.b16 %v5196
  %v5277 = vunpack.c.l.b16 %v5197
  %v5278 = vunpack.c.l.b16 %v5198
  %v5279 = vunpack.c.l.b16 %v5199
  %v5280 = vunpack.c.l.b16 %v5200
  %v5281 = vunpack.c.l.b16 %v5201
  %v5282 = vunpack.c.l.b16 %v5202
  %v5283 = vunpack.c.l.b16 %v5203
  %v5284 = vunpack.c.l.b16 %v5204
  %v5285 = vunpack.c.l.b16 %v5205
  %v5286 = vpack.c.b16 %v5271, %v5270
  %v5287 = vpack.c.b16 %v5273, %v5272
  %v5288 = vpack.c.b16 %v5275, %v5274
  %v5289 = vpack.c.b16 %v5277, %v5276
  %v5290 = vpack.c.b16 %v5279, %v5278
  %v5291 = vpack.c.b16 %v5281, %v5280
  %v5292 = vpack.c.b16 %v5283, %v5282
  %v5293 = vpack.c.b16 %v5285, %v5284
  %5302 = vmatpush.bf16.msra.mxu0 %v5293
  %5303 = vmatpush.bf16.msra.mxu0 %v5292
  %5304 = vmatpush.bf16.msra.mxu0 %v5291
  %5305 = vmatpush.bf16.msra.mxu0 %v5290
  %5306 = vmatpush.bf16.msra.mxu0 %v5289
  %5307 = vmatpush.bf16.msra.mxu0 %v5288
  %5308 = vmatpush.bf16.msra.mxu0 %v5287
  %5309 = vmatpush.bf16.msra.mxu0 %v5286
  %5310 = vmatmul.bf16.gmra.mxu0 %v5238
  %v5311 = vpop.f32.mrf.mxu0
  %v5312 = vadd.f32 0.0, %v5311
  %v5313 = vpop.f32.mrf.mxu0
  %v5314 = vadd.f32 0.0, %v5313
  %5315 = vmatmul.bf16.gmra.mxu0 %v5239
  %v5316 = vpop.f32.mrf.mxu0
  %v5317 = vadd.f32 0.0, %v5316
  %v5318 = vpop.f32.mrf.mxu0
  %v5319 = vadd.f32 0.0, %v5318
  %5320 = vmatmul.bf16.gmra.mxu0 %v5240
  %v5321 = vpop.f32.mrf.mxu0
  %v5322 = vadd.f32 0.0, %v5321
  %v5323 = vpop.f32.mrf.mxu0
  %v5324 = vadd.f32 0.0, %v5323
  %5325 = vmatmul.bf16.gmra.mxu0 %v5241
  %v5326 = vpop.f32.mrf.mxu0
  %v5327 = vadd.f32 0.0, %v5326
  %v5328 = vpop.f32.mrf.mxu0
  %v5329 = vadd.f32 0.0, %v5328
  %5330 = vmatmul.bf16.gmra.mxu0 %v5242
  %v5331 = vpop.f32.mrf.mxu0
  %v5332 = vadd.f32 0.0, %v5331
  %v5333 = vpop.f32.mrf.mxu0
  %v5334 = vadd.f32 0.0, %v5333
  %5335 = vmatmul.bf16.gmra.mxu0 %v5243
  %v5336 = vpop.f32.mrf.mxu0
  %v5337 = vadd.f32 0.0, %v5336
  %v5338 = vpop.f32.mrf.mxu0
  %v5339 = vadd.f32 0.0, %v5338
  %5340 = vmatmul.bf16.gmra.mxu0 %v5244
  %v5341 = vpop.f32.mrf.mxu0
  %v5342 = vadd.f32 0.0, %v5341
  %v5343 = vpop.f32.mrf.mxu0
  %v5344 = vadd.f32 0.0, %v5343
  %5345 = vmatmul.bf16.gmra.mxu0 %v5245
  %v5346 = vpop.f32.mrf.mxu0
  %v5347 = vadd.f32 0.0, %v5346
  %v5348 = vpop.f32.mrf.mxu0
  %v5349 = vadd.f32 0.0, %v5348
  %5350 = vdwg.mxu0
  %v5351 = vadd.f32 %v5156, %v5312
  %v5352 = vadd.f32 %v5157, %v5314
  %v5353 = vadd.f32 %v5158, %v5317
  %v5354 = vadd.f32 %v5159, %v5319
  %v5355 = vadd.f32 %v5160, %v5322
  %v5356 = vadd.f32 %v5161, %v5324
  %v5357 = vadd.f32 %v5162, %v5327
  %v5358 = vadd.f32 %v5163, %v5329
  %v5359 = vadd.f32 %v5164, %v5332
  %v5360 = vadd.f32 %v5165, %v5334
  %v5361 = vadd.f32 %v5166, %v5337
  %v5362 = vadd.f32 %v5167, %v5339
  %v5363 = vadd.f32 %v5168, %v5342
  %v5364 = vadd.f32 %v5169, %v5344
  %v5365 = vadd.f32 %v5170, %v5347
  %v5366 = vadd.f32 %v5171, %v5349
  %v5367 = vld [vmem:[%s5172] sm:$0xf]
  %v5368 = vld [vmem:[%s5172 + $0x4] sm:$0x1]
  %v5369 = vld [vmem:[%s5172 + $0x8] sm:$0xf]
  %v5370 = vld [vmem:[%s5172 + $0xc] sm:$0x1]
  %v5371 = vld [vmem:[%s5172 + $0x10] sm:$0xf]
  %v5372 = vld [vmem:[%s5172 + $0x14] sm:$0x1]
  %v5373 = vld [vmem:[%s5172 + $0x18] sm:$0xf]
  %v5374 = vld [vmem:[%s5172 + $0x1c] sm:$0x1]
  %v5375 = vld [vmem:[%s5172 + $0x20] sm:$0xf]
  %v5376 = vld [vmem:[%s5172 + $0x24] sm:$0x1]
  %v5377 = vld [vmem:[%s5172 + $0x28] sm:$0xf]
  %v5378 = vld [vmem:[%s5172 + $0x2c] sm:$0x1]
  %v5379 = vld [vmem:[%s5172 + $0x30] sm:$0xf]
  %v5380 = vld [vmem:[%s5172 + $0x34] sm:$0x1]
  %v5381 = vld [vmem:[%s5172 + $0x38] sm:$0xf]
  %v5382 = vld [vmem:[%s5172 + $0x3c] sm:$0x1]
  %v5383 = vld [vmem:[%s5172 + $0x50] sm:$0xf]
  %v5384 = vld [vmem:[%s5172 + $0x54] sm:$0x1]
  %v5385 = vld [vmem:[%s5172 + $0x58] sm:$0xf]
  %v5386 = vld [vmem:[%s5172 + $0x5c] sm:$0x1]
  %v5387 = vld [vmem:[%s5172 + $0x60] sm:$0xf]
  %v5388 = vld [vmem:[%s5172 + $0x64] sm:$0x1]
  %v5389 = vld [vmem:[%s5172 + $0x68] sm:$0xf]
  %v5390 = vld [vmem:[%s5172 + $0x6c] sm:$0x1]
  %v5391 = vld [vmem:[%s5172 + $0x70] sm:$0xf]
  %v5392 = vld [vmem:[%s5172 + $0x74] sm:$0x1]
  %v5393 = vld [vmem:[%s5172 + $0x78] sm:$0xf]
  %v5394 = vld [vmem:[%s5172 + $0x7c] sm:$0x1]
  %v5395 = vld [vmem:[%s5172 + $0x80] sm:$0xf]
  %v5396 = vld [vmem:[%s5172 + $0x84] sm:$0x1]
  %v5397 = vld [vmem:[%s5172 + $0x88] sm:$0xf]
  %v5398 = vld [vmem:[%s5172 + $0x8c] sm:$0x1]
  %v5400 = vshrl.u32 %v5367, 16
  %v5402 = vrot.slane %v5400, 4
  %v5403 = vshll.u32 %v5367, 16
  %v5405 = vrot.slane %v5403, 5
  %v5406 = vor.u32 %v5402, %v5405
  %v5407 = vrot.slane %v5406, 4
  %v5409 = vshll.u32 %v5368, 16
  %v5411 = vrot.slane %v5409, 5
  %v5412 = vsel %vm695, %v5407, %v5411
  %v5414 = vshrl.u32 %v5369, 16
  %v5416 = vrot.slane %v5414, 4
  %v5417 = vshll.u32 %v5369, 16
  %v5419 = vrot.slane %v5417, 5
  %v5420 = vor.u32 %v5416, %v5419
  %v5421 = vrot.slane %v5420, 4
  %v5423 = vshll.u32 %v5370, 16
  %v5425 = vrot.slane %v5423, 5
  %v5426 = vsel %vm695, %v5421, %v5425
  %v5428 = vshrl.u32 %v5371, 16
  %v5430 = vrot.slane %v5428, 4
  %v5431 = vshll.u32 %v5371, 16
  %v5433 = vrot.slane %v5431, 5
  %v5434 = vor.u32 %v5430, %v5433
  %v5435 = vrot.slane %v5434, 4
  %v5437 = vshll.u32 %v5372, 16
  %v5439 = vrot.slane %v5437, 5
  %v5440 = vsel %vm695, %v5435, %v5439
  %v5442 = vshrl.u32 %v5373, 16
  %v5444 = vrot.slane %v5442, 4
  %v5445 = vshll.u32 %v5373, 16
  %v5447 = vrot.slane %v5445, 5
  %v5448 = vor.u32 %v5444, %v5447
  %v5449 = vrot.slane %v5448, 4
  %v5451 = vshll.u32 %v5374, 16
  %v5453 = vrot.slane %v5451, 5
  %v5454 = vsel %vm695, %v5449, %v5453
  %v5456 = vshrl.u32 %v5375, 16
  %v5458 = vrot.slane %v5456, 4
  %v5459 = vshll.u32 %v5375, 16
  %v5461 = vrot.slane %v5459, 5
  %v5462 = vor.u32 %v5458, %v5461
  %v5463 = vrot.slane %v5462, 4
  %v5465 = vshll.u32 %v5376, 16
  %v5467 = vrot.slane %v5465, 5
  %v5468 = vsel %vm695, %v5463, %v5467
  %v5470 = vshrl.u32 %v5377, 16
  %v5472 = vrot.slane %v5470, 4
  %v5473 = vshll.u32 %v5377, 16
  %v5475 = vrot.slane %v5473, 5
  %v5476 = vor.u32 %v5472, %v5475
  %v5477 = vrot.slane %v5476, 4
  %v5479 = vshll.u32 %v5378, 16
  %v5481 = vrot.slane %v5479, 5
  %v5482 = vsel %vm695, %v5477, %v5481
  %v5484 = vshrl.u32 %v5379, 16
  %v5486 = vrot.slane %v5484, 4
  %v5487 = vshll.u32 %v5379, 16
  %v5489 = vrot.slane %v5487, 5
  %v5490 = vor.u32 %v5486, %v5489
  %v5491 = vrot.slane %v5490, 4
  %v5493 = vshll.u32 %v5380, 16
  %v5495 = vrot.slane %v5493, 5
  %v5496 = vsel %vm695, %v5491, %v5495
  %v5498 = vshrl.u32 %v5381, 16
  %v5500 = vrot.slane %v5498, 4
  %v5501 = vshll.u32 %v5381, 16
  %v5503 = vrot.slane %v5501, 5
  %v5504 = vor.u32 %v5500, %v5503
  %v5505 = vrot.slane %v5504, 4
  %v5507 = vshll.u32 %v5382, 16
  %v5509 = vrot.slane %v5507, 5
  %v5510 = vsel %vm695, %v5505, %v5509
  %v5512 = vshrl.u32 %v5383, 16
  %v5514 = vrot.slane %v5512, 4
  %v5515 = vshll.u32 %v5383, 16
  %v5517 = vrot.slane %v5515, 5
  %v5518 = vor.u32 %v5514, %v5517
  %v5519 = vrot.slane %v5518, 4
  %v5521 = vshll.u32 %v5384, 16
  %v5523 = vrot.slane %v5521, 5
  %v5524 = vsel %vm695, %v5519, %v5523
  %v5526 = vshrl.u32 %v5385, 16
  %v5528 = vrot.slane %v5526, 4
  %v5529 = vshll.u32 %v5385, 16
  %v5531 = vrot.slane %v5529, 5
  %v5532 = vor.u32 %v5528, %v5531
  %v5533 = vrot.slane %v5532, 4
  %v5535 = vshll.u32 %v5386, 16
  %v5537 = vrot.slane %v5535, 5
  %v5538 = vsel %vm695, %v5533, %v5537
  %v5540 = vshrl.u32 %v5387, 16
  %v5542 = vrot.slane %v5540, 4
  %v5543 = vshll.u32 %v5387, 16
  %v5545 = vrot.slane %v5543, 5
  %v5546 = vor.u32 %v5542, %v5545
  %v5547 = vrot.slane %v5546, 4
  %v5549 = vshll.u32 %v5388, 16
  %v5551 = vrot.slane %v5549, 5
  %v5552 = vsel %vm695, %v5547, %v5551
  %v5554 = vshrl.u32 %v5389, 16
  %v5556 = vrot.slane %v5554, 4
  %v5557 = vshll.u32 %v5389, 16
  %v5559 = vrot.slane %v5557, 5
  %v5560 = vor.u32 %v5556, %v5559
  %v5561 = vrot.slane %v5560, 4
  %v5563 = vshll.u32 %v5390, 16
  %v5565 = vrot.slane %v5563, 5
  %v5566 = vsel %vm695, %v5561, %v5565
  %v5568 = vshrl.u32 %v5391, 16
  %v5570 = vrot.slane %v5568, 4
  %v5571 = vshll.u32 %v5391, 16
  %v5573 = vrot.slane %v5571, 5
  %v5574 = vor.u32 %v5570, %v5573
  %v5575 = vrot.slane %v5574, 4
  %v5577 = vshll.u32 %v5392, 16
  %v5579 = vrot.slane %v5577, 5
  %v5580 = vsel %vm695, %v5575, %v5579
  %v5582 = vshrl.u32 %v5393, 16
  %v5584 = vrot.slane %v5582, 4
  %v5585 = vshll.u32 %v5393, 16
  %v5587 = vrot.slane %v5585, 5
  %v5588 = vor.u32 %v5584, %v5587
  %v5589 = vrot.slane %v5588, 4
  %v5591 = vshll.u32 %v5394, 16
  %v5593 = vrot.slane %v5591, 5
  %v5594 = vsel %vm695, %v5589, %v5593
  %v5596 = vshrl.u32 %v5395, 16
  %v5598 = vrot.slane %v5596, 4
  %v5599 = vshll.u32 %v5395, 16
  %v5601 = vrot.slane %v5599, 5
  %v5602 = vor.u32 %v5598, %v5601
  %v5603 = vrot.slane %v5602, 4
  %v5605 = vshll.u32 %v5396, 16
  %v5607 = vrot.slane %v5605, 5
  %v5608 = vsel %vm695, %v5603, %v5607
  %v5610 = vshrl.u32 %v5397, 16
  %v5612 = vrot.slane %v5610, 4
  %v5613 = vshll.u32 %v5397, 16
  %v5615 = vrot.slane %v5613, 5
  %v5616 = vor.u32 %v5612, %v5615
  %v5617 = vrot.slane %v5616, 4
  %v5619 = vshll.u32 %v5398, 16
  %v5621 = vrot.slane %v5619, 5
  %v5622 = vsel %vm695, %v5617, %v5621
  %s5623 = scalar_lea.vmem %s6, 448
  %v5624 = vld [vmem:[%s5623] sm:$0xf]
  %v5625 = vld [vmem:[%s5623 + $0x4] sm:$0xf]
  %v5626 = vld [vmem:[%s5623 + $0x8] sm:$0xf]
  %v5627 = vld [vmem:[%s5623 + $0xc] sm:$0xf]
  %v5628 = vld [vmem:[%s5623 + $0x10] sm:$0xf]
  %v5629 = vld [vmem:[%s5623 + $0x14] sm:$0xf]
  %v5630 = vld [vmem:[%s5623 + $0x18] sm:$0xf]
  %v5631 = vld [vmem:[%s5623 + $0x1c] sm:$0xf]
  %v5632 = vld [vmem:[%s5623 + $0x20] sm:$0xf]
  %v5633 = vld [vmem:[%s5623 + $0x24] sm:$0xf]
  %v5634 = vld [vmem:[%s5623 + $0x28] sm:$0xf]
  %v5635 = vld [vmem:[%s5623 + $0x2c] sm:$0xf]
  %v5636 = vld [vmem:[%s5623 + $0x30] sm:$0xf]
  %v5637 = vld [vmem:[%s5623 + $0x34] sm:$0xf]
  %v5638 = vld [vmem:[%s5623 + $0x38] sm:$0xf]
  %v5639 = vld [vmem:[%s5623 + $0x3c] sm:$0xf]
  %v5640 = vunpack.c.l.b16 %v5412
  %v5641 = vunpack.c.l.b16 %v5426
  %v5642 = vunpack.c.l.b16 %v5440
  %v5643 = vunpack.c.l.b16 %v5454
  %v5644 = vunpack.c.l.b16 %v5468
  %v5645 = vunpack.c.l.b16 %v5482
  %v5646 = vunpack.c.l.b16 %v5496
  %v5647 = vunpack.c.l.b16 %v5510
  %v5648 = vunpack.c.l.b16 %v5524
  %v5649 = vunpack.c.l.b16 %v5538
  %v5650 = vunpack.c.l.b16 %v5552
  %v5651 = vunpack.c.l.b16 %v5566
  %v5652 = vunpack.c.l.b16 %v5580
  %v5653 = vunpack.c.l.b16 %v5594
  %v5654 = vunpack.c.l.b16 %v5608
  %v5655 = vunpack.c.l.b16 %v5622
  %v5656 = vpack.c.b16 %v5641, %v5640
  %v5657 = vpack.c.b16 %v5643, %v5642
  %v5658 = vpack.c.b16 %v5645, %v5644
  %v5659 = vpack.c.b16 %v5647, %v5646
  %v5660 = vpack.c.b16 %v5649, %v5648
  %v5661 = vpack.c.b16 %v5651, %v5650
  %v5662 = vpack.c.b16 %v5653, %v5652
  %v5663 = vpack.c.b16 %v5655, %v5654
  %v5688 = vunpack.c.l.b16 %v5624
  %v5689 = vunpack.c.l.b16 %v5625
  %v5690 = vunpack.c.l.b16 %v5626
  %v5691 = vunpack.c.l.b16 %v5627
  %v5692 = vunpack.c.l.b16 %v5628
  %v5693 = vunpack.c.l.b16 %v5629
  %v5694 = vunpack.c.l.b16 %v5630
  %v5695 = vunpack.c.l.b16 %v5631
  %v5696 = vunpack.c.l.b16 %v5632
  %v5697 = vunpack.c.l.b16 %v5633
  %v5698 = vunpack.c.l.b16 %v5634
  %v5699 = vunpack.c.l.b16 %v5635
  %v5700 = vunpack.c.l.b16 %v5636
  %v5701 = vunpack.c.l.b16 %v5637
  %v5702 = vunpack.c.l.b16 %v5638
  %v5703 = vunpack.c.l.b16 %v5639
  %v5704 = vpack.c.b16 %v5689, %v5688
  %v5705 = vpack.c.b16 %v5691, %v5690
  %v5706 = vpack.c.b16 %v5693, %v5692
  %v5707 = vpack.c.b16 %v5695, %v5694
  %v5708 = vpack.c.b16 %v5697, %v5696
  %v5709 = vpack.c.b16 %v5699, %v5698
  %v5710 = vpack.c.b16 %v5701, %v5700
  %v5711 = vpack.c.b16 %v5703, %v5702
  %5720 = vmatpush.bf16.msra.mxu0 %v5711
  %5721 = vmatpush.bf16.msra.mxu0 %v5710
  %5722 = vmatpush.bf16.msra.mxu0 %v5709
  %5723 = vmatpush.bf16.msra.mxu0 %v5708
  %5724 = vmatpush.bf16.msra.mxu0 %v5707
  %5725 = vmatpush.bf16.msra.mxu0 %v5706
  %5726 = vmatpush.bf16.msra.mxu0 %v5705
  %5727 = vmatpush.bf16.msra.mxu0 %v5704
  %5728 = vmatmul.bf16.gmra.mxu0 %v5656
  %v5729 = vpop.f32.mrf.mxu0
  %v5730 = vadd.f32 0.0, %v5729
  %v5731 = vpop.f32.mrf.mxu0
  %v5732 = vadd.f32 0.0, %v5731
  %5733 = vmatmul.bf16.gmra.mxu0 %v5657
  %v5734 = vpop.f32.mrf.mxu0
  %v5735 = vadd.f32 0.0, %v5734
  %v5736 = vpop.f32.mrf.mxu0
  %v5737 = vadd.f32 0.0, %v5736
  %5738 = vmatmul.bf16.gmra.mxu0 %v5658
  %v5739 = vpop.f32.mrf.mxu0
  %v5740 = vadd.f32 0.0, %v5739
  %v5741 = vpop.f32.mrf.mxu0
  %v5742 = vadd.f32 0.0, %v5741
  %5743 = vmatmul.bf16.gmra.mxu0 %v5659
  %v5744 = vpop.f32.mrf.mxu0
  %v5745 = vadd.f32 0.0, %v5744
  %v5746 = vpop.f32.mrf.mxu0
  %v5747 = vadd.f32 0.0, %v5746
  %5748 = vmatmul.bf16.gmra.mxu0 %v5660
  %v5749 = vpop.f32.mrf.mxu0
  %v5750 = vadd.f32 0.0, %v5749
  %v5751 = vpop.f32.mrf.mxu0
  %v5752 = vadd.f32 0.0, %v5751
  %5753 = vmatmul.bf16.gmra.mxu0 %v5661
  %v5754 = vpop.f32.mrf.mxu0
  %v5755 = vadd.f32 0.0, %v5754
  %v5756 = vpop.f32.mrf.mxu0
  %v5757 = vadd.f32 0.0, %v5756
  %5758 = vmatmul.bf16.gmra.mxu0 %v5662
  %v5759 = vpop.f32.mrf.mxu0
  %v5760 = vadd.f32 0.0, %v5759
  %v5761 = vpop.f32.mrf.mxu0
  %v5762 = vadd.f32 0.0, %v5761
  %5763 = vmatmul.bf16.gmra.mxu0 %v5663
  %v5764 = vpop.f32.mrf.mxu0
  %v5765 = vadd.f32 0.0, %v5764
  %v5766 = vpop.f32.mrf.mxu0
  %v5767 = vadd.f32 0.0, %v5766
  %5768 = vdwg.mxu0
  %v5769 = vadd.f32 %v5351, %v5730
  %v5770 = vadd.f32 %v5352, %v5732
  %v5771 = vadd.f32 %v5353, %v5735
  %v5772 = vadd.f32 %v5354, %v5737
  %v5773 = vadd.f32 %v5355, %v5740
  %v5774 = vadd.f32 %v5356, %v5742
  %v5775 = vadd.f32 %v5357, %v5745
  %v5776 = vadd.f32 %v5358, %v5747
  %v5777 = vadd.f32 %v5359, %v5750
  %v5778 = vadd.f32 %v5360, %v5752
  %v5779 = vadd.f32 %v5361, %v5755
  %v5780 = vadd.f32 %v5362, %v5757
  %v5781 = vadd.f32 %v5363, %v5760
  %v5782 = vadd.f32 %v5364, %v5762
  %v5783 = vadd.f32 %v5365, %v5765
  %v5784 = vadd.f32 %v5366, %v5767
  %v5785 = vld [vmem:[%s5172] sm:$0xe]
  %v5786 = vld [vmem:[%s5172 + $0x8] sm:$0xe]
  %v5787 = vld [vmem:[%s5172 + $0x10] sm:$0xe]
  %v5788 = vld [vmem:[%s5172 + $0x18] sm:$0xe]
  %v5789 = vld [vmem:[%s5172 + $0x20] sm:$0xe]
  %v5790 = vld [vmem:[%s5172 + $0x28] sm:$0xe]
  %v5791 = vld [vmem:[%s5172 + $0x30] sm:$0xe]
  %v5792 = vld [vmem:[%s5172 + $0x38] sm:$0xe]
  %v5793 = vld [vmem:[%s5172 + $0x50] sm:$0xe]
  %v5794 = vld [vmem:[%s5172 + $0x58] sm:$0xe]
  %v5795 = vld [vmem:[%s5172 + $0x60] sm:$0xe]
  %v5796 = vld [vmem:[%s5172 + $0x68] sm:$0xe]
  %v5797 = vld [vmem:[%s5172 + $0x70] sm:$0xe]
  %v5798 = vld [vmem:[%s5172 + $0x78] sm:$0xe]
  %v5799 = vld [vmem:[%s5172 + $0x80] sm:$0xe]
  %v5800 = vld [vmem:[%s5172 + $0x88] sm:$0xe]
  %v5833 = vrot.slane %v5785, 5
  %v5834 = vrot.slane %v5833, 4
  %v5835 = vrot.slane %v5368, 5
  %v5836 = vsel %vm1210, %v5834, %v5835
  %v5837 = vrot.slane %v5786, 5
  %v5838 = vrot.slane %v5837, 4
  %v5839 = vrot.slane %v5370, 5
  %v5840 = vsel %vm1210, %v5838, %v5839
  %v5841 = vrot.slane %v5787, 5
  %v5842 = vrot.slane %v5841, 4
  %v5843 = vrot.slane %v5372, 5
  %v5844 = vsel %vm1210, %v5842, %v5843
  %v5845 = vrot.slane %v5788, 5
  %v5846 = vrot.slane %v5845, 4
  %v5847 = vrot.slane %v5374, 5
  %v5848 = vsel %vm1210, %v5846, %v5847
  %v5849 = vrot.slane %v5789, 5
  %v5850 = vrot.slane %v5849, 4
  %v5851 = vrot.slane %v5376, 5
  %v5852 = vsel %vm1210, %v5850, %v5851
  %v5853 = vrot.slane %v5790, 5
  %v5854 = vrot.slane %v5853, 4
  %v5855 = vrot.slane %v5378, 5
  %v5856 = vsel %vm1210, %v5854, %v5855
  %v5857 = vrot.slane %v5791, 5
  %v5858 = vrot.slane %v5857, 4
  %v5859 = vrot.slane %v5380, 5
  %v5860 = vsel %vm1210, %v5858, %v5859
  %v5861 = vrot.slane %v5792, 5
  %v5862 = vrot.slane %v5861, 4
  %v5863 = vrot.slane %v5382, 5
  %v5864 = vsel %vm1210, %v5862, %v5863
  %v5865 = vrot.slane %v5793, 5
  %v5866 = vrot.slane %v5865, 4
  %v5867 = vrot.slane %v5384, 5
  %v5868 = vsel %vm1210, %v5866, %v5867
  %v5869 = vrot.slane %v5794, 5
  %v5870 = vrot.slane %v5869, 4
  %v5871 = vrot.slane %v5386, 5
  %v5872 = vsel %vm1210, %v5870, %v5871
  %v5873 = vrot.slane %v5795, 5
  %v5874 = vrot.slane %v5873, 4
  %v5875 = vrot.slane %v5388, 5
  %v5876 = vsel %vm1210, %v5874, %v5875
  %v5877 = vrot.slane %v5796, 5
  %v5878 = vrot.slane %v5877, 4
  %v5879 = vrot.slane %v5390, 5
  %v5880 = vsel %vm1210, %v5878, %v5879
  %v5881 = vrot.slane %v5797, 5
  %v5882 = vrot.slane %v5881, 4
  %v5883 = vrot.slane %v5392, 5
  %v5884 = vsel %vm1210, %v5882, %v5883
  %v5885 = vrot.slane %v5798, 5
  %v5886 = vrot.slane %v5885, 4
  %v5887 = vrot.slane %v5394, 5
  %v5888 = vsel %vm1210, %v5886, %v5887
  %v5889 = vrot.slane %v5799, 5
  %v5890 = vrot.slane %v5889, 4
  %v5891 = vrot.slane %v5396, 5
  %v5892 = vsel %vm1210, %v5890, %v5891
  %v5893 = vrot.slane %v5800, 5
  %v5894 = vrot.slane %v5893, 4
  %v5895 = vrot.slane %v5398, 5
  %v5896 = vsel %vm1210, %v5894, %v5895
  %s5897 = scalar_lea.vmem %s6, 512
  %v5898 = vld [vmem:[%s5897] sm:$0xf]
  %v5899 = vld [vmem:[%s5897 + $0x4] sm:$0xf]
  %v5900 = vld [vmem:[%s5897 + $0x8] sm:$0xf]
  %v5901 = vld [vmem:[%s5897 + $0xc] sm:$0xf]
  %v5902 = vld [vmem:[%s5897 + $0x10] sm:$0xf]
  %v5903 = vld [vmem:[%s5897 + $0x14] sm:$0xf]
  %v5904 = vld [vmem:[%s5897 + $0x18] sm:$0xf]
  %v5905 = vld [vmem:[%s5897 + $0x1c] sm:$0xf]
  %v5906 = vld [vmem:[%s5897 + $0x20] sm:$0xf]
  %v5907 = vld [vmem:[%s5897 + $0x24] sm:$0xf]
  %v5908 = vld [vmem:[%s5897 + $0x28] sm:$0xf]
  %v5909 = vld [vmem:[%s5897 + $0x2c] sm:$0xf]
  %v5910 = vld [vmem:[%s5897 + $0x30] sm:$0xf]
  %v5911 = vld [vmem:[%s5897 + $0x34] sm:$0xf]
  %v5912 = vld [vmem:[%s5897 + $0x38] sm:$0xf]
  %v5913 = vld [vmem:[%s5897 + $0x3c] sm:$0xf]
  %v5914 = vunpack.c.l.b16 %v5836
  %v5915 = vunpack.c.l.b16 %v5840
  %v5916 = vunpack.c.l.b16 %v5844
  %v5917 = vunpack.c.l.b16 %v5848
  %v5918 = vunpack.c.l.b16 %v5852
  %v5919 = vunpack.c.l.b16 %v5856
  %v5920 = vunpack.c.l.b16 %v5860
  %v5921 = vunpack.c.l.b16 %v5864
  %v5922 = vunpack.c.l.b16 %v5868
  %v5923 = vunpack.c.l.b16 %v5872
  %v5924 = vunpack.c.l.b16 %v5876
  %v5925 = vunpack.c.l.b16 %v5880
  %v5926 = vunpack.c.l.b16 %v5884
  %v5927 = vunpack.c.l.b16 %v5888
  %v5928 = vunpack.c.l.b16 %v5892
  %v5929 = vunpack.c.l.b16 %v5896
  %v5930 = vpack.c.b16 %v5915, %v5914
  %v5931 = vpack.c.b16 %v5917, %v5916
  %v5932 = vpack.c.b16 %v5919, %v5918
  %v5933 = vpack.c.b16 %v5921, %v5920
  %v5934 = vpack.c.b16 %v5923, %v5922
  %v5935 = vpack.c.b16 %v5925, %v5924
  %v5936 = vpack.c.b16 %v5927, %v5926
  %v5937 = vpack.c.b16 %v5929, %v5928
  %v5962 = vunpack.c.l.b16 %v5898
  %v5963 = vunpack.c.l.b16 %v5899
  %v5964 = vunpack.c.l.b16 %v5900
  %v5965 = vunpack.c.l.b16 %v5901
  %v5966 = vunpack.c.l.b16 %v5902
  %v5967 = vunpack.c.l.b16 %v5903
  %v5968 = vunpack.c.l.b16 %v5904
  %v5969 = vunpack.c.l.b16 %v5905
  %v5970 = vunpack.c.l.b16 %v5906
  %v5971 = vunpack.c.l.b16 %v5907
  %v5972 = vunpack.c.l.b16 %v5908
  %v5973 = vunpack.c.l.b16 %v5909
  %v5974 = vunpack.c.l.b16 %v5910
  %v5975 = vunpack.c.l.b16 %v5911
  %v5976 = vunpack.c.l.b16 %v5912
  %v5977 = vunpack.c.l.b16 %v5913
  %v5978 = vpack.c.b16 %v5963, %v5962
  %v5979 = vpack.c.b16 %v5965, %v5964
  %v5980 = vpack.c.b16 %v5967, %v5966
  %v5981 = vpack.c.b16 %v5969, %v5968
  %v5982 = vpack.c.b16 %v5971, %v5970
  %v5983 = vpack.c.b16 %v5973, %v5972
  %v5984 = vpack.c.b16 %v5975, %v5974
  %v5985 = vpack.c.b16 %v5977, %v5976
  %5994 = vmatpush.bf16.msra.mxu0 %v5985
  %5995 = vmatpush.bf16.msra.mxu0 %v5984
  %5996 = vmatpush.bf16.msra.mxu0 %v5983
  %5997 = vmatpush.bf16.msra.mxu0 %v5982
  %5998 = vmatpush.bf16.msra.mxu0 %v5981
  %5999 = vmatpush.bf16.msra.mxu0 %v5980
  %6000 = vmatpush.bf16.msra.mxu0 %v5979
  %6001 = vmatpush.bf16.msra.mxu0 %v5978
  %6002 = vmatmul.bf16.gmra.mxu0 %v5930
  %v6003 = vpop.f32.mrf.mxu0
  %v6004 = vadd.f32 0.0, %v6003
  %v6005 = vpop.f32.mrf.mxu0
  %v6006 = vadd.f32 0.0, %v6005
  %6007 = vmatmul.bf16.gmra.mxu0 %v5931
  %v6008 = vpop.f32.mrf.mxu0
  %v6009 = vadd.f32 0.0, %v6008
  %v6010 = vpop.f32.mrf.mxu0
  %v6011 = vadd.f32 0.0, %v6010
  %6012 = vmatmul.bf16.gmra.mxu0 %v5932
  %v6013 = vpop.f32.mrf.mxu0
  %v6014 = vadd.f32 0.0, %v6013
  %v6015 = vpop.f32.mrf.mxu0
  %v6016 = vadd.f32 0.0, %v6015
  %6017 = vmatmul.bf16.gmra.mxu0 %v5933
  %v6018 = vpop.f32.mrf.mxu0
  %v6019 = vadd.f32 0.0, %v6018
  %v6020 = vpop.f32.mrf.mxu0
  %v6021 = vadd.f32 0.0, %v6020
  %6022 = vmatmul.bf16.gmra.mxu0 %v5934
  %v6023 = vpop.f32.mrf.mxu0
  %v6024 = vadd.f32 0.0, %v6023
  %v6025 = vpop.f32.mrf.mxu0
  %v6026 = vadd.f32 0.0, %v6025
  %6027 = vmatmul.bf16.gmra.mxu0 %v5935
  %v6028 = vpop.f32.mrf.mxu0
  %v6029 = vadd.f32 0.0, %v6028
  %v6030 = vpop.f32.mrf.mxu0
  %v6031 = vadd.f32 0.0, %v6030
  %6032 = vmatmul.bf16.gmra.mxu0 %v5936
  %v6033 = vpop.f32.mrf.mxu0
  %v6034 = vadd.f32 0.0, %v6033
  %v6035 = vpop.f32.mrf.mxu0
  %v6036 = vadd.f32 0.0, %v6035
  %6037 = vmatmul.bf16.gmra.mxu0 %v5937
  %v6038 = vpop.f32.mrf.mxu0
  %v6039 = vadd.f32 0.0, %v6038
  %v6040 = vpop.f32.mrf.mxu0
  %v6041 = vadd.f32 0.0, %v6040
  %6042 = vdwg.mxu0
  %v6043 = vadd.f32 %v5769, %v6004
  %v6044 = vadd.f32 %v5770, %v6006
  %v6045 = vadd.f32 %v5771, %v6009
  %v6046 = vadd.f32 %v5772, %v6011
  %v6047 = vadd.f32 %v5773, %v6014
  %v6048 = vadd.f32 %v5774, %v6016
  %v6049 = vadd.f32 %v5775, %v6019
  %v6050 = vadd.f32 %v5776, %v6021
  %v6051 = vadd.f32 %v5777, %v6024
  %v6052 = vadd.f32 %v5778, %v6026
  %v6053 = vadd.f32 %v5779, %v6029
  %v6054 = vadd.f32 %v5780, %v6031
  %v6055 = vadd.f32 %v5781, %v6034
  %v6056 = vadd.f32 %v5782, %v6036
  %v6057 = vadd.f32 %v5783, %v6039
  %v6058 = vadd.f32 %v5784, %v6041
  %v6059 = vld [vmem:[%s7] sm:$0x1]
  %v6061 = vperm.slane %v6059, 0
  %v6063 = vmul.f32 %v6043, %v6061
  %v6064 = vmul.f32 %v6044, %v6061
  %v6065 = vmul.f32 %v6045, %v6061
  %v6066 = vmul.f32 %v6046, %v6061
  %v6067 = vmul.f32 %v6047, %v6061
  %v6068 = vmul.f32 %v6048, %v6061
  %v6069 = vmul.f32 %v6049, %v6061
  %v6070 = vmul.f32 %v6050, %v6061
  %v6071 = vmul.f32 %v6051, %v6061
  %v6072 = vmul.f32 %v6052, %v6061
  %v6073 = vmul.f32 %v6053, %v6061
  %v6074 = vmul.f32 %v6054, %v6061
  %v6075 = vmul.f32 %v6055, %v6061
  %v6076 = vmul.f32 %v6056, %v6061
  %v6077 = vmul.f32 %v6057, %v6061
  %v6078 = vmul.f32 %v6058, %v6061
  %v6079 = vld [vmem:[%s8] sm:$0x1]
  %v6081 = vperm.slane %v6079, 0
  %v6083 = vadd.f32 %v6063, %v6081
  %v6084 = vadd.f32 %v6064, %v6081
  %v6085 = vadd.f32 %v6065, %v6081
  %v6086 = vadd.f32 %v6066, %v6081
  %v6087 = vadd.f32 %v6067, %v6081
  %v6088 = vadd.f32 %v6068, %v6081
  %v6089 = vadd.f32 %v6069, %v6081
  %v6090 = vadd.f32 %v6070, %v6081
  %v6091 = vadd.f32 %v6071, %v6081
  %v6092 = vadd.f32 %v6072, %v6081
  %v6093 = vadd.f32 %v6073, %v6081
  %v6094 = vadd.f32 %v6074, %v6081
  %v6095 = vadd.f32 %v6075, %v6081
  %v6096 = vadd.f32 %v6076, %v6081
  %v6097 = vadd.f32 %v6077, %v6081
  %v6098 = vadd.f32 %v6078, %v6081
  %v6099 = vmax.f32 %v6083, 0.0
  %v6100 = vmax.f32 %v6084, 0.0
  %v6101 = vmax.f32 %v6085, 0.0
  %v6102 = vmax.f32 %v6086, 0.0
  %v6103 = vmax.f32 %v6087, 0.0
  %v6104 = vmax.f32 %v6088, 0.0
  %v6105 = vmax.f32 %v6089, 0.0
  %v6106 = vmax.f32 %v6090, 0.0
  %v6107 = vmax.f32 %v6091, 0.0
  %v6108 = vmax.f32 %v6092, 0.0
  %v6109 = vmax.f32 %v6093, 0.0
  %v6110 = vmax.f32 %v6094, 0.0
  %v6111 = vmax.f32 %v6095, 0.0
  %v6112 = vmax.f32 %v6096, 0.0
  %v6113 = vmax.f32 %v6097, 0.0
  %v6114 = vmax.f32 %v6098, 0.0
  %v6115 = vld [vmem:[%s9] sm:$0x1]
  %v6116 = vpack.c.bf16 %v6100, %v6099
  %v6117 = vpack.c.bf16 %v6102, %v6101
  %v6118 = vpack.c.bf16 %v6104, %v6103
  %v6119 = vpack.c.bf16 %v6106, %v6105
  %v6120 = vpack.c.bf16 %v6108, %v6107
  %v6121 = vpack.c.bf16 %v6110, %v6109
  %v6122 = vpack.c.bf16 %v6112, %v6111
  %v6123 = vpack.c.bf16 %v6114, %v6113
  %v6124 = vld [vmem:[#allocation4] sm:$0x1]
  %6126 = vset.pattern.permute.xlu0 0
  %6127 = vperm.xlu0 %6126, %v6124
  %v6128 = vpop.permute.xlu0 %6127
  %v6130 = vperm.slane %v6128, 0
  %6131 = vmatpush.bf16.xpose.msra.mxu0 %v6123
  %6132 = vmatpush.bf16.xpose.msra.mxu0 %v6122
  %6133 = vmatpush.bf16.xpose.msra.mxu0 %v6121
  %6134 = vmatpush.bf16.xpose.msra.mxu0 %v6120
  %6135 = vmatpush.bf16.xpose.msra.mxu0 %v6119
  %6136 = vmatpush.bf16.xpose.msra.mxu0 %v6118
  %6137 = vmatpush.bf16.xpose.msra.mxu0 %v6117
  %6138 = vmatpush.bf16.xpose.msra.mxu0 %v6116
  %6139 = vmatmul.bf16.gmra.mxu0 %v6115
  %v6140 = vpop.f32.mrf.mxu0
  %v6141 = vadd.f32 %v6130, %v6140
  %v6142 = vpop.f32.mrf.mxu0
  %6143 = vdwg.mxu0
  %6144 = vst [vmem:[%s14] sm:$0x1] %v6141
  %v6145 = vsel %vm961, %v171, 0.0
  %v6146 = vsel %vm961, %v173, 0.0
  %v6147 = vadd.f32 %v6145, %v6146
  %v6148 = vsel %vm961, %v176, 0.0
  %v6149 = vadd.f32 %v6147, %v6148
  %v6150 = vsel %vm961, %v178, 0.0
  %v6151 = vadd.f32 %v6149, %v6150
  %v6152 = vsel %vm961, %v181, 0.0
  %v6153 = vadd.f32 %v6151, %v6152
  %v6154 = vsel %vm961, %v183, 0.0
  %v6155 = vadd.f32 %v6153, %v6154
  %v6156 = vsel %vm961, %v186, 0.0
  %v6157 = vadd.f32 %v6155, %v6156
  %v6158 = vsel %vm961, %v188, 0.0
  %v6159 = vadd.f32 %v6157, %v6158
  %v6160 = vrot.slane %v6159, 4
  %v6161 = vadd.f32 %v6159, %v6160
  %v6162 = vrot.slane %v6161, 2
  %v6163 = vadd.f32 %v6161, %v6162
  %v6164 = vrot.slane %v6163, 1
  %v6165 = vadd.f32 %v6163, %v6164
  %v6166 = vsel %vm961, %v191, 0.0
  %v6167 = vsel %vm961, %v193, 0.0
  %v6168 = vadd.f32 %v6166, %v6167
  %v6169 = vsel %vm961, %v196, 0.0
  %v6170 = vadd.f32 %v6168, %v6169
  %v6171 = vsel %vm961, %v198, 0.0
  %v6172 = vadd.f32 %v6170, %v6171
  %v6173 = vsel %vm961, %v201, 0.0
  %v6174 = vadd.f32 %v6172, %v6173
  %v6175 = vsel %vm961, %v203, 0.0
  %v6176 = vadd.f32 %v6174, %v6175
  %v6177 = vsel %vm961, %v206, 0.0
  %v6178 = vadd.f32 %v6176, %v6177
  %v6179 = vsel %vm961, %v208, 0.0
  %v6180 = vadd.f32 %v6178, %v6179
  %v6181 = vrot.slane %v6180, 4
  %v6182 = vadd.f32 %v6180, %v6181
  %v6183 = vrot.slane %v6182, 2
  %v6184 = vadd.f32 %v6182, %v6183
  %v6185 = vrot.slane %v6184, 1
  %v6186 = vadd.f32 %v6184, %v6185
  %v6187 = vmul.f32 %v6165, 0.015625
  %v6188 = vmul.f32 %v6186, 0.015625
  %v6189 = vld [vmem:[%s11] sm:$0x1]
  %v6191 = vperm.slane %v6189, 0
  %v6193 = vmul.f32 %v6187, %v6191
  %v6194 = vmul.f32 %v6188, %v6191
  %v6197 = vrot.slane %v6194, 7
  %vm6198 = vcmask 1041409
  %v6199 = vsel %vm6198, %v6197, %v6193
  %vm6201 = vcmask 254976
  %v6202 = vsel %vm6201, %v6199, 0.0
  %6203 = vadd.xlane.f32.xlu0 %v6202
  %v6204 = vpop.xlane.xlu0 %6203
  %v6205 = vld [vmem:[#allocation5] sm:$0x1]
  %v6207 = vperm.slane %v6205, 0
  %v6209 = vadd.f32 %v6204, %v6207
  %vm6210 = vcmask 1024
  %6211 = vst.msk [vmem:[%s15] sm:$0x3] %vm6210, %v6209
  // Predicated region
  $region54: #{v5dual_forward.1} parent=0 // pred_check
    _
  $region55: #{v5dual_forward.1} parent=0 // pred_check_branch
    %6213 = sbr.rel (0) target = $region57
  $region56: #{v5dual_forward.1} parent=0 // pred_region
    _
  $region57: #{v5dual_forward.1} parent=0 // pred_fallthru
    _
  // Predicated region
  $region58: #{v5dual_forward.1} parent=0 // pred_check
    _
  $region59: #{v5dual_forward.1} parent=0 // pred_check_branch
    %6215 = sbr.rel (0) target = $region61
  $region60: #{v5dual_forward.1} parent=0 // pred_region
    _
  $region61: #{v5dual_forward.1} parent=0 // pred_fallthru
    _
  // Predicated region
  $region62: #{v5dual_forward.1} parent=0 // pred_check
    _
  $region63: #{v5dual_forward.1} parent=0 // pred_check_branch
    %6217 = sbr.rel (0) target = $region65
  $region64: #{v5dual_forward.1} parent=0 // pred_region
    _
  $region65: #{v5dual_forward.1} parent=0 // pred_fallthru
    _
  // Predicated region
  $region66: #{v5dual_forward.1} parent=0 // pred_check
    _
  $region67: #{v5dual_forward.1} parent=0 // pred_check_branch
    %6219 = sbr.rel (0) target = $region69
  $region68: #{v5dual_forward.1} parent=0 // pred_region
    _
  $region69: #{v5dual_forward.1} parent=0 // pred_fallthru
    _
  // Predicated region
  $region70: #{v5dual_forward.1} parent=0 // pred_check
    _
  $region71: #{v5dual_forward.1} parent=0 // pred_check_branch
    %6221 = sbr.rel (0) target = $region73
  $region72: #{v5dual_forward.1} parent=0 // pred_region
    _
  $region73: #{v5dual_forward.1} parent=0 // pred_fallthru
    _
  // Predicated region
  $region74: #{v5dual_forward.1} parent=0 // pred_check
    _
  $region75: #{v5dual_forward.1} parent=0 // pred_check_branch
    %6223 = sbr.rel (0) target = $region77
  $region76: #{v5dual_forward.1} parent=0 // pred_region
    _
  $region77: #{v5dual_forward.1} parent=0 // pred_fallthru
    _

</llo_original>
